<compile_context>
chip_gen: v6e
topology: v6e:2x2x1
jax: 0.10.0
libtpu: 0.0.40
codegen_flags: <defaults>
</compile_context>

<pallas_src>
import jax
import jax.numpy as jnp
from jax.experimental import pallas as pl
from jax.experimental.pallas import tpu as pltpu

N_LAYERS = 6
FEAT = 300           # logical feature width (PyTorch Linear(300, 300))
FEAT_PAD = 384       # 3 x 128 lanes: lane-dense layout, no masked stores
MAX_BATCH_TILE = 1024  # v5e/v6e: fill the MXU M dim and amortize per-step overhead
MIN_GRID_STEPS = 2     # v7x megacore: keep >=2 parallel grid steps when batch allows


def _round_up(x, m):
    return ((x + m - 1) // m) * m


def _cdiv(a, b):
    return -(-a // b)


def _choose_tiling(batch, max_batch_tile):
    """Pick (tile_rows, grid_steps, padded_rows) for the batch dimension."""
    rows = _round_up(batch, 8)                       # sublane-aligned row count
    steps = _cdiv(rows, max_batch_tile)              # respect the tile-size cap
    if rows > 8:                                     # split for v7x megacore
        steps = max(steps, MIN_GRID_STEPS)
    tb = _round_up(_cdiv(rows, steps), 8)            # <=7 padded rows per step
    return tb, steps, steps * tb


def sigmoid_mlp_kernel(x_ref, w_ref, b_ref, o_ref):
    # x_ref: (TB, 384) bf16  -- activations, already MXU-ready (no first cast)
    # w_ref: (6, 384, 384) bf16, (in, out) layout, padded rows/cols are zero
    # b_ref: (6, 1, 384) f32, padded tail is zero
    # o_ref: (TB, 384) f32
    h = x_ref[...]
    acts = None
    for l in range(N_LAYERS):  # small fixed trip count -> fully unrolled
        # bf16 x bf16 on the MXU, f32 accumulation.
        z = jnp.dot(h, w_ref[l], preferred_element_type=jnp.float32) + b_ref[l]
        # f32 sigmoid via EUP exp + approx reciprocal (keeps VALU slots free).
        acts = pl.reciprocal(1.0 + jnp.exp(-z), approx=True)
        if l + 1 < N_LAYERS:
            h = acts.astype(jnp.bfloat16)            # bf16 operand for next MXU pass
    o_ref[...] = acts.astype(o_ref.dtype)


def sigmoid_linear_forward(x, w_pad, b_pad, *, max_batch_tile=MAX_BATCH_TILE):
    """x: (B, 300) f32; w_pad: (6, 384, 384) bf16 (in,out); b_pad: (6, 1, 384) f32."""
    B, F = x.shape
    assert F == FEAT
    tb, steps, rows_pad = _choose_tiling(B, max_batch_tile)

    # Pad + cast in one shot: bf16 activation input halves DMA and input VMEM.
    # Padded lanes/rows are harmless: padded weight rows are zero and we slice
    # the result back below.
    x_pad = jnp.zeros((rows_pad, FEAT_PAD), jnp.bfloat16).at[:B, :FEAT].set(
        x.astype(jnp.bfloat16))

    # Explicit VMEM budget: double-buffered activations + weight stack + bias,
    # with 2x + 4 MiB margin for compiler-internal scratch.
    working_set = (2 * tb * FEAT_PAD * 2                       # act in (bf16, 2 bufs)
                   + 2 * tb * FEAT_PAD * 4                     # act out (f32, 2 bufs)
                   + 2 * N_LAYERS * FEAT_PAD * FEAT_PAD * 2    # weights (bf16, 2 bufs)
                   + 2 * N_LAYERS * FEAT_PAD * 4)              # bias (f32)
    vmem_limit = min(64 << 20, _round_up(2 * working_set + (4 << 20), 1 << 20))

    flops = 2 * rows_pad * FEAT_PAD * FEAT_PAD * N_LAYERS
    transcendentals = 2 * rows_pad * FEAT_PAD * N_LAYERS       # exp + reciprocal
    bytes_accessed = (x_pad.size * 2 + w_pad.size * 2 + b_pad.size * 4
                      + rows_pad * FEAT_PAD * 4)

    out = pl.pallas_call(
        sigmoid_mlp_kernel,
        out_shape=jax.ShapeDtypeStruct((rows_pad, FEAT_PAD), jnp.float32),
        grid=(steps,),
        in_specs=[
            # activations: tiled over batch (bf16)
            pl.BlockSpec((tb, FEAT_PAD), lambda i: (i, 0)),
            # weights/biases: constant block index -> DMA'd once, stay resident
            pl.BlockSpec((N_LAYERS, FEAT_PAD, FEAT_PAD), lambda i: (0, 0, 0)),
            pl.BlockSpec((N_LAYERS, 1, FEAT_PAD), lambda i: (0, 0, 0)),
        ],
        out_specs=pl.BlockSpec((tb, FEAT_PAD), lambda i: (i, 0)),
        compiler_params=pltpu.CompilerParams(
            dimension_semantics=("parallel",),
            vmem_limit_bytes=vmem_limit),
        cost_estimate=pl.CostEstimate(
            flops=flops,
            transcendentals=transcendentals,
            bytes_accessed=bytes_accessed),
    )(x_pad, w_pad, b_pad)

    return out[:B, :FEAT]


def init_params(key):
    """PyTorch Linear default init: U(-1/sqrt(fan_in), 1/sqrt(fan_in)).

    Returns f32 weights (6, 300, 300) in (in, out) layout and biases (6, 300)."""
    bound = 1.0 / jnp.sqrt(jnp.float32(FEAT))
    ws, bs = [], []
    for _ in range(N_LAYERS):
        kw, kb, key = jax.random.split(key, 3)
        w_pt = jax.random.uniform(kw, (FEAT, FEAT), jnp.float32, -bound, bound)  # (out,in)
        b = jax.random.uniform(kb, (FEAT,), jnp.float32, -bound, bound)
        ws.append(w_pt.T)  # -> (in, out)
        bs.append(b)
    return jnp.stack(ws, axis=0), jnp.stack(bs, axis=0)


def prepare_params(weights, biases):
    """Cast weights to bf16 and zero-pad to the lane-dense 384 layout.

    Padded weight ROWS must be exactly zero: sigmoid(0)=0.5 values appear in the
    padded lanes of the activations and must be multiplied by zero next layer."""
    w_bf16 = weights.astype(jnp.bfloat16)
    w_pad = (jnp.zeros((N_LAYERS, FEAT_PAD, FEAT_PAD), jnp.bfloat16)
             .at[:, :FEAT, :FEAT].set(w_bf16))
    b_pad = (jnp.zeros((N_LAYERS, 1, FEAT_PAD), jnp.float32)
             .at[:, 0, :FEAT].set(biases))
    return w_pad, b_pad


def reference_forward(x, weights, biases):
    """Pure-JAX reference using the same (bf16-rounded) weights, f32 math."""
    h = x
    for l in range(N_LAYERS):
        z = jnp.dot(h, weights[l].astype(jnp.float32)) + biases[l]
        h = jax.nn.sigmoid(z)
    return h


if __name__ == "__main__":
    key = jax.random.PRNGKey(0)
    kx, kp = jax.random.split(key)
    B = 8
    x = jax.random.normal(kx, (B, FEAT), jnp.float32)
    weights, biases = init_params(kp)
    w_pad, b_pad = prepare_params(weights, biases)

    # Silent-corruption guard from the perf review: padded weight rows/cols zero.
    assert bool(jnp.all(w_pad[:, FEAT:, :] == 0)) and bool(jnp.all(w_pad[:, :, FEAT:] == 0))

    out = sigmoid_linear_forward(x, w_pad, b_pad)
    out = jax.block_until_ready(out)

    ref = reference_forward(x, weights.astype(jnp.bfloat16), biases)
    assert out.shape == (B, FEAT)
    max_err = float(jnp.max(jnp.abs(out - ref)))
    assert jnp.allclose(out, ref, atol=2e-3, rtol=2e-3), max_err
    print("KERNEL_OK")
</pallas_src>

<mosaic_0001>
module attributes {stable_mosaic.version = 11 : i64} {
  func.func @sigmoid_mlp_kernel(%arg0: i32, %arg1: memref<8x384xbf16, #tpu.memory_space<vmem>>, %arg2: memref<6x384x384xbf16, #tpu.memory_space<vmem>>, %arg3: memref<6x1x384xf32, #tpu.memory_space<vmem>>, %arg4: memref<8x384xf32, #tpu.memory_space<vmem>>) attributes {dimension_semantics = [#tpu.dimension_semantics<parallel>], iteration_bounds = array<i64: 1>, scalar_prefetch = 0 : i64, scratch_operands = 0 : i64, tpu.core_type = #tpu.core_type<tc>, window_params = [{transform_indices = @transform_0, window_bounds = array<i64: 8, 384>}, {pipeline_mode = #tpu.pipeline_mode<synchronous>, transform_indices = @transform_1, window_bounds = array<i64: 6, 384, 384>}, {pipeline_mode = #tpu.pipeline_mode<synchronous>, transform_indices = @transform_2, window_bounds = array<i64: 6, 1, 384>}, {transform_indices = @transform_3, window_bounds = array<i64: 8, 384>}]} {
    %c0 = arith.constant 0 : index
    %c0_0 = arith.constant 0 : index
    %0 = vector.load %arg1[%c0, %c0_0] : memref<8x384xbf16, #tpu.memory_space<vmem>>, vector<8x384xbf16>
    %c0_1 = arith.constant 0 : index
    %c0_2 = arith.constant 0 : index
    %c0_3 = arith.constant 0 : index
    %1 = vector.load %arg2[%c0_1, %c0_2, %c0_3] : memref<6x384x384xbf16, #tpu.memory_space<vmem>>, vector<1x384x384xbf16>
    %2 = vector.shape_cast %1 : vector<1x384x384xbf16> to vector<384x384xbf16>
    %cst = arith.constant dense<0.000000e+00> : vector<8x384xf32>
    %3 = tpu.matmul %0, %2, %cst {dimension_numbers = #tpu.dot_dimension_numbers<[1], [0], [0], [1], [0, 0, 1, 1], [], []>} : vector<8x384xbf16>, vector<384x384xbf16>, vector<8x384xf32> -> vector<8x384xf32>
    %c0_4 = arith.constant 0 : index
    %c0_5 = arith.constant 0 : index
    %c0_6 = arith.constant 0 : index
    %4 = vector.load %arg3[%c0_4, %c0_5, %c0_6] : memref<6x1x384xf32, #tpu.memory_space<vmem>>, vector<1x1x384xf32>
    %5 = vector.shape_cast %4 : vector<1x1x384xf32> to vector<1x384xf32>
    %6 = vector.broadcast %5 : vector<1x384xf32> to vector<8x384xf32>
    %7 = arith.addf %3, %6 : vector<8x384xf32>
    %cst_7 = arith.constant 0.000000e+00 : f32
    %8 = vector.broadcast %cst_7 : f32 to vector<8x384xf32>
    %9 = arith.subf %8, %7 : vector<8x384xf32>
    %10 = math.exp %9 : vector<8x384xf32>
    %cst_8 = arith.constant 1.000000e+00 : f32
    %11 = vector.broadcast %cst_8 : f32 to vector<8x384xf32>
    %12 = arith.addf %11, %10 : vector<8x384xf32>
    %13 = tpu.reciprocal %12 {approx = true} : vector<8x384xf32> -> vector<8x384xf32>
    %14 = arith.truncf %13 : vector<8x384xf32> to vector<8x384xbf16>
    %c1 = arith.constant 1 : index
    %c0_9 = arith.constant 0 : index
    %c0_10 = arith.constant 0 : index
    %15 = vector.load %arg2[%c1, %c0_9, %c0_10] : memref<6x384x384xbf16, #tpu.memory_space<vmem>>, vector<1x384x384xbf16>
    %16 = vector.shape_cast %15 : vector<1x384x384xbf16> to vector<384x384xbf16>
    %cst_11 = arith.constant dense<0.000000e+00> : vector<8x384xf32>
    %17 = tpu.matmul %14, %16, %cst_11 {dimension_numbers = #tpu.dot_dimension_numbers<[1], [0], [0], [1], [0, 0, 1, 1], [], []>} : vector<8x384xbf16>, vector<384x384xbf16>, vector<8x384xf32> -> vector<8x384xf32>
    %c1_12 = arith.constant 1 : index
    %c0_13 = arith.constant 0 : index
    %c0_14 = arith.constant 0 : index
    %18 = vector.load %arg3[%c1_12, %c0_13, %c0_14] : memref<6x1x384xf32, #tpu.memory_space<vmem>>, vector<1x1x384xf32>
    %19 = vector.shape_cast %18 : vector<1x1x384xf32> to vector<1x384xf32>
    %20 = vector.broadcast %19 : vector<1x384xf32> to vector<8x384xf32>
    %21 = arith.addf %17, %20 : vector<8x384xf32>
    %cst_15 = arith.constant 0.000000e+00 : f32
    %22 = vector.broadcast %cst_15 : f32 to vector<8x384xf32>
    %23 = arith.subf %22, %21 : vector<8x384xf32>
    %24 = math.exp %23 : vector<8x384xf32>
    %cst_16 = arith.constant 1.000000e+00 : f32
    %25 = vector.broadcast %cst_16 : f32 to vector<8x384xf32>
    %26 = arith.addf %25, %24 : vector<8x384xf32>
    %27 = tpu.reciprocal %26 {approx = true} : vector<8x384xf32> -> vector<8x384xf32>
    %28 = arith.truncf %27 : vector<8x384xf32> to vector<8x384xbf16>
    %c2 = arith.constant 2 : index
    %c0_17 = arith.constant 0 : index
    %c0_18 = arith.constant 0 : index
    %29 = vector.load %arg2[%c2, %c0_17, %c0_18] : memref<6x384x384xbf16, #tpu.memory_space<vmem>>, vector<1x384x384xbf16>
    %30 = vector.shape_cast %29 : vector<1x384x384xbf16> to vector<384x384xbf16>
    %cst_19 = arith.constant dense<0.000000e+00> : vector<8x384xf32>
    %31 = tpu.matmul %28, %30, %cst_19 {dimension_numbers = #tpu.dot_dimension_numbers<[1], [0], [0], [1], [0, 0, 1, 1], [], []>} : vector<8x384xbf16>, vector<384x384xbf16>, vector<8x384xf32> -> vector<8x384xf32>
    %c2_20 = arith.constant 2 : index
    %c0_21 = arith.constant 0 : index
    %c0_22 = arith.constant 0 : index
    %32 = vector.load %arg3[%c2_20, %c0_21, %c0_22] : memref<6x1x384xf32, #tpu.memory_space<vmem>>, vector<1x1x384xf32>
    %33 = vector.shape_cast %32 : vector<1x1x384xf32> to vector<1x384xf32>
    %34 = vector.broadcast %33 : vector<1x384xf32> to vector<8x384xf32>
    %35 = arith.addf %31, %34 : vector<8x384xf32>
    %cst_23 = arith.constant 0.000000e+00 : f32
    %36 = vector.broadcast %cst_23 : f32 to vector<8x384xf32>
    %37 = arith.subf %36, %35 : vector<8x384xf32>
    %38 = math.exp %37 : vector<8x384xf32>
    %cst_24 = arith.constant 1.000000e+00 : f32
    %39 = vector.broadcast %cst_24 : f32 to vector<8x384xf32>
    %40 = arith.addf %39, %38 : vector<8x384xf32>
    %41 = tpu.reciprocal %40 {approx = true} : vector<8x384xf32> -> vector<8x384xf32>
    %42 = arith.truncf %41 : vector<8x384xf32> to vector<8x384xbf16>
    %c3 = arith.constant 3 : index
    %c0_25 = arith.constant 0 : index
    %c0_26 = arith.constant 0 : index
    %43 = vector.load %arg2[%c3, %c0_25, %c0_26] : memref<6x384x384xbf16, #tpu.memory_space<vmem>>, vector<1x384x384xbf16>
    %44 = vector.shape_cast %43 : vector<1x384x384xbf16> to vector<384x384xbf16>
    %cst_27 = arith.constant dense<0.000000e+00> : vector<8x384xf32>
    %45 = tpu.matmul %42, %44, %cst_27 {dimension_numbers = #tpu.dot_dimension_numbers<[1], [0], [0], [1], [0, 0, 1, 1], [], []>} : vector<8x384xbf16>, vector<384x384xbf16>, vector<8x384xf32> -> vector<8x384xf32>
    %c3_28 = arith.constant 3 : index
    %c0_29 = arith.constant 0 : index
    %c0_30 = arith.constant 0 : index
    %46 = vector.load %arg3[%c3_28, %c0_29, %c0_30] : memref<6x1x384xf32, #tpu.memory_space<vmem>>, vector<1x1x384xf32>
    %47 = vector.shape_cast %46 : vector<1x1x384xf32> to vector<1x384xf32>
    %48 = vector.broadcast %47 : vector<1x384xf32> to vector<8x384xf32>
    %49 = arith.addf %45, %48 : vector<8x384xf32>
    %cst_31 = arith.constant 0.000000e+00 : f32
    %50 = vector.broadcast %cst_31 : f32 to vector<8x384xf32>
    %51 = arith.subf %50, %49 : vector<8x384xf32>
    %52 = math.exp %51 : vector<8x384xf32>
    %cst_32 = arith.constant 1.000000e+00 : f32
    %53 = vector.broadcast %cst_32 : f32 to vector<8x384xf32>
    %54 = arith.addf %53, %52 : vector<8x384xf32>
    %55 = tpu.reciprocal %54 {approx = true} : vector<8x384xf32> -> vector<8x384xf32>
    %56 = arith.truncf %55 : vector<8x384xf32> to vector<8x384xbf16>
    %c4 = arith.constant 4 : index
    %c0_33 = arith.constant 0 : index
    %c0_34 = arith.constant 0 : index
    %57 = vector.load %arg2[%c4, %c0_33, %c0_34] : memref<6x384x384xbf16, #tpu.memory_space<vmem>>, vector<1x384x384xbf16>
    %58 = vector.shape_cast %57 : vector<1x384x384xbf16> to vector<384x384xbf16>
    %cst_35 = arith.constant dense<0.000000e+00> : vector<8x384xf32>
    %59 = tpu.matmul %56, %58, %cst_35 {dimension_numbers = #tpu.dot_dimension_numbers<[1], [0], [0], [1], [0, 0, 1, 1], [], []>} : vector<8x384xbf16>, vector<384x384xbf16>, vector<8x384xf32> -> vector<8x384xf32>
    %c4_36 = arith.constant 4 : index
    %c0_37 = arith.constant 0 : index
    %c0_38 = arith.constant 0 : index
    %60 = vector.load %arg3[%c4_36, %c0_37, %c0_38] : memref<6x1x384xf32, #tpu.memory_space<vmem>>, vector<1x1x384xf32>
    %61 = vector.shape_cast %60 : vector<1x1x384xf32> to vector<1x384xf32>
    %62 = vector.broadcast %61 : vector<1x384xf32> to vector<8x384xf32>
    %63 = arith.addf %59, %62 : vector<8x384xf32>
    %cst_39 = arith.constant 0.000000e+00 : f32
    %64 = vector.broadcast %cst_39 : f32 to vector<8x384xf32>
    %65 = arith.subf %64, %63 : vector<8x384xf32>
    %66 = math.exp %65 : vector<8x384xf32>
    %cst_40 = arith.constant 1.000000e+00 : f32
    %67 = vector.broadcast %cst_40 : f32 to vector<8x384xf32>
    %68 = arith.addf %67, %66 : vector<8x384xf32>
    %69 = tpu.reciprocal %68 {approx = true} : vector<8x384xf32> -> vector<8x384xf32>
    %70 = arith.truncf %69 : vector<8x384xf32> to vector<8x384xbf16>
    %c5 = arith.constant 5 : index
    %c0_41 = arith.constant 0 : index
    %c0_42 = arith.constant 0 : index
    %71 = vector.load %arg2[%c5, %c0_41, %c0_42] : memref<6x384x384xbf16, #tpu.memory_space<vmem>>, vector<1x384x384xbf16>
    %72 = vector.shape_cast %71 : vector<1x384x384xbf16> to vector<384x384xbf16>
    %cst_43 = arith.constant dense<0.000000e+00> : vector<8x384xf32>
    %73 = tpu.matmul %70, %72, %cst_43 {dimension_numbers = #tpu.dot_dimension_numbers<[1], [0], [0], [1], [0, 0, 1, 1], [], []>} : vector<8x384xbf16>, vector<384x384xbf16>, vector<8x384xf32> -> vector<8x384xf32>
    %c5_44 = arith.constant 5 : index
    %c0_45 = arith.constant 0 : index
    %c0_46 = arith.constant 0 : index
    %74 = vector.load %arg3[%c5_44, %c0_45, %c0_46] : memref<6x1x384xf32, #tpu.memory_space<vmem>>, vector<1x1x384xf32>
    %75 = vector.shape_cast %74 : vector<1x1x384xf32> to vector<1x384xf32>
    %76 = vector.broadcast %75 : vector<1x384xf32> to vector<8x384xf32>
    %77 = arith.addf %73, %76 : vector<8x384xf32>
    %cst_47 = arith.constant 0.000000e+00 : f32
    %78 = vector.broadcast %cst_47 : f32 to vector<8x384xf32>
    %79 = arith.subf %78, %77 : vector<8x384xf32>
    %80 = math.exp %79 : vector<8x384xf32>
    %cst_48 = arith.constant 1.000000e+00 : f32
    %81 = vector.broadcast %cst_48 : f32 to vector<8x384xf32>
    %82 = arith.addf %81, %80 : vector<8x384xf32>
    %83 = tpu.reciprocal %82 {approx = true} : vector<8x384xf32> -> vector<8x384xf32>
    %c0_49 = arith.constant 0 : index
    %c0_50 = arith.constant 0 : index
    %84 = vector.load %arg4[%c0_49, %c0_50] : memref<8x384xf32, #tpu.memory_space<vmem>>, vector<8x384xf32>
    tpu.vector_store %arg4[%c0_49, %c0_50], %83 {strides = array<i32>} : memref<8x384xf32, #tpu.memory_space<vmem>>, vector<8x384xf32>,
    return
  }
  func.func @transform_0(%arg0: i32) -> (i32, i32) {
    %c0_i32 = arith.constant 0 : i32
    %c0_i32_0 = arith.constant 0 : i32
    return %arg0, %c0_i32 : i32, i32
  }
  func.func @transform_1(%arg0: i32) -> (i32, i32, i32) {
    %c0_i32 = arith.constant 0 : i32
    %c0_i32_0 = arith.constant 0 : i32
    %c0_i32_1 = arith.constant 0 : i32
    %c0_i32_2 = arith.constant 0 : i32
    return %c0_i32, %c0_i32_0, %c0_i32_1 : i32, i32, i32
  }
  func.func @transform_2(%arg0: i32) -> (i32, i32, i32) {
    %c0_i32 = arith.constant 0 : i32
    %c0_i32_0 = arith.constant 0 : i32
    %c0_i32_1 = arith.constant 0 : i32
    %c0_i32_2 = arith.constant 0 : i32
    return %c0_i32, %c0_i32_0, %c0_i32_1 : i32, i32, i32
  }
  func.func @transform_3(%arg0: i32) -> (i32, i32) {
    %c0_i32 = arith.constant 0 : i32
    %c0_i32_0 = arith.constant 0 : i32
    return %arg0, %c0_i32 : i32, i32
  }
}

</mosaic_0001>

<llo_original>
// kernel: tpu_custom_call.1
$region0: #{tpu_custom_call.1}
  #allocation0 [shape = 'u32[]', space=smem, size = 0x4, offset = 0x4, fixed_abs, tag = 'smem constant byte address 0x4 - core index']
  #allocation1 [shape = 'u32[144,128]{1,0:T(1,128)}', space=vmem, size = 0x12000, scoped, tag = 'internal scratch']
  %s0 = inlined_call_operand.hbm [shape: bf16[8,384], index: 0, kind: input, shape index: {}]
  %s1 = inlined_call_operand.hbm [shape: bf16[6,384,384], index: 1, kind: input, shape index: {}]
  %s2 = inlined_call_operand.hbm [shape: f32[6,1,384], index: 2, kind: input, shape index: {}]
  %s3 = inlined_call_operand.hbm [shape: f32[8,384], index: 3, kind: output, shape index: {}]
  %s4 = sld [smem:[#allocation0]]
  $region34: #{tpu_custom_call.1} parent=0
    _
  %s6 = ssub.s32 1, %s4
  %s7 = scalar_select 0, %s6, %s4
  $region1: #{tpu_custom_call.1} parent=0
    #allocation2 [shape = 'u8[6144]{0}', space=vmem, size = 0x1800, scoped, tag = 'input window, operand 0, single buffered']
    #allocation3 [shape = 's32[1]{0}', space=sflag, size = 0x4, scoped, tag = 'scoped memory for tpu_custom_call.1']
    #allocation4 [shape = 's32[1]{0}', space=sflag, size = 0x4, scoped, tag = 'scoped memory for tpu_custom_call.1']
    #allocation5 [shape = 'u8[1769472]{0}', space=vmem, size = 0x1b0000, scoped, tag = 'input window, operand 1, single buffered']
    #allocation6 [shape = 's32[1]{0}', space=sflag, size = 0x4, scoped, tag = 'scoped memory for tpu_custom_call.1']
    #allocation7 [shape = 'u8[9216]{0}', space=vmem, size = 0x2400, scoped, tag = 'input window, operand 2, single buffered']
    #allocation8 [shape = 'u8[12288]{0}', space=vmem, size = 0x3000, scoped, tag = 'output window, operand 0, single buffered']
    %8 = vsyncpa [#allocation3], 0
    %9 = vsyncpa [#allocation6], 0
    %10 = vsyncpa [#allocation4], 0
    // Predicated region
    $region2: #{tpu_custom_call.1} parent=1 // pred_check
      _
    $region3: #{tpu_custom_call.1} parent=1 // pred_check_branch
      %12 = sbr.rel (0) target = $region5
    $region4: #{tpu_custom_call.1} parent=1 // pred_region
      %s14 = ssub.s32 192, 192
      %15 = vsyncadd [#allocation3], %s14
      %s17 = sshll.u32 [#allocation2], 4
      %s18 = int_to_ptr.vmem [resolvable:$true] %s17
      %20 = dma.hbm_to_vmem [thread:$0]  %s0, 192, %s18, [#allocation3]
    $region5: #{tpu_custom_call.1} parent=1 // pred_fallthru
      _
    // Predicated region
    $region6: #{tpu_custom_call.1} parent=1 // pred_check
      _
    $region7: #{tpu_custom_call.1} parent=1 // pred_check_branch
      %22 = sbr.rel (0) target = $region9
    $region8: #{tpu_custom_call.1} parent=1 // pred_region
      %s24 = ssub.s32 55296, 55296
      %25 = vsyncadd [#allocation6], %s24
      %s26 = sshll.u32 [#allocation5], 4
      %s27 = int_to_ptr.vmem [resolvable:$true] %s26
      %32 = dma.hbm_to_vmem [thread:$0]  %s1, 55296, %s27, [#allocation6], 192, 192, 12
    $region9: #{tpu_custom_call.1} parent=1 // pred_fallthru
      _
    // Predicated region
    $region10: #{tpu_custom_call.1} parent=1 // pred_check
      _
    $region11: #{tpu_custom_call.1} parent=1 // pred_check_branch
      %34 = sbr.rel (0) target = $region13
    $region12: #{tpu_custom_call.1} parent=1 // pred_region
      %s36 = ssub.s32 288, 288
      %37 = vsyncadd [#allocation6], %s36
      %s38 = sshll.u32 [#allocation7], 4
      %s39 = int_to_ptr.vmem [resolvable:$true] %s38
      %44 = dma.hbm_to_vmem [thread:$0]  %s2, 288, %s39, [#allocation6], 48, 48, 3
    $region13: #{tpu_custom_call.1} parent=1 // pred_fallthru
      _
    // Predicated region
    $region14: #{tpu_custom_call.1} parent=1 // pred_check
      _
    $region15: #{tpu_custom_call.1} parent=1 // pred_check_branch
      %46 = sbr.rel (0) target = $region17
    $region16: #{tpu_custom_call.1} parent=1 // pred_region
      %47 = dma.done [#allocation3], 192
    $region17: #{tpu_custom_call.1} parent=1 // pred_fallthru
      _
    // Predicated region
    $region18: #{tpu_custom_call.1} parent=1 // pred_check
      _
    $region19: #{tpu_custom_call.1} parent=1 // pred_check_branch
      %49 = sbr.rel (0) target = $region21
    $region20: #{tpu_custom_call.1} parent=1 // pred_region
      %50 = dma.done [#allocation6], 55296
    $region21: #{tpu_custom_call.1} parent=1 // pred_fallthru
      _
    // Predicated region
    $region22: #{tpu_custom_call.1} parent=1 // pred_check
      _
    $region23: #{tpu_custom_call.1} parent=1 // pred_check_branch
      %52 = sbr.rel (0) target = $region25
    $region24: #{tpu_custom_call.1} parent=1 // pred_region
      %53 = dma.done [#allocation6], 288
    $region25: #{tpu_custom_call.1} parent=1 // pred_fallthru
      _
    %v55 = vld [vmem:[#allocation2] sm:$0xff]
    %v56 = vld [vmem:[#allocation2 + $0x8] sm:$0xf]
    %v57 = vld [vmem:[#allocation5] sm:$0xff]
    %v58 = vld [vmem:[#allocation5 + $0x8] sm:$0xf]
    %v59 = vld [vmem:[#allocation5 + $0xc] sm:$0xff]
    %v60 = vld [vmem:[#allocation5 + $0x14] sm:$0xf]
    %v61 = vld [vmem:[#allocation5 + $0x18] sm:$0xff]
    %v62 = vld [vmem:[#allocation5 + $0x20] sm:$0xf]
    %v63 = vld [vmem:[#allocation5 + $0x24] sm:$0xff]
    %v64 = vld [vmem:[#allocation5 + $0x2c] sm:$0xf]
    %v65 = vld [vmem:[#allocation5 + $0x30] sm:$0xff]
    %v66 = vld [vmem:[#allocation5 + $0x38] sm:$0xf]
    %v67 = vld [vmem:[#allocation5 + $0x3c] sm:$0xff]
    %v68 = vld [vmem:[#allocation5 + $0x44] sm:$0xf]
    %v69 = vld [vmem:[#allocation5 + $0x48] sm:$0xff]
    %v70 = vld [vmem:[#allocation5 + $0x50] sm:$0xf]
    %v71 = vld [vmem:[#allocation5 + $0x54] sm:$0xff]
    %v72 = vld [vmem:[#allocation5 + $0x5c] sm:$0xf]
    %v73 = vld [vmem:[#allocation5 + $0x60] sm:$0xff]
    %v74 = vld [vmem:[#allocation5 + $0x68] sm:$0xf]
    %v75 = vld [vmem:[#allocation5 + $0x6c] sm:$0xff]
    %v76 = vld [vmem:[#allocation5 + $0x74] sm:$0xf]
    %v77 = vld [vmem:[#allocation5 + $0x78] sm:$0xff]
    %v78 = vld [vmem:[#allocation5 + $0x80] sm:$0xf]
    %v79 = vld [vmem:[#allocation5 + $0x84] sm:$0xff]
    %v80 = vld [vmem:[#allocation5 + $0x8c] sm:$0xf]
    %v81 = vld [vmem:[#allocation5 + $0x90] sm:$0xff]
    %v82 = vld [vmem:[#allocation5 + $0x98] sm:$0xf]
    %v83 = vld [vmem:[#allocation5 + $0x9c] sm:$0xff]
    %v84 = vld [vmem:[#allocation5 + $0xa4] sm:$0xf]
    %v85 = vld [vmem:[#allocation5 + $0xa8] sm:$0xff]
    %v86 = vld [vmem:[#allocation5 + $0xb0] sm:$0xf]
    %v87 = vld [vmem:[#allocation5 + $0xb4] sm:$0xff]
    %v88 = vld [vmem:[#allocation5 + $0xbc] sm:$0xf]
    %v89 = vld [vmem:[#allocation5 + $0xc0] sm:$0xff]
    %v90 = vld [vmem:[#allocation5 + $0xc8] sm:$0xf]
    %v91 = vld [vmem:[#allocation5 + $0xcc] sm:$0xff]
    %v92 = vld [vmem:[#allocation5 + $0xd4] sm:$0xf]
    %v93 = vld [vmem:[#allocation5 + $0xd8] sm:$0xff]
    %v94 = vld [vmem:[#allocation5 + $0xe0] sm:$0xf]
    %v95 = vld [vmem:[#allocation5 + $0xe4] sm:$0xff]
    %v96 = vld [vmem:[#allocation5 + $0xec] sm:$0xf]
    %v97 = vld [vmem:[#allocation5 + $0xf0] sm:$0xff]
    %v98 = vld [vmem:[#allocation5 + $0xf8] sm:$0xf]
    %v99 = vld [vmem:[#allocation5 + $0xfc] sm:$0xff]
    %v100 = vld [vmem:[#allocation5 + $0x104] sm:$0xf]
    %v101 = vld [vmem:[#allocation5 + $0x108] sm:$0xff]
    %v102 = vld [vmem:[#allocation5 + $0x110] sm:$0xf]
    %v103 = vld [vmem:[#allocation5 + $0x114] sm:$0xff]
    %v104 = vld [vmem:[#allocation5 + $0x11c] sm:$0xf]
    %v105 = vld [vmem:[#allocation5 + $0x120] sm:$0xff]
    %v106 = vld [vmem:[#allocation5 + $0x128] sm:$0xf]
    %v107 = vld [vmem:[#allocation5 + $0x12c] sm:$0xff]
    %v108 = vld [vmem:[#allocation5 + $0x134] sm:$0xf]
    %v109 = vld [vmem:[#allocation5 + $0x138] sm:$0xff]
    %v110 = vld [vmem:[#allocation5 + $0x140] sm:$0xf]
    %v111 = vld [vmem:[#allocation5 + $0x144] sm:$0xff]
    %v112 = vld [vmem:[#allocation5 + $0x14c] sm:$0xf]
    %v113 = vld [vmem:[#allocation5 + $0x150] sm:$0xff]
    %v114 = vld [vmem:[#allocation5 + $0x158] sm:$0xf]
    %v115 = vld [vmem:[#allocation5 + $0x15c] sm:$0xff]
    %v116 = vld [vmem:[#allocation5 + $0x164] sm:$0xf]
    %v117 = vld [vmem:[#allocation5 + $0x168] sm:$0xff]
    %v118 = vld [vmem:[#allocation5 + $0x170] sm:$0xf]
    %v119 = vld [vmem:[#allocation5 + $0x174] sm:$0xff]
    %v120 = vld [vmem:[#allocation5 + $0x17c] sm:$0xf]
    %v121 = vld [vmem:[#allocation5 + $0x180] sm:$0xff]
    %v122 = vld [vmem:[#allocation5 + $0x188] sm:$0xf]
    %v123 = vld [vmem:[#allocation5 + $0x18c] sm:$0xff]
    %v124 = vld [vmem:[#allocation5 + $0x194] sm:$0xf]
    %v125 = vld [vmem:[#allocation5 + $0x198] sm:$0xff]
    %v126 = vld [vmem:[#allocation5 + $0x1a0] sm:$0xf]
    %v127 = vld [vmem:[#allocation5 + $0x1a4] sm:$0xff]
    %v128 = vld [vmem:[#allocation5 + $0x1ac] sm:$0xf]
    %v129 = vld [vmem:[#allocation5 + $0x1b0] sm:$0xff]
    %v130 = vld [vmem:[#allocation5 + $0x1b8] sm:$0xf]
    %v131 = vld [vmem:[#allocation5 + $0x1bc] sm:$0xff]
    %v132 = vld [vmem:[#allocation5 + $0x1c4] sm:$0xf]
    %v133 = vld [vmem:[#allocation5 + $0x1c8] sm:$0xff]
    %v134 = vld [vmem:[#allocation5 + $0x1d0] sm:$0xf]
    %v135 = vld [vmem:[#allocation5 + $0x1d4] sm:$0xff]
    %v136 = vld [vmem:[#allocation5 + $0x1dc] sm:$0xf]
    %v137 = vld [vmem:[#allocation5 + $0x1e0] sm:$0xff]
    %v138 = vld [vmem:[#allocation5 + $0x1e8] sm:$0xf]
    %v139 = vld [vmem:[#allocation5 + $0x1ec] sm:$0xff]
    %v140 = vld [vmem:[#allocation5 + $0x1f4] sm:$0xf]
    %v141 = vld [vmem:[#allocation5 + $0x1f8] sm:$0xff]
    %v142 = vld [vmem:[#allocation5 + $0x200] sm:$0xf]
    %v143 = vld [vmem:[#allocation5 + $0x204] sm:$0xff]
    %v144 = vld [vmem:[#allocation5 + $0x20c] sm:$0xf]
    %v145 = vld [vmem:[#allocation5 + $0x210] sm:$0xff]
    %v146 = vld [vmem:[#allocation5 + $0x218] sm:$0xf]
    %v147 = vld [vmem:[#allocation5 + $0x21c] sm:$0xff]
    %v148 = vld [vmem:[#allocation5 + $0x224] sm:$0xf]
    %v149 = vld [vmem:[#allocation5 + $0x228] sm:$0xff]
    %v150 = vld [vmem:[#allocation5 + $0x230] sm:$0xf]
    %v151 = vld [vmem:[#allocation5 + $0x234] sm:$0xff]
    %v152 = vld [vmem:[#allocation5 + $0x23c] sm:$0xf]
    %v153 = vld [vmem:[#allocation7] sm:$0x7]
    %v155 = vlaneseq
    %v156 = vshrl.u32 %v155, 7
    %v157 = vsub.s32 0, %v156
    %v158 = vrot.slane %v153, %v157
    %v159 = vlaneseq
    %v160 = vshrl.u32 %v159, 7
    %v161 = vsub.s32 1, %v160
    %v162 = vrot.slane %v153, %v161
    %v163 = vlaneseq
    %v164 = vshrl.u32 %v163, 7
    %v165 = vsub.s32 2, %v164
    %v166 = vrot.slane %v153, %v165
    %v172 = vunpack.c.l.b16 %v55
    %v173 = vunpack.c.h.b16 %v55
    %v174 = vunpack.c.l.b16 %v56
    %v175 = vpack.c.b16 %v172, %v172
    %v176 = vpack.c.b16 %v173, %v173
    %v177 = vpack.c.b16 %v174, %v174
    %v277 = vunpack.c.l.b16 %v57
    %v278 = vunpack.c.h.b16 %v57
    %v279 = vunpack.c.l.b16 %v58
    %v280 = vunpack.c.l.b16 %v59
    %v281 = vunpack.c.h.b16 %v59
    %v282 = vunpack.c.l.b16 %v60
    %v283 = vunpack.c.l.b16 %v61
    %v284 = vunpack.c.h.b16 %v61
    %v285 = vunpack.c.l.b16 %v62
    %v286 = vunpack.c.l.b16 %v63
    %v287 = vunpack.c.h.b16 %v63
    %v288 = vunpack.c.l.b16 %v64
    %v289 = vunpack.c.l.b16 %v65
    %v290 = vunpack.c.h.b16 %v65
    %v291 = vunpack.c.l.b16 %v66
    %v292 = vunpack.c.l.b16 %v67
    %v293 = vunpack.c.h.b16 %v67
    %v294 = vunpack.c.l.b16 %v68
    %v295 = vunpack.c.l.b16 %v69
    %v296 = vunpack.c.h.b16 %v69
    %v297 = vunpack.c.l.b16 %v70
    %v298 = vunpack.c.l.b16 %v71
    %v299 = vunpack.c.h.b16 %v71
    %v300 = vunpack.c.l.b16 %v72
    %v301 = vunpack.c.l.b16 %v73
    %v302 = vunpack.c.h.b16 %v73
    %v303 = vunpack.c.l.b16 %v74
    %v304 = vunpack.c.l.b16 %v75
    %v305 = vunpack.c.h.b16 %v75
    %v306 = vunpack.c.l.b16 %v76
    %v307 = vunpack.c.l.b16 %v77
    %v308 = vunpack.c.h.b16 %v77
    %v309 = vunpack.c.l.b16 %v78
    %v310 = vunpack.c.l.b16 %v79
    %v311 = vunpack.c.h.b16 %v79
    %v312 = vunpack.c.l.b16 %v80
    %v313 = vunpack.c.l.b16 %v81
    %v314 = vunpack.c.h.b16 %v81
    %v315 = vunpack.c.l.b16 %v82
    %v316 = vunpack.c.l.b16 %v83
    %v317 = vunpack.c.h.b16 %v83
    %v318 = vunpack.c.l.b16 %v84
    %v319 = vunpack.c.l.b16 %v85
    %v320 = vunpack.c.h.b16 %v85
    %v321 = vunpack.c.l.b16 %v86
    %v322 = vunpack.c.l.b16 %v87
    %v323 = vunpack.c.h.b16 %v87
    %v324 = vunpack.c.l.b16 %v88
    %v325 = vunpack.c.l.b16 %v89
    %v326 = vunpack.c.h.b16 %v89
    %v327 = vunpack.c.l.b16 %v90
    %v328 = vunpack.c.l.b16 %v91
    %v329 = vunpack.c.h.b16 %v91
    %v330 = vunpack.c.l.b16 %v92
    %v331 = vunpack.c.l.b16 %v93
    %v332 = vunpack.c.h.b16 %v93
    %v333 = vunpack.c.l.b16 %v94
    %v334 = vunpack.c.l.b16 %v95
    %v335 = vunpack.c.h.b16 %v95
    %v336 = vunpack.c.l.b16 %v96
    %v337 = vunpack.c.l.b16 %v97
    %v338 = vunpack.c.h.b16 %v97
    %v339 = vunpack.c.l.b16 %v98
    %v340 = vunpack.c.l.b16 %v99
    %v341 = vunpack.c.h.b16 %v99
    %v342 = vunpack.c.l.b16 %v100
    %v343 = vunpack.c.l.b16 %v101
    %v344 = vunpack.c.h.b16 %v101
    %v345 = vunpack.c.l.b16 %v102
    %v346 = vunpack.c.l.b16 %v103
    %v347 = vunpack.c.h.b16 %v103
    %v348 = vunpack.c.l.b16 %v104
    %v349 = vunpack.c.l.b16 %v105
    %v350 = vunpack.c.h.b16 %v105
    %v351 = vunpack.c.l.b16 %v106
    %v352 = vunpack.c.l.b16 %v107
    %v353 = vunpack.c.h.b16 %v107
    %v354 = vunpack.c.l.b16 %v108
    %v355 = vunpack.c.l.b16 %v109
    %v356 = vunpack.c.h.b16 %v109
    %v357 = vunpack.c.l.b16 %v110
    %v358 = vunpack.c.l.b16 %v111
    %v359 = vunpack.c.h.b16 %v111
    %v360 = vunpack.c.l.b16 %v112
    %v361 = vunpack.c.l.b16 %v113
    %v362 = vunpack.c.h.b16 %v113
    %v363 = vunpack.c.l.b16 %v114
    %v364 = vunpack.c.l.b16 %v115
    %v365 = vunpack.c.h.b16 %v115
    %v366 = vunpack.c.l.b16 %v116
    %v367 = vunpack.c.l.b16 %v117
    %v368 = vunpack.c.h.b16 %v117
    %v369 = vunpack.c.l.b16 %v118
    %v370 = vunpack.c.l.b16 %v119
    %v371 = vunpack.c.h.b16 %v119
    %v372 = vunpack.c.l.b16 %v120
    %v373 = vunpack.c.l.b16 %v121
    %v374 = vunpack.c.h.b16 %v121
    %v375 = vunpack.c.l.b16 %v122
    %v376 = vunpack.c.l.b16 %v123
    %v377 = vunpack.c.h.b16 %v123
    %v378 = vunpack.c.l.b16 %v124
    %v379 = vunpack.c.l.b16 %v125
    %v380 = vunpack.c.h.b16 %v125
    %v381 = vunpack.c.l.b16 %v126
    %v382 = vunpack.c.l.b16 %v127
    %v383 = vunpack.c.h.b16 %v127
    %v384 = vunpack.c.l.b16 %v128
    %v385 = vunpack.c.l.b16 %v129
    %v386 = vunpack.c.h.b16 %v129
    %v387 = vunpack.c.l.b16 %v130
    %v388 = vunpack.c.l.b16 %v131
    %v389 = vunpack.c.h.b16 %v131
    %v390 = vunpack.c.l.b16 %v132
    %v391 = vunpack.c.l.b16 %v133
    %v392 = vunpack.c.h.b16 %v133
    %v393 = vunpack.c.l.b16 %v134
    %v394 = vunpack.c.l.b16 %v135
    %v395 = vunpack.c.h.b16 %v135
    %v396 = vunpack.c.l.b16 %v136
    %v397 = vunpack.c.l.b16 %v137
    %v398 = vunpack.c.h.b16 %v137
    %v399 = vunpack.c.l.b16 %v138
    %v400 = vunpack.c.l.b16 %v139
    %v401 = vunpack.c.h.b16 %v139
    %v402 = vunpack.c.l.b16 %v140
    %v403 = vunpack.c.l.b16 %v141
    %v404 = vunpack.c.h.b16 %v141
    %v405 = vunpack.c.l.b16 %v142
    %v406 = vunpack.c.l.b16 %v143
    %v407 = vunpack.c.h.b16 %v143
    %v408 = vunpack.c.l.b16 %v144
    %v409 = vunpack.c.l.b16 %v145
    %v410 = vunpack.c.h.b16 %v145
    %v411 = vunpack.c.l.b16 %v146
    %v412 = vunpack.c.l.b16 %v147
    %v413 = vunpack.c.h.b16 %v147
    %v414 = vunpack.c.l.b16 %v148
    %v415 = vunpack.c.l.b16 %v149
    %v416 = vunpack.c.h.b16 %v149
    %v417 = vunpack.c.l.b16 %v150
    %v418 = vunpack.c.l.b16 %v151
    %v419 = vunpack.c.h.b16 %v151
    %v420 = vunpack.c.l.b16 %v152
    %v421 = vpack.c.b16 %v280, %v277
    %v422 = vpack.c.b16 %v281, %v278
    %v423 = vpack.c.b16 %v282, %v279
    %v424 = vpack.c.b16 %v286, %v283
    %v425 = vpack.c.b16 %v287, %v284
    %v426 = vpack.c.b16 %v288, %v285
    %v427 = vpack.c.b16 %v292, %v289
    %v428 = vpack.c.b16 %v293, %v290
    %v429 = vpack.c.b16 %v294, %v291
    %v430 = vpack.c.b16 %v298, %v295
    %v431 = vpack.c.b16 %v299, %v296
    %v432 = vpack.c.b16 %v300, %v297
    %v433 = vpack.c.b16 %v304, %v301
    %v434 = vpack.c.b16 %v305, %v302
    %v435 = vpack.c.b16 %v306, %v303
    %v436 = vpack.c.b16 %v310, %v307
    %v437 = vpack.c.b16 %v311, %v308
    %v438 = vpack.c.b16 %v312, %v309
    %v439 = vpack.c.b16 %v316, %v313
    %v440 = vpack.c.b16 %v317, %v314
    %v441 = vpack.c.b16 %v318, %v315
    %v442 = vpack.c.b16 %v322, %v319
    %v443 = vpack.c.b16 %v323, %v320
    %v444 = vpack.c.b16 %v324, %v321
    %v445 = vpack.c.b16 %v328, %v325
    %v446 = vpack.c.b16 %v329, %v326
    %v447 = vpack.c.b16 %v330, %v327
    %v448 = vpack.c.b16 %v334, %v331
    %v449 = vpack.c.b16 %v335, %v332
    %v450 = vpack.c.b16 %v336, %v333
    %v451 = vpack.c.b16 %v340, %v337
    %v452 = vpack.c.b16 %v341, %v338
    %v453 = vpack.c.b16 %v342, %v339
    %v454 = vpack.c.b16 %v346, %v343
    %v455 = vpack.c.b16 %v347, %v344
    %v456 = vpack.c.b16 %v348, %v345
    %v457 = vpack.c.b16 %v352, %v349
    %v458 = vpack.c.b16 %v353, %v350
    %v459 = vpack.c.b16 %v354, %v351
    %v460 = vpack.c.b16 %v358, %v355
    %v461 = vpack.c.b16 %v359, %v356
    %v462 = vpack.c.b16 %v360, %v357
    %v463 = vpack.c.b16 %v364, %v361
    %v464 = vpack.c.b16 %v365, %v362
    %v465 = vpack.c.b16 %v366, %v363
    %v466 = vpack.c.b16 %v370, %v367
    %v467 = vpack.c.b16 %v371, %v368
    %v468 = vpack.c.b16 %v372, %v369
    %v469 = vpack.c.b16 %v376, %v373
    %v470 = vpack.c.b16 %v377, %v374
    %v471 = vpack.c.b16 %v378, %v375
    %v472 = vpack.c.b16 %v382, %v379
    %v473 = vpack.c.b16 %v383, %v380
    %v474 = vpack.c.b16 %v384, %v381
    %v475 = vpack.c.b16 %v388, %v385
    %v476 = vpack.c.b16 %v389, %v386
    %v477 = vpack.c.b16 %v390, %v387
    %v478 = vpack.c.b16 %v394, %v391
    %v479 = vpack.c.b16 %v395, %v392
    %v480 = vpack.c.b16 %v396, %v393
    %v481 = vpack.c.b16 %v400, %v397
    %v482 = vpack.c.b16 %v401, %v398
    %v483 = vpack.c.b16 %v402, %v399
    %v484 = vpack.c.b16 %v406, %v403
    %v485 = vpack.c.b16 %v407, %v404
    %v486 = vpack.c.b16 %v408, %v405
    %v487 = vpack.c.b16 %v412, %v409
    %v488 = vpack.c.b16 %v413, %v410
    %v489 = vpack.c.b16 %v414, %v411
    %v490 = vpack.c.b16 %v418, %v415
    %v491 = vpack.c.b16 %v419, %v416
    %v492 = vpack.c.b16 %v420, %v417
    %565 = vmatprep.subr.bf16.mxu0 %v443
    %566 = vmatpush1.bf16.msra.mxu0 %v442
    %567 = vmatprep.subr.bf16.mxu0 %v440
    %568 = vmatpush1.bf16.msra.mxu0 %v439
    %569 = vmatprep.subr.bf16.mxu0 %v437
    %570 = vmatpush1.bf16.msra.mxu0 %v436
    %571 = vmatprep.subr.bf16.mxu0 %v434
    %572 = vmatpush1.bf16.msra.mxu0 %v433
    %573 = vmatprep.subr.bf16.mxu0 %v431
    %574 = vmatpush1.bf16.msra.mxu0 %v430
    %575 = vmatprep.subr.bf16.mxu0 %v428
    %576 = vmatpush1.bf16.msra.mxu0 %v427
    %577 = vmatprep.subr.bf16.mxu0 %v425
    %578 = vmatpush1.bf16.msra.mxu0 %v424
    %579 = vmatprep.subr.bf16.mxu0 %v422
    %580 = vmatpush1.bf16.msra.mxu0 %v421
    %581 = vmatprep.subr.bf16.mxu0 %v467
    %582 = vmatpush2.bf16.msra.mxu0 %v466
    %583 = vmatprep.subr.bf16.mxu0 %v464
    %584 = vmatpush2.bf16.msra.mxu0 %v463
    %585 = vmatprep.subr.bf16.mxu0 %v461
    %586 = vmatpush2.bf16.msra.mxu0 %v460
    %587 = vmatprep.subr.bf16.mxu0 %v458
    %588 = vmatpush2.bf16.msra.mxu0 %v457
    %589 = vmatprep.subr.bf16.mxu0 %v455
    %590 = vmatpush2.bf16.msra.mxu0 %v454
    %591 = vmatprep.subr.bf16.mxu0 %v452
    %592 = vmatpush2.bf16.msra.mxu0 %v451
    %593 = vmatprep.subr.bf16.mxu0 %v449
    %594 = vmatpush2.bf16.msra.mxu0 %v448
    %595 = vmatprep.subr.bf16.mxu0 %v446
    %596 = vmatpush2.bf16.msra.mxu0 %v445
    %597 = vmatprep.mubr.bf16.mxu0 %v176
    %598 = vmatmul.mubr.bf16.gmra.mxu0 %v175
    %v599 = vpop.f32.mrf.mxu0
    %v600 = vadd.f32 %v158, %v599
    %v601 = vpop.f32.mrf.mxu0
    %v602 = vadd.f32 %v162, %v601
    %v603 = vpop.f32.mrf.mxu0
    %v604 = vpop.f32.mrf.mxu0
    %605 = vdwg.mxu0
    %606 = vmatprep.subr.bf16.mxu0 %v491
    %607 = vmatpush1.bf16.msra.mxu0 %v490
    %608 = vmatprep.subr.bf16.mxu0 %v488
    %609 = vmatpush1.bf16.msra.mxu0 %v487
    %610 = vmatprep.subr.bf16.mxu0 %v485
    %611 = vmatpush1.bf16.msra.mxu0 %v484
    %612 = vmatprep.subr.bf16.mxu0 %v482
    %613 = vmatpush1.bf16.msra.mxu0 %v481
    %614 = vmatprep.subr.bf16.mxu0 %v479
    %615 = vmatpush1.bf16.msra.mxu0 %v478
    %616 = vmatprep.subr.bf16.mxu0 %v476
    %617 = vmatpush1.bf16.msra.mxu0 %v475
    %618 = vmatprep.subr.bf16.mxu0 %v473
    %619 = vmatpush1.bf16.msra.mxu0 %v472
    %620 = vmatprep.subr.bf16.mxu0 %v470
    %621 = vmatpush1.bf16.msra.mxu0 %v469
    %622 = vmatprep.subr.bf16.mxu0 0
    %623 = vmatpush2.bf16.msra.mxu0 0
    %624 = vmatprep.subr.bf16.mxu0 0
    %625 = vmatpush2.bf16.msra.mxu0 0
    %626 = vmatprep.subr.bf16.mxu0 0
    %627 = vmatpush2.bf16.msra.mxu0 0
    %628 = vmatprep.subr.bf16.mxu0 0
    %629 = vmatpush2.bf16.msra.mxu0 0
    %630 = vmatprep.subr.bf16.mxu0 0
    %631 = vmatpush2.bf16.msra.mxu0 0
    %632 = vmatprep.subr.bf16.mxu0 0
    %633 = vmatpush2.bf16.msra.mxu0 0
    %634 = vmatprep.subr.bf16.mxu0 0
    %635 = vmatpush2.bf16.msra.mxu0 0
    %636 = vmatprep.subr.bf16.mxu0 0
    %637 = vmatpush2.bf16.msra.mxu0 0
    %638 = vmatprep.mubr.bf16.mxu0 0
    %639 = vmatmul.mubr.bf16.gmra.mxu0 %v177
    %v640 = vpop.f32.mrf.mxu0
    %v641 = vadd.f32 %v600, %v640
    %v642 = vpop.f32.mrf.mxu0
    %v643 = vadd.f32 %v602, %v642
    %v644 = vpop.f32.mrf.mxu0
    %v645 = vpop.f32.mrf.mxu0
    %646 = vdwg.mxu0
    %647 = vmatprep.subr.bf16.mxu0 0
    %648 = vmatpush1.bf16.msra.mxu0 %v444
    %649 = vmatprep.subr.bf16.mxu0 0
    %650 = vmatpush1.bf16.msra.mxu0 %v441
    %651 = vmatprep.subr.bf16.mxu0 0
    %652 = vmatpush1.bf16.msra.mxu0 %v438
    %653 = vmatprep.subr.bf16.mxu0 0
    %654 = vmatpush1.bf16.msra.mxu0 %v435
    %655 = vmatprep.subr.bf16.mxu0 0
    %656 = vmatpush1.bf16.msra.mxu0 %v432
    %657 = vmatprep.subr.bf16.mxu0 0
    %658 = vmatpush1.bf16.msra.mxu0 %v429
    %659 = vmatprep.subr.bf16.mxu0 0
    %660 = vmatpush1.bf16.msra.mxu0 %v426
    %661 = vmatprep.subr.bf16.mxu0 0
    %662 = vmatpush1.bf16.msra.mxu0 %v423
    %663 = vmatprep.subr.bf16.mxu0 0
    %664 = vmatpush2.bf16.msra.mxu0 %v468
    %665 = vmatprep.subr.bf16.mxu0 0
    %666 = vmatpush2.bf16.msra.mxu0 %v465
    %667 = vmatprep.subr.bf16.mxu0 0
    %668 = vmatpush2.bf16.msra.mxu0 %v462
    %669 = vmatprep.subr.bf16.mxu0 0
    %670 = vmatpush2.bf16.msra.mxu0 %v459
    %671 = vmatprep.subr.bf16.mxu0 0
    %672 = vmatpush2.bf16.msra.mxu0 %v456
    %673 = vmatprep.subr.bf16.mxu0 0
    %674 = vmatpush2.bf16.msra.mxu0 %v453
    %675 = vmatprep.subr.bf16.mxu0 0
    %676 = vmatpush2.bf16.msra.mxu0 %v450
    %677 = vmatprep.subr.bf16.mxu0 0
    %678 = vmatpush2.bf16.msra.mxu0 %v447
    %679 = vmatprep.mubr.bf16.mxu0 %v176
    %680 = vmatmul.mubr.bf16.gmra.mxu0 %v175
    %v681 = vpop.f32.mrf.mxu0
    %v682 = vadd.f32 %v166, %v681
    %v683 = vpop.f32.mrf.mxu0
    %v684 = vpop.f32.mrf.mxu0
    %v685 = vpop.f32.mrf.mxu0
    %686 = vdwg.mxu0
    %687 = vmatprep.subr.bf16.mxu0 0
    %688 = vmatpush1.bf16.msra.mxu0 %v492
    %689 = vmatprep.subr.bf16.mxu0 0
    %690 = vmatpush1.bf16.msra.mxu0 %v489
    %691 = vmatprep.subr.bf16.mxu0 0
    %692 = vmatpush1.bf16.msra.mxu0 %v486
    %693 = vmatprep.subr.bf16.mxu0 0
    %694 = vmatpush1.bf16.msra.mxu0 %v483
    %695 = vmatprep.subr.bf16.mxu0 0
    %696 = vmatpush1.bf16.msra.mxu0 %v480
    %697 = vmatprep.subr.bf16.mxu0 0
    %698 = vmatpush1.bf16.msra.mxu0 %v477
    %699 = vmatprep.subr.bf16.mxu0 0
    %700 = vmatpush1.bf16.msra.mxu0 %v474
    %701 = vmatprep.subr.bf16.mxu0 0
    %702 = vmatpush1.bf16.msra.mxu0 %v471
    %703 = vmatprep.subr.bf16.mxu0 0
    %704 = vmatpush2.bf16.msra.mxu0 0
    %705 = vmatprep.subr.bf16.mxu0 0
    %706 = vmatpush2.bf16.msra.mxu0 0
    %707 = vmatprep.subr.bf16.mxu0 0
    %708 = vmatpush2.bf16.msra.mxu0 0
    %709 = vmatprep.subr.bf16.mxu0 0
    %710 = vmatpush2.bf16.msra.mxu0 0
    %711 = vmatprep.subr.bf16.mxu0 0
    %712 = vmatpush2.bf16.msra.mxu0 0
    %713 = vmatprep.subr.bf16.mxu0 0
    %714 = vmatpush2.bf16.msra.mxu0 0
    %715 = vmatprep.subr.bf16.mxu0 0
    %716 = vmatpush2.bf16.msra.mxu0 0
    %717 = vmatprep.subr.bf16.mxu0 0
    %718 = vmatpush2.bf16.msra.mxu0 0
    %719 = vmatprep.mubr.bf16.mxu0 0
    %720 = vmatmul.mubr.bf16.gmra.mxu0 %v177
    %v721 = vpop.f32.mrf.mxu0
    %v722 = vadd.f32 %v682, %v721
    %v723 = vpop.f32.mrf.mxu0
    %v724 = vpop.f32.mrf.mxu0
    %v725 = vpop.f32.mrf.mxu0
    %726 = vdwg.mxu0
    %v727 = vsub.f32 0.0, %v641
    %v728 = vsub.f32 0.0, %v643
    %v729 = vsub.f32 0.0, %v722
    %v730 = vmul.f32 %v727, 1.442695
    %v731 = vpow.pop %v730
    %v732 = vmul.f32 %v728, 1.442695
    %v733 = vpow.pop %v732
    %v734 = vmul.f32 %v729, 1.442695
    %v735 = vpow.pop %v734
    %v736 = vadd.f32 %v731, 1.0
    %v737 = vadd.f32 %v733, 1.0
    %v738 = vadd.f32 %v735, 1.0
    %v739 = vrcp.pop %v736
    %v740 = vrcp.pop %v737
    %v741 = vrcp.pop %v738
    %v742 = vpack.c.bf16 %v739, %v739
    %v743 = vpack.c.bf16 %v740, %v740
    %v744 = vpack.c.bf16 %v741, %v741
    %s745 = scalar_lea.vmem [#allocation5], 576
    %v746 = vld [vmem:[%s745] sm:$0xff]
    %v747 = vld [vmem:[%s745 + $0x8] sm:$0xf]
    %v748 = vld [vmem:[%s745 + $0xc] sm:$0xff]
    %v749 = vld [vmem:[%s745 + $0x14] sm:$0xf]
    %v750 = vld [vmem:[%s745 + $0x18] sm:$0xff]
    %v751 = vld [vmem:[%s745 + $0x20] sm:$0xf]
    %v752 = vld [vmem:[%s745 + $0x24] sm:$0xff]
    %v753 = vld [vmem:[%s745 + $0x2c] sm:$0xf]
    %v754 = vld [vmem:[%s745 + $0x30] sm:$0xff]
    %v755 = vld [vmem:[%s745 + $0x38] sm:$0xf]
    %v756 = vld [vmem:[%s745 + $0x3c] sm:$0xff]
    %v757 = vld [vmem:[%s745 + $0x44] sm:$0xf]
    %v758 = vld [vmem:[%s745 + $0x48] sm:$0xff]
    %v759 = vld [vmem:[%s745 + $0x50] sm:$0xf]
    %v760 = vld [vmem:[%s745 + $0x54] sm:$0xff]
    %v761 = vld [vmem:[%s745 + $0x5c] sm:$0xf]
    %v762 = vld [vmem:[%s745 + $0x60] sm:$0xff]
    %v763 = vld [vmem:[%s745 + $0x68] sm:$0xf]
    %v764 = vld [vmem:[%s745 + $0x6c] sm:$0xff]
    %v765 = vld [vmem:[%s745 + $0x74] sm:$0xf]
    %v766 = vld [vmem:[%s745 + $0x78] sm:$0xff]
    %v767 = vld [vmem:[%s745 + $0x80] sm:$0xf]
    %v768 = vld [vmem:[%s745 + $0x84] sm:$0xff]
    %v769 = vld [vmem:[%s745 + $0x8c] sm:$0xf]
    %v770 = vld [vmem:[%s745 + $0x90] sm:$0xff]
    %v771 = vld [vmem:[%s745 + $0x98] sm:$0xf]
    %v772 = vld [vmem:[%s745 + $0x9c] sm:$0xff]
    %v773 = vld [vmem:[%s745 + $0xa4] sm:$0xf]
    %v774 = vld [vmem:[%s745 + $0xa8] sm:$0xff]
    %v775 = vld [vmem:[%s745 + $0xb0] sm:$0xf]
    %v776 = vld [vmem:[%s745 + $0xb4] sm:$0xff]
    %v777 = vld [vmem:[%s745 + $0xbc] sm:$0xf]
    %v778 = vld [vmem:[%s745 + $0xc0] sm:$0xff]
    %v779 = vld [vmem:[%s745 + $0xc8] sm:$0xf]
    %v780 = vld [vmem:[%s745 + $0xcc] sm:$0xff]
    %v781 = vld [vmem:[%s745 + $0xd4] sm:$0xf]
    %v782 = vld [vmem:[%s745 + $0xd8] sm:$0xff]
    %v783 = vld [vmem:[%s745 + $0xe0] sm:$0xf]
    %v784 = vld [vmem:[%s745 + $0xe4] sm:$0xff]
    %v785 = vld [vmem:[%s745 + $0xec] sm:$0xf]
    %v786 = vld [vmem:[%s745 + $0xf0] sm:$0xff]
    %v787 = vld [vmem:[%s745 + $0xf8] sm:$0xf]
    %v788 = vld [vmem:[%s745 + $0xfc] sm:$0xff]
    %v789 = vld [vmem:[%s745 + $0x104] sm:$0xf]
    %v790 = vld [vmem:[%s745 + $0x108] sm:$0xff]
    %v791 = vld [vmem:[%s745 + $0x110] sm:$0xf]
    %v792 = vld [vmem:[%s745 + $0x114] sm:$0xff]
    %v793 = vld [vmem:[%s745 + $0x11c] sm:$0xf]
    %v794 = vld [vmem:[%s745 + $0x120] sm:$0xff]
    %v795 = vld [vmem:[%s745 + $0x128] sm:$0xf]
    %v796 = vld [vmem:[%s745 + $0x12c] sm:$0xff]
    %v797 = vld [vmem:[%s745 + $0x134] sm:$0xf]
    %v798 = vld [vmem:[%s745 + $0x138] sm:$0xff]
    %v799 = vld [vmem:[%s745 + $0x140] sm:$0xf]
    %v800 = vld [vmem:[%s745 + $0x144] sm:$0xff]
    %v801 = vld [vmem:[%s745 + $0x14c] sm:$0xf]
    %v802 = vld [vmem:[%s745 + $0x150] sm:$0xff]
    %v803 = vld [vmem:[%s745 + $0x158] sm:$0xf]
    %v804 = vld [vmem:[%s745 + $0x15c] sm:$0xff]
    %v805 = vld [vmem:[%s745 + $0x164] sm:$0xf]
    %v806 = vld [vmem:[%s745 + $0x168] sm:$0xff]
    %v807 = vld [vmem:[%s745 + $0x170] sm:$0xf]
    %v808 = vld [vmem:[%s745 + $0x174] sm:$0xff]
    %v809 = vld [vmem:[%s745 + $0x17c] sm:$0xf]
    %v810 = vld [vmem:[%s745 + $0x180] sm:$0xff]
    %v811 = vld [vmem:[%s745 + $0x188] sm:$0xf]
    %v812 = vld [vmem:[%s745 + $0x18c] sm:$0xff]
    %v813 = vld [vmem:[%s745 + $0x194] sm:$0xf]
    %v814 = vld [vmem:[%s745 + $0x198] sm:$0xff]
    %v815 = vld [vmem:[%s745 + $0x1a0] sm:$0xf]
    %v816 = vld [vmem:[%s745 + $0x1a4] sm:$0xff]
    %v817 = vld [vmem:[%s745 + $0x1ac] sm:$0xf]
    %v818 = vld [vmem:[%s745 + $0x1b0] sm:$0xff]
    %v819 = vld [vmem:[%s745 + $0x1b8] sm:$0xf]
    %v820 = vld [vmem:[%s745 + $0x1bc] sm:$0xff]
    %v821 = vld [vmem:[%s745 + $0x1c4] sm:$0xf]
    %v822 = vld [vmem:[%s745 + $0x1c8] sm:$0xff]
    %v823 = vld [vmem:[%s745 + $0x1d0] sm:$0xf]
    %v824 = vld [vmem:[%s745 + $0x1d4] sm:$0xff]
    %v825 = vld [vmem:[%s745 + $0x1dc] sm:$0xf]
    %v826 = vld [vmem:[%s745 + $0x1e0] sm:$0xff]
    %v827 = vld [vmem:[%s745 + $0x1e8] sm:$0xf]
    %v828 = vld [vmem:[%s745 + $0x1ec] sm:$0xff]
    %v829 = vld [vmem:[%s745 + $0x1f4] sm:$0xf]
    %v830 = vld [vmem:[%s745 + $0x1f8] sm:$0xff]
    %v831 = vld [vmem:[%s745 + $0x200] sm:$0xf]
    %v832 = vld [vmem:[%s745 + $0x204] sm:$0xff]
    %v833 = vld [vmem:[%s745 + $0x20c] sm:$0xf]
    %v834 = vld [vmem:[%s745 + $0x210] sm:$0xff]
    %v835 = vld [vmem:[%s745 + $0x218] sm:$0xf]
    %v836 = vld [vmem:[%s745 + $0x21c] sm:$0xff]
    %v837 = vld [vmem:[%s745 + $0x224] sm:$0xf]
    %v838 = vld [vmem:[%s745 + $0x228] sm:$0xff]
    %v839 = vld [vmem:[%s745 + $0x230] sm:$0xf]
    %v840 = vld [vmem:[%s745 + $0x234] sm:$0xff]
    %v841 = vld [vmem:[%s745 + $0x23c] sm:$0xf]
    %s842 = scalar_lea.vmem [#allocation7], 3
    %v843 = vld [vmem:[%s842] sm:$0x7]
    %v845 = vlaneseq
    %v846 = vshrl.u32 %v845, 7
    %v847 = vsub.s32 0, %v846
    %v848 = vrot.slane %v843, %v847
    %v849 = vlaneseq
    %v850 = vshrl.u32 %v849, 7
    %v851 = vsub.s32 1, %v850
    %v852 = vrot.slane %v843, %v851
    %v853 = vlaneseq
    %v854 = vshrl.u32 %v853, 7
    %v855 = vsub.s32 2, %v854
    %v856 = vrot.slane %v843, %v855
    %v956 = vunpack.c.l.b16 %v746
    %v957 = vunpack.c.h.b16 %v746
    %v958 = vunpack.c.l.b16 %v747
    %v959 = vunpack.c.l.b16 %v748
    %v960 = vunpack.c.h.b16 %v748
    %v961 = vunpack.c.l.b16 %v749
    %v962 = vunpack.c.l.b16 %v750
    %v963 = vunpack.c.h.b16 %v750
    %v964 = vunpack.c.l.b16 %v751
    %v965 = vunpack.c.l.b16 %v752
    %v966 = vunpack.c.h.b16 %v752
    %v967 = vunpack.c.l.b16 %v753
    %v968 = vunpack.c.l.b16 %v754
    %v969 = vunpack.c.h.b16 %v754
    %v970 = vunpack.c.l.b16 %v755
    %v971 = vunpack.c.l.b16 %v756
    %v972 = vunpack.c.h.b16 %v756
    %v973 = vunpack.c.l.b16 %v757
    %v974 = vunpack.c.l.b16 %v758
    %v975 = vunpack.c.h.b16 %v758
    %v976 = vunpack.c.l.b16 %v759
    %v977 = vunpack.c.l.b16 %v760
    %v978 = vunpack.c.h.b16 %v760
    %v979 = vunpack.c.l.b16 %v761
    %v980 = vunpack.c.l.b16 %v762
    %v981 = vunpack.c.h.b16 %v762
    %v982 = vunpack.c.l.b16 %v763
    %v983 = vunpack.c.l.b16 %v764
    %v984 = vunpack.c.h.b16 %v764
    %v985 = vunpack.c.l.b16 %v765
    %v986 = vunpack.c.l.b16 %v766
    %v987 = vunpack.c.h.b16 %v766
    %v988 = vunpack.c.l.b16 %v767
    %v989 = vunpack.c.l.b16 %v768
    %v990 = vunpack.c.h.b16 %v768
    %v991 = vunpack.c.l.b16 %v769
    %v992 = vunpack.c.l.b16 %v770
    %v993 = vunpack.c.h.b16 %v770
    %v994 = vunpack.c.l.b16 %v771
    %v995 = vunpack.c.l.b16 %v772
    %v996 = vunpack.c.h.b16 %v772
    %v997 = vunpack.c.l.b16 %v773
    %v998 = vunpack.c.l.b16 %v774
    %v999 = vunpack.c.h.b16 %v774
    %v1000 = vunpack.c.l.b16 %v775
    %v1001 = vunpack.c.l.b16 %v776
    %v1002 = vunpack.c.h.b16 %v776
    %v1003 = vunpack.c.l.b16 %v777
    %v1004 = vunpack.c.l.b16 %v778
    %v1005 = vunpack.c.h.b16 %v778
    %v1006 = vunpack.c.l.b16 %v779
    %v1007 = vunpack.c.l.b16 %v780
    %v1008 = vunpack.c.h.b16 %v780
    %v1009 = vunpack.c.l.b16 %v781
    %v1010 = vunpack.c.l.b16 %v782
    %v1011 = vunpack.c.h.b16 %v782
    %v1012 = vunpack.c.l.b16 %v783
    %v1013 = vunpack.c.l.b16 %v784
    %v1014 = vunpack.c.h.b16 %v784
    %v1015 = vunpack.c.l.b16 %v785
    %v1016 = vunpack.c.l.b16 %v786
    %v1017 = vunpack.c.h.b16 %v786
    %v1018 = vunpack.c.l.b16 %v787
    %v1019 = vunpack.c.l.b16 %v788
    %v1020 = vunpack.c.h.b16 %v788
    %v1021 = vunpack.c.l.b16 %v789
    %v1022 = vunpack.c.l.b16 %v790
    %v1023 = vunpack.c.h.b16 %v790
    %v1024 = vunpack.c.l.b16 %v791
    %v1025 = vunpack.c.l.b16 %v792
    %v1026 = vunpack.c.h.b16 %v792
    %v1027 = vunpack.c.l.b16 %v793
    %v1028 = vunpack.c.l.b16 %v794
    %v1029 = vunpack.c.h.b16 %v794
    %v1030 = vunpack.c.l.b16 %v795
    %v1031 = vunpack.c.l.b16 %v796
    %v1032 = vunpack.c.h.b16 %v796
    %v1033 = vunpack.c.l.b16 %v797
    %v1034 = vunpack.c.l.b16 %v798
    %v1035 = vunpack.c.h.b16 %v798
    %v1036 = vunpack.c.l.b16 %v799
    %v1037 = vunpack.c.l.b16 %v800
    %v1038 = vunpack.c.h.b16 %v800
    %v1039 = vunpack.c.l.b16 %v801
    %v1040 = vunpack.c.l.b16 %v802
    %v1041 = vunpack.c.h.b16 %v802
    %v1042 = vunpack.c.l.b16 %v803
    %v1043 = vunpack.c.l.b16 %v804
    %v1044 = vunpack.c.h.b16 %v804
    %v1045 = vunpack.c.l.b16 %v805
    %v1046 = vunpack.c.l.b16 %v806
    %v1047 = vunpack.c.h.b16 %v806
    %v1048 = vunpack.c.l.b16 %v807
    %v1049 = vunpack.c.l.b16 %v808
    %v1050 = vunpack.c.h.b16 %v808
    %v1051 = vunpack.c.l.b16 %v809
    %v1052 = vunpack.c.l.b16 %v810
    %v1053 = vunpack.c.h.b16 %v810
    %v1054 = vunpack.c.l.b16 %v811
    %v1055 = vunpack.c.l.b16 %v812
    %v1056 = vunpack.c.h.b16 %v812
    %v1057 = vunpack.c.l.b16 %v813
    %v1058 = vunpack.c.l.b16 %v814
    %v1059 = vunpack.c.h.b16 %v814
    %v1060 = vunpack.c.l.b16 %v815
    %v1061 = vunpack.c.l.b16 %v816
    %v1062 = vunpack.c.h.b16 %v816
    %v1063 = vunpack.c.l.b16 %v817
    %v1064 = vunpack.c.l.b16 %v818
    %v1065 = vunpack.c.h.b16 %v818
    %v1066 = vunpack.c.l.b16 %v819
    %v1067 = vunpack.c.l.b16 %v820
    %v1068 = vunpack.c.h.b16 %v820
    %v1069 = vunpack.c.l.b16 %v821
    %v1070 = vunpack.c.l.b16 %v822
    %v1071 = vunpack.c.h.b16 %v822
    %v1072 = vunpack.c.l.b16 %v823
    %v1073 = vunpack.c.l.b16 %v824
    %v1074 = vunpack.c.h.b16 %v824
    %v1075 = vunpack.c.l.b16 %v825
    %v1076 = vunpack.c.l.b16 %v826
    %v1077 = vunpack.c.h.b16 %v826
    %v1078 = vunpack.c.l.b16 %v827
    %v1079 = vunpack.c.l.b16 %v828
    %v1080 = vunpack.c.h.b16 %v828
    %v1081 = vunpack.c.l.b16 %v829
    %v1082 = vunpack.c.l.b16 %v830
    %v1083 = vunpack.c.h.b16 %v830
    %v1084 = vunpack.c.l.b16 %v831
    %v1085 = vunpack.c.l.b16 %v832
    %v1086 = vunpack.c.h.b16 %v832
    %v1087 = vunpack.c.l.b16 %v833
    %v1088 = vunpack.c.l.b16 %v834
    %v1089 = vunpack.c.h.b16 %v834
    %v1090 = vunpack.c.l.b16 %v835
    %v1091 = vunpack.c.l.b16 %v836
    %v1092 = vunpack.c.h.b16 %v836
    %v1093 = vunpack.c.l.b16 %v837
    %v1094 = vunpack.c.l.b16 %v838
    %v1095 = vunpack.c.h.b16 %v838
    %v1096 = vunpack.c.l.b16 %v839
    %v1097 = vunpack.c.l.b16 %v840
    %v1098 = vunpack.c.h.b16 %v840
    %v1099 = vunpack.c.l.b16 %v841
    %v1100 = vpack.c.b16 %v959, %v956
    %v1101 = vpack.c.b16 %v960, %v957
    %v1102 = vpack.c.b16 %v961, %v958
    %v1103 = vpack.c.b16 %v965, %v962
    %v1104 = vpack.c.b16 %v966, %v963
    %v1105 = vpack.c.b16 %v967, %v964
    %v1106 = vpack.c.b16 %v971, %v968
    %v1107 = vpack.c.b16 %v972, %v969
    %v1108 = vpack.c.b16 %v973, %v970
    %v1109 = vpack.c.b16 %v977, %v974
    %v1110 = vpack.c.b16 %v978, %v975
    %v1111 = vpack.c.b16 %v979, %v976
    %v1112 = vpack.c.b16 %v983, %v980
    %v1113 = vpack.c.b16 %v984, %v981
    %v1114 = vpack.c.b16 %v985, %v982
    %v1115 = vpack.c.b16 %v989, %v986
    %v1116 = vpack.c.b16 %v990, %v987
    %v1117 = vpack.c.b16 %v991, %v988
    %v1118 = vpack.c.b16 %v995, %v992
    %v1119 = vpack.c.b16 %v996, %v993
    %v1120 = vpack.c.b16 %v997, %v994
    %v1121 = vpack.c.b16 %v1001, %v998
    %v1122 = vpack.c.b16 %v1002, %v999
    %v1123 = vpack.c.b16 %v1003, %v1000
    %v1124 = vpack.c.b16 %v1007, %v1004
    %v1125 = vpack.c.b16 %v1008, %v1005
    %v1126 = vpack.c.b16 %v1009, %v1006
    %v1127 = vpack.c.b16 %v1013, %v1010
    %v1128 = vpack.c.b16 %v1014, %v1011
    %v1129 = vpack.c.b16 %v1015, %v1012
    %v1130 = vpack.c.b16 %v1019, %v1016
    %v1131 = vpack.c.b16 %v1020, %v1017
    %v1132 = vpack.c.b16 %v1021, %v1018
    %v1133 = vpack.c.b16 %v1025, %v1022
    %v1134 = vpack.c.b16 %v1026, %v1023
    %v1135 = vpack.c.b16 %v1027, %v1024
    %v1136 = vpack.c.b16 %v1031, %v1028
    %v1137 = vpack.c.b16 %v1032, %v1029
    %v1138 = vpack.c.b16 %v1033, %v1030
    %v1139 = vpack.c.b16 %v1037, %v1034
    %v1140 = vpack.c.b16 %v1038, %v1035
    %v1141 = vpack.c.b16 %v1039, %v1036
    %v1142 = vpack.c.b16 %v1043, %v1040
    %v1143 = vpack.c.b16 %v1044, %v1041
    %v1144 = vpack.c.b16 %v1045, %v1042
    %v1145 = vpack.c.b16 %v1049, %v1046
    %v1146 = vpack.c.b16 %v1050, %v1047
    %v1147 = vpack.c.b16 %v1051, %v1048
    %v1148 = vpack.c.b16 %v1055, %v1052
    %v1149 = vpack.c.b16 %v1056, %v1053
    %v1150 = vpack.c.b16 %v1057, %v1054
    %v1151 = vpack.c.b16 %v1061, %v1058
    %v1152 = vpack.c.b16 %v1062, %v1059
    %v1153 = vpack.c.b16 %v1063, %v1060
    %v1154 = vpack.c.b16 %v1067, %v1064
    %v1155 = vpack.c.b16 %v1068, %v1065
    %v1156 = vpack.c.b16 %v1069, %v1066
    %v1157 = vpack.c.b16 %v1073, %v1070
    %v1158 = vpack.c.b16 %v1074, %v1071
    %v1159 = vpack.c.b16 %v1075, %v1072
    %v1160 = vpack.c.b16 %v1079, %v1076
    %v1161 = vpack.c.b16 %v1080, %v1077
    %v1162 = vpack.c.b16 %v1081, %v1078
    %v1163 = vpack.c.b16 %v1085, %v1082
    %v1164 = vpack.c.b16 %v1086, %v1083
    %v1165 = vpack.c.b16 %v1087, %v1084
    %v1166 = vpack.c.b16 %v1091, %v1088
    %v1167 = vpack.c.b16 %v1092, %v1089
    %v1168 = vpack.c.b16 %v1093, %v1090
    %v1169 = vpack.c.b16 %v1097, %v1094
    %v1170 = vpack.c.b16 %v1098, %v1095
    %v1171 = vpack.c.b16 %v1099, %v1096
    %1244 = vmatprep.subr.bf16.mxu0 %v1122
    %1245 = vmatpush1.bf16.msra.mxu0 %v1121
    %1246 = vmatprep.subr.bf16.mxu0 %v1119
    %1247 = vmatpush1.bf16.msra.mxu0 %v1118
    %1248 = vmatprep.subr.bf16.mxu0 %v1116
    %1249 = vmatpush1.bf16.msra.mxu0 %v1115
    %1250 = vmatprep.subr.bf16.mxu0 %v1113
    %1251 = vmatpush1.bf16.msra.mxu0 %v1112
    %1252 = vmatprep.subr.bf16.mxu0 %v1110
    %1253 = vmatpush1.bf16.msra.mxu0 %v1109
    %1254 = vmatprep.subr.bf16.mxu0 %v1107
    %1255 = vmatpush1.bf16.msra.mxu0 %v1106
    %1256 = vmatprep.subr.bf16.mxu0 %v1104
    %1257 = vmatpush1.bf16.msra.mxu0 %v1103
    %1258 = vmatprep.subr.bf16.mxu0 %v1101
    %1259 = vmatpush1.bf16.msra.mxu0 %v1100
    %1260 = vmatprep.subr.bf16.mxu0 %v1146
    %1261 = vmatpush2.bf16.msra.mxu0 %v1145
    %1262 = vmatprep.subr.bf16.mxu0 %v1143
    %1263 = vmatpush2.bf16.msra.mxu0 %v1142
    %1264 = vmatprep.subr.bf16.mxu0 %v1140
    %1265 = vmatpush2.bf16.msra.mxu0 %v1139
    %1266 = vmatprep.subr.bf16.mxu0 %v1137
    %1267 = vmatpush2.bf16.msra.mxu0 %v1136
    %1268 = vmatprep.subr.bf16.mxu0 %v1134
    %1269 = vmatpush2.bf16.msra.mxu0 %v1133
    %1270 = vmatprep.subr.bf16.mxu0 %v1131
    %1271 = vmatpush2.bf16.msra.mxu0 %v1130
    %1272 = vmatprep.subr.bf16.mxu0 %v1128
    %1273 = vmatpush2.bf16.msra.mxu0 %v1127
    %1274 = vmatprep.subr.bf16.mxu0 %v1125
    %1275 = vmatpush2.bf16.msra.mxu0 %v1124
    %1276 = vmatprep.mubr.bf16.mxu0 %v743
    %1277 = vmatmul.mubr.bf16.gmra.mxu0 %v742
    %v1278 = vpop.f32.mrf.mxu0
    %v1279 = vadd.f32 %v848, %v1278
    %v1280 = vpop.f32.mrf.mxu0
    %v1281 = vadd.f32 %v852, %v1280
    %v1282 = vpop.f32.mrf.mxu0
    %v1283 = vpop.f32.mrf.mxu0
    %1284 = vdwg.mxu0
    %1285 = vmatprep.subr.bf16.mxu0 %v1170
    %1286 = vmatpush1.bf16.msra.mxu0 %v1169
    %1287 = vmatprep.subr.bf16.mxu0 %v1167
    %1288 = vmatpush1.bf16.msra.mxu0 %v1166
    %1289 = vmatprep.subr.bf16.mxu0 %v1164
    %1290 = vmatpush1.bf16.msra.mxu0 %v1163
    %1291 = vmatprep.subr.bf16.mxu0 %v1161
    %1292 = vmatpush1.bf16.msra.mxu0 %v1160
    %1293 = vmatprep.subr.bf16.mxu0 %v1158
    %1294 = vmatpush1.bf16.msra.mxu0 %v1157
    %1295 = vmatprep.subr.bf16.mxu0 %v1155
    %1296 = vmatpush1.bf16.msra.mxu0 %v1154
    %1297 = vmatprep.subr.bf16.mxu0 %v1152
    %1298 = vmatpush1.bf16.msra.mxu0 %v1151
    %1299 = vmatprep.subr.bf16.mxu0 %v1149
    %1300 = vmatpush1.bf16.msra.mxu0 %v1148
    %1301 = vmatprep.subr.bf16.mxu0 0
    %1302 = vmatpush2.bf16.msra.mxu0 0
    %1303 = vmatprep.subr.bf16.mxu0 0
    %1304 = vmatpush2.bf16.msra.mxu0 0
    %1305 = vmatprep.subr.bf16.mxu0 0
    %1306 = vmatpush2.bf16.msra.mxu0 0
    %1307 = vmatprep.subr.bf16.mxu0 0
    %1308 = vmatpush2.bf16.msra.mxu0 0
    %1309 = vmatprep.subr.bf16.mxu0 0
    %1310 = vmatpush2.bf16.msra.mxu0 0
    %1311 = vmatprep.subr.bf16.mxu0 0
    %1312 = vmatpush2.bf16.msra.mxu0 0
    %1313 = vmatprep.subr.bf16.mxu0 0
    %1314 = vmatpush2.bf16.msra.mxu0 0
    %1315 = vmatprep.subr.bf16.mxu0 0
    %1316 = vmatpush2.bf16.msra.mxu0 0
    %1317 = vmatprep.mubr.bf16.mxu0 0
    %1318 = vmatmul.mubr.bf16.gmra.mxu0 %v744
    %v1319 = vpop.f32.mrf.mxu0
    %v1320 = vadd.f32 %v1279, %v1319
    %v1321 = vpop.f32.mrf.mxu0
    %v1322 = vadd.f32 %v1281, %v1321
    %v1323 = vpop.f32.mrf.mxu0
    %v1324 = vpop.f32.mrf.mxu0
    %1325 = vdwg.mxu0
    %1326 = vmatprep.subr.bf16.mxu0 0
    %1327 = vmatpush1.bf16.msra.mxu0 %v1123
    %1328 = vmatprep.subr.bf16.mxu0 0
    %1329 = vmatpush1.bf16.msra.mxu0 %v1120
    %1330 = vmatprep.subr.bf16.mxu0 0
    %1331 = vmatpush1.bf16.msra.mxu0 %v1117
    %1332 = vmatprep.subr.bf16.mxu0 0
    %1333 = vmatpush1.bf16.msra.mxu0 %v1114
    %1334 = vmatprep.subr.bf16.mxu0 0
    %1335 = vmatpush1.bf16.msra.mxu0 %v1111
    %1336 = vmatprep.subr.bf16.mxu0 0
    %1337 = vmatpush1.bf16.msra.mxu0 %v1108
    %1338 = vmatprep.subr.bf16.mxu0 0
    %1339 = vmatpush1.bf16.msra.mxu0 %v1105
    %1340 = vmatprep.subr.bf16.mxu0 0
    %1341 = vmatpush1.bf16.msra.mxu0 %v1102
    %1342 = vmatprep.subr.bf16.mxu0 0
    %1343 = vmatpush2.bf16.msra.mxu0 %v1147
    %1344 = vmatprep.subr.bf16.mxu0 0
    %1345 = vmatpush2.bf16.msra.mxu0 %v1144
    %1346 = vmatprep.subr.bf16.mxu0 0
    %1347 = vmatpush2.bf16.msra.mxu0 %v1141
    %1348 = vmatprep.subr.bf16.mxu0 0
    %1349 = vmatpush2.bf16.msra.mxu0 %v1138
    %1350 = vmatprep.subr.bf16.mxu0 0
    %1351 = vmatpush2.bf16.msra.mxu0 %v1135
    %1352 = vmatprep.subr.bf16.mxu0 0
    %1353 = vmatpush2.bf16.msra.mxu0 %v1132
    %1354 = vmatprep.subr.bf16.mxu0 0
    %1355 = vmatpush2.bf16.msra.mxu0 %v1129
    %1356 = vmatprep.subr.bf16.mxu0 0
    %1357 = vmatpush2.bf16.msra.mxu0 %v1126
    %1358 = vmatprep.mubr.bf16.mxu0 %v743
    %1359 = vmatmul.mubr.bf16.gmra.mxu0 %v742
    %v1360 = vpop.f32.mrf.mxu0
    %v1361 = vadd.f32 %v856, %v1360
    %v1362 = vpop.f32.mrf.mxu0
    %v1363 = vpop.f32.mrf.mxu0
    %v1364 = vpop.f32.mrf.mxu0
    %1365 = vdwg.mxu0
    %1366 = vmatprep.subr.bf16.mxu0 0
    %1367 = vmatpush1.bf16.msra.mxu0 %v1171
    %1368 = vmatprep.subr.bf16.mxu0 0
    %1369 = vmatpush1.bf16.msra.mxu0 %v1168
    %1370 = vmatprep.subr.bf16.mxu0 0
    %1371 = vmatpush1.bf16.msra.mxu0 %v1165
    %1372 = vmatprep.subr.bf16.mxu0 0
    %1373 = vmatpush1.bf16.msra.mxu0 %v1162
    %1374 = vmatprep.subr.bf16.mxu0 0
    %1375 = vmatpush1.bf16.msra.mxu0 %v1159
    %1376 = vmatprep.subr.bf16.mxu0 0
    %1377 = vmatpush1.bf16.msra.mxu0 %v1156
    %1378 = vmatprep.subr.bf16.mxu0 0
    %1379 = vmatpush1.bf16.msra.mxu0 %v1153
    %1380 = vmatprep.subr.bf16.mxu0 0
    %1381 = vmatpush1.bf16.msra.mxu0 %v1150
    %1382 = vmatprep.subr.bf16.mxu0 0
    %1383 = vmatpush2.bf16.msra.mxu0 0
    %1384 = vmatprep.subr.bf16.mxu0 0
    %1385 = vmatpush2.bf16.msra.mxu0 0
    %1386 = vmatprep.subr.bf16.mxu0 0
    %1387 = vmatpush2.bf16.msra.mxu0 0
    %1388 = vmatprep.subr.bf16.mxu0 0
    %1389 = vmatpush2.bf16.msra.mxu0 0
    %1390 = vmatprep.subr.bf16.mxu0 0
    %1391 = vmatpush2.bf16.msra.mxu0 0
    %1392 = vmatprep.subr.bf16.mxu0 0
    %1393 = vmatpush2.bf16.msra.mxu0 0
    %1394 = vmatprep.subr.bf16.mxu0 0
    %1395 = vmatpush2.bf16.msra.mxu0 0
    %1396 = vmatprep.subr.bf16.mxu0 0
    %1397 = vmatpush2.bf16.msra.mxu0 0
    %1398 = vmatprep.mubr.bf16.mxu0 0
    %1399 = vmatmul.mubr.bf16.gmra.mxu0 %v744
    %v1400 = vpop.f32.mrf.mxu0
    %v1401 = vadd.f32 %v1361, %v1400
    %v1402 = vpop.f32.mrf.mxu0
    %v1403 = vpop.f32.mrf.mxu0
    %v1404 = vpop.f32.mrf.mxu0
    %1405 = vdwg.mxu0
    %v1406 = vsub.f32 0.0, %v1320
    %v1407 = vsub.f32 0.0, %v1322
    %v1408 = vsub.f32 0.0, %v1401
    %v1409 = vmul.f32 %v1406, 1.442695
    %v1410 = vpow.pop %v1409
    %v1411 = vmul.f32 %v1407, 1.442695
    %v1412 = vpow.pop %v1411
    %v1413 = vmul.f32 %v1408, 1.442695
    %v1414 = vpow.pop %v1413
    %v1415 = vadd.f32 %v1410, 1.0
    %v1416 = vadd.f32 %v1412, 1.0
    %v1417 = vadd.f32 %v1414, 1.0
    %v1418 = vrcp.pop %v1415
    %v1419 = vrcp.pop %v1416
    %v1420 = vrcp.pop %v1417
    %v1421 = vpack.c.bf16 %v1418, %v1418
    %v1422 = vpack.c.bf16 %v1419, %v1419
    %v1423 = vpack.c.bf16 %v1420, %v1420
    %s1424 = scalar_lea.vmem [#allocation5], 1152
    %v1425 = vld [vmem:[%s1424] sm:$0xff]
    %v1426 = vld [vmem:[%s1424 + $0x8] sm:$0xf]
    %v1427 = vld [vmem:[%s1424 + $0xc] sm:$0xff]
    %v1428 = vld [vmem:[%s1424 + $0x14] sm:$0xf]
    %v1429 = vld [vmem:[%s1424 + $0x18] sm:$0xff]
    %v1430 = vld [vmem:[%s1424 + $0x20] sm:$0xf]
    %v1431 = vld [vmem:[%s1424 + $0x24] sm:$0xff]
    %v1432 = vld [vmem:[%s1424 + $0x2c] sm:$0xf]
    %v1433 = vld [vmem:[%s1424 + $0x30] sm:$0xff]
    %v1434 = vld [vmem:[%s1424 + $0x38] sm:$0xf]
    %v1435 = vld [vmem:[%s1424 + $0x3c] sm:$0xff]
    %v1436 = vld [vmem:[%s1424 + $0x44] sm:$0xf]
    %v1437 = vld [vmem:[%s1424 + $0x48] sm:$0xff]
    %v1438 = vld [vmem:[%s1424 + $0x50] sm:$0xf]
    %v1439 = vld [vmem:[%s1424 + $0x54] sm:$0xff]
    %v1440 = vld [vmem:[%s1424 + $0x5c] sm:$0xf]
    %v1441 = vld [vmem:[%s1424 + $0x60] sm:$0xff]
    %v1442 = vld [vmem:[%s1424 + $0x68] sm:$0xf]
    %v1443 = vld [vmem:[%s1424 + $0x6c] sm:$0xff]
    %v1444 = vld [vmem:[%s1424 + $0x74] sm:$0xf]
    %v1445 = vld [vmem:[%s1424 + $0x78] sm:$0xff]
    %v1446 = vld [vmem:[%s1424 + $0x80] sm:$0xf]
    %v1447 = vld [vmem:[%s1424 + $0x84] sm:$0xff]
    %v1448 = vld [vmem:[%s1424 + $0x8c] sm:$0xf]
    %v1449 = vld [vmem:[%s1424 + $0x90] sm:$0xff]
    %v1450 = vld [vmem:[%s1424 + $0x98] sm:$0xf]
    %v1451 = vld [vmem:[%s1424 + $0x9c] sm:$0xff]
    %v1452 = vld [vmem:[%s1424 + $0xa4] sm:$0xf]
    %v1453 = vld [vmem:[%s1424 + $0xa8] sm:$0xff]
    %v1454 = vld [vmem:[%s1424 + $0xb0] sm:$0xf]
    %v1455 = vld [vmem:[%s1424 + $0xb4] sm:$0xff]
    %v1456 = vld [vmem:[%s1424 + $0xbc] sm:$0xf]
    %v1457 = vld [vmem:[%s1424 + $0xc0] sm:$0xff]
    %v1458 = vld [vmem:[%s1424 + $0xc8] sm:$0xf]
    %v1459 = vld [vmem:[%s1424 + $0xcc] sm:$0xff]
    %v1460 = vld [vmem:[%s1424 + $0xd4] sm:$0xf]
    %v1461 = vld [vmem:[%s1424 + $0xd8] sm:$0xff]
    %v1462 = vld [vmem:[%s1424 + $0xe0] sm:$0xf]
    %v1463 = vld [vmem:[%s1424 + $0xe4] sm:$0xff]
    %v1464 = vld [vmem:[%s1424 + $0xec] sm:$0xf]
    %v1465 = vld [vmem:[%s1424 + $0xf0] sm:$0xff]
    %v1466 = vld [vmem:[%s1424 + $0xf8] sm:$0xf]
    %v1467 = vld [vmem:[%s1424 + $0xfc] sm:$0xff]
    %v1468 = vld [vmem:[%s1424 + $0x104] sm:$0xf]
    %v1469 = vld [vmem:[%s1424 + $0x108] sm:$0xff]
    %v1470 = vld [vmem:[%s1424 + $0x110] sm:$0xf]
    %v1471 = vld [vmem:[%s1424 + $0x114] sm:$0xff]
    %v1472 = vld [vmem:[%s1424 + $0x11c] sm:$0xf]
    %v1473 = vld [vmem:[%s1424 + $0x120] sm:$0xff]
    %v1474 = vld [vmem:[%s1424 + $0x128] sm:$0xf]
    %v1475 = vld [vmem:[%s1424 + $0x12c] sm:$0xff]
    %v1476 = vld [vmem:[%s1424 + $0x134] sm:$0xf]
    %v1477 = vld [vmem:[%s1424 + $0x138] sm:$0xff]
    %v1478 = vld [vmem:[%s1424 + $0x140] sm:$0xf]
    %v1479 = vld [vmem:[%s1424 + $0x144] sm:$0xff]
    %v1480 = vld [vmem:[%s1424 + $0x14c] sm:$0xf]
    %v1481 = vld [vmem:[%s1424 + $0x150] sm:$0xff]
    %v1482 = vld [vmem:[%s1424 + $0x158] sm:$0xf]
    %v1483 = vld [vmem:[%s1424 + $0x15c] sm:$0xff]
    %v1484 = vld [vmem:[%s1424 + $0x164] sm:$0xf]
    %v1485 = vld [vmem:[%s1424 + $0x168] sm:$0xff]
    %v1486 = vld [vmem:[%s1424 + $0x170] sm:$0xf]
    %v1487 = vld [vmem:[%s1424 + $0x174] sm:$0xff]
    %v1488 = vld [vmem:[%s1424 + $0x17c] sm:$0xf]
    %v1489 = vld [vmem:[%s1424 + $0x180] sm:$0xff]
    %v1490 = vld [vmem:[%s1424 + $0x188] sm:$0xf]
    %v1491 = vld [vmem:[%s1424 + $0x18c] sm:$0xff]
    %v1492 = vld [vmem:[%s1424 + $0x194] sm:$0xf]
    %v1493 = vld [vmem:[%s1424 + $0x198] sm:$0xff]
    %v1494 = vld [vmem:[%s1424 + $0x1a0] sm:$0xf]
    %v1495 = vld [vmem:[%s1424 + $0x1a4] sm:$0xff]
    %v1496 = vld [vmem:[%s1424 + $0x1ac] sm:$0xf]
    %v1497 = vld [vmem:[%s1424 + $0x1b0] sm:$0xff]
    %v1498 = vld [vmem:[%s1424 + $0x1b8] sm:$0xf]
    %v1499 = vld [vmem:[%s1424 + $0x1bc] sm:$0xff]
    %v1500 = vld [vmem:[%s1424 + $0x1c4] sm:$0xf]
    %v1501 = vld [vmem:[%s1424 + $0x1c8] sm:$0xff]
    %v1502 = vld [vmem:[%s1424 + $0x1d0] sm:$0xf]
    %v1503 = vld [vmem:[%s1424 + $0x1d4] sm:$0xff]
    %v1504 = vld [vmem:[%s1424 + $0x1dc] sm:$0xf]
    %v1505 = vld [vmem:[%s1424 + $0x1e0] sm:$0xff]
    %v1506 = vld [vmem:[%s1424 + $0x1e8] sm:$0xf]
    %v1507 = vld [vmem:[%s1424 + $0x1ec] sm:$0xff]
    %v1508 = vld [vmem:[%s1424 + $0x1f4] sm:$0xf]
    %v1509 = vld [vmem:[%s1424 + $0x1f8] sm:$0xff]
    %v1510 = vld [vmem:[%s1424 + $0x200] sm:$0xf]
    %v1511 = vld [vmem:[%s1424 + $0x204] sm:$0xff]
    %v1512 = vld [vmem:[%s1424 + $0x20c] sm:$0xf]
    %v1513 = vld [vmem:[%s1424 + $0x210] sm:$0xff]
    %v1514 = vld [vmem:[%s1424 + $0x218] sm:$0xf]
    %v1515 = vld [vmem:[%s1424 + $0x21c] sm:$0xff]
    %v1516 = vld [vmem:[%s1424 + $0x224] sm:$0xf]
    %v1517 = vld [vmem:[%s1424 + $0x228] sm:$0xff]
    %v1518 = vld [vmem:[%s1424 + $0x230] sm:$0xf]
    %v1519 = vld [vmem:[%s1424 + $0x234] sm:$0xff]
    %v1520 = vld [vmem:[%s1424 + $0x23c] sm:$0xf]
    %s1521 = scalar_lea.vmem [#allocation7], 6
    %v1522 = vld [vmem:[%s1521] sm:$0x7]
    %v1524 = vlaneseq
    %v1525 = vshrl.u32 %v1524, 7
    %v1526 = vsub.s32 0, %v1525
    %v1527 = vrot.slane %v1522, %v1526
    %v1528 = vlaneseq
    %v1529 = vshrl.u32 %v1528, 7
    %v1530 = vsub.s32 1, %v1529
    %v1531 = vrot.slane %v1522, %v1530
    %v1532 = vlaneseq
    %v1533 = vshrl.u32 %v1532, 7
    %v1534 = vsub.s32 2, %v1533
    %v1535 = vrot.slane %v1522, %v1534
    %v1635 = vunpack.c.l.b16 %v1425
    %v1636 = vunpack.c.h.b16 %v1425
    %v1637 = vunpack.c.l.b16 %v1426
    %v1638 = vunpack.c.l.b16 %v1427
    %v1639 = vunpack.c.h.b16 %v1427
    %v1640 = vunpack.c.l.b16 %v1428
    %v1641 = vunpack.c.l.b16 %v1429
    %v1642 = vunpack.c.h.b16 %v1429
    %v1643 = vunpack.c.l.b16 %v1430
    %v1644 = vunpack.c.l.b16 %v1431
    %v1645 = vunpack.c.h.b16 %v1431
    %v1646 = vunpack.c.l.b16 %v1432
    %v1647 = vunpack.c.l.b16 %v1433
    %v1648 = vunpack.c.h.b16 %v1433
    %v1649 = vunpack.c.l.b16 %v1434
    %v1650 = vunpack.c.l.b16 %v1435
    %v1651 = vunpack.c.h.b16 %v1435
    %v1652 = vunpack.c.l.b16 %v1436
    %v1653 = vunpack.c.l.b16 %v1437
    %v1654 = vunpack.c.h.b16 %v1437
    %v1655 = vunpack.c.l.b16 %v1438
    %v1656 = vunpack.c.l.b16 %v1439
    %v1657 = vunpack.c.h.b16 %v1439
    %v1658 = vunpack.c.l.b16 %v1440
    %v1659 = vunpack.c.l.b16 %v1441
    %v1660 = vunpack.c.h.b16 %v1441
    %v1661 = vunpack.c.l.b16 %v1442
    %v1662 = vunpack.c.l.b16 %v1443
    %v1663 = vunpack.c.h.b16 %v1443
    %v1664 = vunpack.c.l.b16 %v1444
    %v1665 = vunpack.c.l.b16 %v1445
    %v1666 = vunpack.c.h.b16 %v1445
    %v1667 = vunpack.c.l.b16 %v1446
    %v1668 = vunpack.c.l.b16 %v1447
    %v1669 = vunpack.c.h.b16 %v1447
    %v1670 = vunpack.c.l.b16 %v1448
    %v1671 = vunpack.c.l.b16 %v1449
    %v1672 = vunpack.c.h.b16 %v1449
    %v1673 = vunpack.c.l.b16 %v1450
    %v1674 = vunpack.c.l.b16 %v1451
    %v1675 = vunpack.c.h.b16 %v1451
    %v1676 = vunpack.c.l.b16 %v1452
    %v1677 = vunpack.c.l.b16 %v1453
    %v1678 = vunpack.c.h.b16 %v1453
    %v1679 = vunpack.c.l.b16 %v1454
    %v1680 = vunpack.c.l.b16 %v1455
    %v1681 = vunpack.c.h.b16 %v1455
    %v1682 = vunpack.c.l.b16 %v1456
    %v1683 = vunpack.c.l.b16 %v1457
    %v1684 = vunpack.c.h.b16 %v1457
    %v1685 = vunpack.c.l.b16 %v1458
    %v1686 = vunpack.c.l.b16 %v1459
    %v1687 = vunpack.c.h.b16 %v1459
    %v1688 = vunpack.c.l.b16 %v1460
    %v1689 = vunpack.c.l.b16 %v1461
    %v1690 = vunpack.c.h.b16 %v1461
    %v1691 = vunpack.c.l.b16 %v1462
    %v1692 = vunpack.c.l.b16 %v1463
    %v1693 = vunpack.c.h.b16 %v1463
    %v1694 = vunpack.c.l.b16 %v1464
    %v1695 = vunpack.c.l.b16 %v1465
    %v1696 = vunpack.c.h.b16 %v1465
    %v1697 = vunpack.c.l.b16 %v1466
    %v1698 = vunpack.c.l.b16 %v1467
    %v1699 = vunpack.c.h.b16 %v1467
    %v1700 = vunpack.c.l.b16 %v1468
    %v1701 = vunpack.c.l.b16 %v1469
    %v1702 = vunpack.c.h.b16 %v1469
    %v1703 = vunpack.c.l.b16 %v1470
    %v1704 = vunpack.c.l.b16 %v1471
    %v1705 = vunpack.c.h.b16 %v1471
    %v1706 = vunpack.c.l.b16 %v1472
    %v1707 = vunpack.c.l.b16 %v1473
    %v1708 = vunpack.c.h.b16 %v1473
    %v1709 = vunpack.c.l.b16 %v1474
    %v1710 = vunpack.c.l.b16 %v1475
    %v1711 = vunpack.c.h.b16 %v1475
    %v1712 = vunpack.c.l.b16 %v1476
    %v1713 = vunpack.c.l.b16 %v1477
    %v1714 = vunpack.c.h.b16 %v1477
    %v1715 = vunpack.c.l.b16 %v1478
    %v1716 = vunpack.c.l.b16 %v1479
    %v1717 = vunpack.c.h.b16 %v1479
    %v1718 = vunpack.c.l.b16 %v1480
    %v1719 = vunpack.c.l.b16 %v1481
    %v1720 = vunpack.c.h.b16 %v1481
    %v1721 = vunpack.c.l.b16 %v1482
    %v1722 = vunpack.c.l.b16 %v1483
    %v1723 = vunpack.c.h.b16 %v1483
    %v1724 = vunpack.c.l.b16 %v1484
    %v1725 = vunpack.c.l.b16 %v1485
    %v1726 = vunpack.c.h.b16 %v1485
    %v1727 = vunpack.c.l.b16 %v1486
    %v1728 = vunpack.c.l.b16 %v1487
    %v1729 = vunpack.c.h.b16 %v1487
    %v1730 = vunpack.c.l.b16 %v1488
    %v1731 = vunpack.c.l.b16 %v1489
    %v1732 = vunpack.c.h.b16 %v1489
    %v1733 = vunpack.c.l.b16 %v1490
    %v1734 = vunpack.c.l.b16 %v1491
    %v1735 = vunpack.c.h.b16 %v1491
    %v1736 = vunpack.c.l.b16 %v1492
    %v1737 = vunpack.c.l.b16 %v1493
    %v1738 = vunpack.c.h.b16 %v1493
    %v1739 = vunpack.c.l.b16 %v1494
    %v1740 = vunpack.c.l.b16 %v1495
    %v1741 = vunpack.c.h.b16 %v1495
    %v1742 = vunpack.c.l.b16 %v1496
    %v1743 = vunpack.c.l.b16 %v1497
    %v1744 = vunpack.c.h.b16 %v1497
    %v1745 = vunpack.c.l.b16 %v1498
    %v1746 = vunpack.c.l.b16 %v1499
    %v1747 = vunpack.c.h.b16 %v1499
    %v1748 = vunpack.c.l.b16 %v1500
    %v1749 = vunpack.c.l.b16 %v1501
    %v1750 = vunpack.c.h.b16 %v1501
    %v1751 = vunpack.c.l.b16 %v1502
    %v1752 = vunpack.c.l.b16 %v1503
    %v1753 = vunpack.c.h.b16 %v1503
    %v1754 = vunpack.c.l.b16 %v1504
    %v1755 = vunpack.c.l.b16 %v1505
    %v1756 = vunpack.c.h.b16 %v1505
    %v1757 = vunpack.c.l.b16 %v1506
    %v1758 = vunpack.c.l.b16 %v1507
    %v1759 = vunpack.c.h.b16 %v1507
    %v1760 = vunpack.c.l.b16 %v1508
    %v1761 = vunpack.c.l.b16 %v1509
    %v1762 = vunpack.c.h.b16 %v1509
    %v1763 = vunpack.c.l.b16 %v1510
    %v1764 = vunpack.c.l.b16 %v1511
    %v1765 = vunpack.c.h.b16 %v1511
    %v1766 = vunpack.c.l.b16 %v1512
    %v1767 = vunpack.c.l.b16 %v1513
    %v1768 = vunpack.c.h.b16 %v1513
    %v1769 = vunpack.c.l.b16 %v1514
    %v1770 = vunpack.c.l.b16 %v1515
    %v1771 = vunpack.c.h.b16 %v1515
    %v1772 = vunpack.c.l.b16 %v1516
    %v1773 = vunpack.c.l.b16 %v1517
    %v1774 = vunpack.c.h.b16 %v1517
    %v1775 = vunpack.c.l.b16 %v1518
    %v1776 = vunpack.c.l.b16 %v1519
    %v1777 = vunpack.c.h.b16 %v1519
    %v1778 = vunpack.c.l.b16 %v1520
    %v1779 = vpack.c.b16 %v1638, %v1635
    %v1780 = vpack.c.b16 %v1639, %v1636
    %v1781 = vpack.c.b16 %v1640, %v1637
    %v1782 = vpack.c.b16 %v1644, %v1641
    %v1783 = vpack.c.b16 %v1645, %v1642
    %v1784 = vpack.c.b16 %v1646, %v1643
    %v1785 = vpack.c.b16 %v1650, %v1647
    %v1786 = vpack.c.b16 %v1651, %v1648
    %v1787 = vpack.c.b16 %v1652, %v1649
    %v1788 = vpack.c.b16 %v1656, %v1653
    %v1789 = vpack.c.b16 %v1657, %v1654
    %v1790 = vpack.c.b16 %v1658, %v1655
    %v1791 = vpack.c.b16 %v1662, %v1659
    %v1792 = vpack.c.b16 %v1663, %v1660
    %v1793 = vpack.c.b16 %v1664, %v1661
    %v1794 = vpack.c.b16 %v1668, %v1665
    %v1795 = vpack.c.b16 %v1669, %v1666
    %v1796 = vpack.c.b16 %v1670, %v1667
    %v1797 = vpack.c.b16 %v1674, %v1671
    %v1798 = vpack.c.b16 %v1675, %v1672
    %v1799 = vpack.c.b16 %v1676, %v1673
    %v1800 = vpack.c.b16 %v1680, %v1677
    %v1801 = vpack.c.b16 %v1681, %v1678
    %v1802 = vpack.c.b16 %v1682, %v1679
    %v1803 = vpack.c.b16 %v1686, %v1683
    %v1804 = vpack.c.b16 %v1687, %v1684
    %v1805 = vpack.c.b16 %v1688, %v1685
    %v1806 = vpack.c.b16 %v1692, %v1689
    %v1807 = vpack.c.b16 %v1693, %v1690
    %v1808 = vpack.c.b16 %v1694, %v1691
    %v1809 = vpack.c.b16 %v1698, %v1695
    %v1810 = vpack.c.b16 %v1699, %v1696
    %v1811 = vpack.c.b16 %v1700, %v1697
    %v1812 = vpack.c.b16 %v1704, %v1701
    %v1813 = vpack.c.b16 %v1705, %v1702
    %v1814 = vpack.c.b16 %v1706, %v1703
    %v1815 = vpack.c.b16 %v1710, %v1707
    %v1816 = vpack.c.b16 %v1711, %v1708
    %v1817 = vpack.c.b16 %v1712, %v1709
    %v1818 = vpack.c.b16 %v1716, %v1713
    %v1819 = vpack.c.b16 %v1717, %v1714
    %v1820 = vpack.c.b16 %v1718, %v1715
    %v1821 = vpack.c.b16 %v1722, %v1719
    %v1822 = vpack.c.b16 %v1723, %v1720
    %v1823 = vpack.c.b16 %v1724, %v1721
    %v1824 = vpack.c.b16 %v1728, %v1725
    %v1825 = vpack.c.b16 %v1729, %v1726
    %v1826 = vpack.c.b16 %v1730, %v1727
    %v1827 = vpack.c.b16 %v1734, %v1731
    %v1828 = vpack.c.b16 %v1735, %v1732
    %v1829 = vpack.c.b16 %v1736, %v1733
    %v1830 = vpack.c.b16 %v1740, %v1737
    %v1831 = vpack.c.b16 %v1741, %v1738
    %v1832 = vpack.c.b16 %v1742, %v1739
    %v1833 = vpack.c.b16 %v1746, %v1743
    %v1834 = vpack.c.b16 %v1747, %v1744
    %v1835 = vpack.c.b16 %v1748, %v1745
    %v1836 = vpack.c.b16 %v1752, %v1749
    %v1837 = vpack.c.b16 %v1753, %v1750
    %v1838 = vpack.c.b16 %v1754, %v1751
    %v1839 = vpack.c.b16 %v1758, %v1755
    %v1840 = vpack.c.b16 %v1759, %v1756
    %v1841 = vpack.c.b16 %v1760, %v1757
    %v1842 = vpack.c.b16 %v1764, %v1761
    %v1843 = vpack.c.b16 %v1765, %v1762
    %v1844 = vpack.c.b16 %v1766, %v1763
    %v1845 = vpack.c.b16 %v1770, %v1767
    %v1846 = vpack.c.b16 %v1771, %v1768
    %v1847 = vpack.c.b16 %v1772, %v1769
    %v1848 = vpack.c.b16 %v1776, %v1773
    %v1849 = vpack.c.b16 %v1777, %v1774
    %v1850 = vpack.c.b16 %v1778, %v1775
    %1923 = vmatprep.subr.bf16.mxu0 %v1801
    %1924 = vmatpush1.bf16.msra.mxu0 %v1800
    %1925 = vmatprep.subr.bf16.mxu0 %v1798
    %1926 = vmatpush1.bf16.msra.mxu0 %v1797
    %1927 = vmatprep.subr.bf16.mxu0 %v1795
    %1928 = vmatpush1.bf16.msra.mxu0 %v1794
    %1929 = vmatprep.subr.bf16.mxu0 %v1792
    %1930 = vmatpush1.bf16.msra.mxu0 %v1791
    %1931 = vmatprep.subr.bf16.mxu0 %v1789
    %1932 = vmatpush1.bf16.msra.mxu0 %v1788
    %1933 = vmatprep.subr.bf16.mxu0 %v1786
    %1934 = vmatpush1.bf16.msra.mxu0 %v1785
    %1935 = vmatprep.subr.bf16.mxu0 %v1783
    %1936 = vmatpush1.bf16.msra.mxu0 %v1782
    %1937 = vmatprep.subr.bf16.mxu0 %v1780
    %1938 = vmatpush1.bf16.msra.mxu0 %v1779
    %1939 = vmatprep.subr.bf16.mxu0 %v1825
    %1940 = vmatpush2.bf16.msra.mxu0 %v1824
    %1941 = vmatprep.subr.bf16.mxu0 %v1822
    %1942 = vmatpush2.bf16.msra.mxu0 %v1821
    %1943 = vmatprep.subr.bf16.mxu0 %v1819
    %1944 = vmatpush2.bf16.msra.mxu0 %v1818
    %1945 = vmatprep.subr.bf16.mxu0 %v1816
    %1946 = vmatpush2.bf16.msra.mxu0 %v1815
    %1947 = vmatprep.subr.bf16.mxu0 %v1813
    %1948 = vmatpush2.bf16.msra.mxu0 %v1812
    %1949 = vmatprep.subr.bf16.mxu0 %v1810
    %1950 = vmatpush2.bf16.msra.mxu0 %v1809
    %1951 = vmatprep.subr.bf16.mxu0 %v1807
    %1952 = vmatpush2.bf16.msra.mxu0 %v1806
    %1953 = vmatprep.subr.bf16.mxu0 %v1804
    %1954 = vmatpush2.bf16.msra.mxu0 %v1803
    %1955 = vmatprep.mubr.bf16.mxu0 %v1422
    %1956 = vmatmul.mubr.bf16.gmra.mxu0 %v1421
    %v1957 = vpop.f32.mrf.mxu0
    %v1958 = vadd.f32 %v1527, %v1957
    %v1959 = vpop.f32.mrf.mxu0
    %v1960 = vadd.f32 %v1531, %v1959
    %v1961 = vpop.f32.mrf.mxu0
    %v1962 = vpop.f32.mrf.mxu0
    %1963 = vdwg.mxu0
    %1964 = vmatprep.subr.bf16.mxu0 %v1849
    %1965 = vmatpush1.bf16.msra.mxu0 %v1848
    %1966 = vmatprep.subr.bf16.mxu0 %v1846
    %1967 = vmatpush1.bf16.msra.mxu0 %v1845
    %1968 = vmatprep.subr.bf16.mxu0 %v1843
    %1969 = vmatpush1.bf16.msra.mxu0 %v1842
    %1970 = vmatprep.subr.bf16.mxu0 %v1840
    %1971 = vmatpush1.bf16.msra.mxu0 %v1839
    %1972 = vmatprep.subr.bf16.mxu0 %v1837
    %1973 = vmatpush1.bf16.msra.mxu0 %v1836
    %1974 = vmatprep.subr.bf16.mxu0 %v1834
    %1975 = vmatpush1.bf16.msra.mxu0 %v1833
    %1976 = vmatprep.subr.bf16.mxu0 %v1831
    %1977 = vmatpush1.bf16.msra.mxu0 %v1830
    %1978 = vmatprep.subr.bf16.mxu0 %v1828
    %1979 = vmatpush1.bf16.msra.mxu0 %v1827
    %1980 = vmatprep.subr.bf16.mxu0 0
    %1981 = vmatpush2.bf16.msra.mxu0 0
    %1982 = vmatprep.subr.bf16.mxu0 0
    %1983 = vmatpush2.bf16.msra.mxu0 0
    %1984 = vmatprep.subr.bf16.mxu0 0
    %1985 = vmatpush2.bf16.msra.mxu0 0
    %1986 = vmatprep.subr.bf16.mxu0 0
    %1987 = vmatpush2.bf16.msra.mxu0 0
    %1988 = vmatprep.subr.bf16.mxu0 0
    %1989 = vmatpush2.bf16.msra.mxu0 0
    %1990 = vmatprep.subr.bf16.mxu0 0
    %1991 = vmatpush2.bf16.msra.mxu0 0
    %1992 = vmatprep.subr.bf16.mxu0 0
    %1993 = vmatpush2.bf16.msra.mxu0 0
    %1994 = vmatprep.subr.bf16.mxu0 0
    %1995 = vmatpush2.bf16.msra.mxu0 0
    %1996 = vmatprep.mubr.bf16.mxu0 0
    %1997 = vmatmul.mubr.bf16.gmra.mxu0 %v1423
    %v1998 = vpop.f32.mrf.mxu0
    %v1999 = vadd.f32 %v1958, %v1998
    %v2000 = vpop.f32.mrf.mxu0
    %v2001 = vadd.f32 %v1960, %v2000
    %v2002 = vpop.f32.mrf.mxu0
    %v2003 = vpop.f32.mrf.mxu0
    %2004 = vdwg.mxu0
    %2005 = vmatprep.subr.bf16.mxu0 0
    %2006 = vmatpush1.bf16.msra.mxu0 %v1802
    %2007 = vmatprep.subr.bf16.mxu0 0
    %2008 = vmatpush1.bf16.msra.mxu0 %v1799
    %2009 = vmatprep.subr.bf16.mxu0 0
    %2010 = vmatpush1.bf16.msra.mxu0 %v1796
    %2011 = vmatprep.subr.bf16.mxu0 0
    %2012 = vmatpush1.bf16.msra.mxu0 %v1793
    %2013 = vmatprep.subr.bf16.mxu0 0
    %2014 = vmatpush1.bf16.msra.mxu0 %v1790
    %2015 = vmatprep.subr.bf16.mxu0 0
    %2016 = vmatpush1.bf16.msra.mxu0 %v1787
    %2017 = vmatprep.subr.bf16.mxu0 0
    %2018 = vmatpush1.bf16.msra.mxu0 %v1784
    %2019 = vmatprep.subr.bf16.mxu0 0
    %2020 = vmatpush1.bf16.msra.mxu0 %v1781
    %2021 = vmatprep.subr.bf16.mxu0 0
    %2022 = vmatpush2.bf16.msra.mxu0 %v1826
    %2023 = vmatprep.subr.bf16.mxu0 0
    %2024 = vmatpush2.bf16.msra.mxu0 %v1823
    %2025 = vmatprep.subr.bf16.mxu0 0
    %2026 = vmatpush2.bf16.msra.mxu0 %v1820
    %2027 = vmatprep.subr.bf16.mxu0 0
    %2028 = vmatpush2.bf16.msra.mxu0 %v1817
    %2029 = vmatprep.subr.bf16.mxu0 0
    %2030 = vmatpush2.bf16.msra.mxu0 %v1814
    %2031 = vmatprep.subr.bf16.mxu0 0
    %2032 = vmatpush2.bf16.msra.mxu0 %v1811
    %2033 = vmatprep.subr.bf16.mxu0 0
    %2034 = vmatpush2.bf16.msra.mxu0 %v1808
    %2035 = vmatprep.subr.bf16.mxu0 0
    %2036 = vmatpush2.bf16.msra.mxu0 %v1805
    %2037 = vmatprep.mubr.bf16.mxu0 %v1422
    %2038 = vmatmul.mubr.bf16.gmra.mxu0 %v1421
    %v2039 = vpop.f32.mrf.mxu0
    %v2040 = vadd.f32 %v1535, %v2039
    %v2041 = vpop.f32.mrf.mxu0
    %v2042 = vpop.f32.mrf.mxu0
    %v2043 = vpop.f32.mrf.mxu0
    %2044 = vdwg.mxu0
    %2045 = vmatprep.subr.bf16.mxu0 0
    %2046 = vmatpush1.bf16.msra.mxu0 %v1850
    %2047 = vmatprep.subr.bf16.mxu0 0
    %2048 = vmatpush1.bf16.msra.mxu0 %v1847
    %2049 = vmatprep.subr.bf16.mxu0 0
    %2050 = vmatpush1.bf16.msra.mxu0 %v1844
    %2051 = vmatprep.subr.bf16.mxu0 0
    %2052 = vmatpush1.bf16.msra.mxu0 %v1841
    %2053 = vmatprep.subr.bf16.mxu0 0
    %2054 = vmatpush1.bf16.msra.mxu0 %v1838
    %2055 = vmatprep.subr.bf16.mxu0 0
    %2056 = vmatpush1.bf16.msra.mxu0 %v1835
    %2057 = vmatprep.subr.bf16.mxu0 0
    %2058 = vmatpush1.bf16.msra.mxu0 %v1832
    %2059 = vmatprep.subr.bf16.mxu0 0
    %2060 = vmatpush1.bf16.msra.mxu0 %v1829
    %2061 = vmatprep.subr.bf16.mxu0 0
    %2062 = vmatpush2.bf16.msra.mxu0 0
    %2063 = vmatprep.subr.bf16.mxu0 0
    %2064 = vmatpush2.bf16.msra.mxu0 0
    %2065 = vmatprep.subr.bf16.mxu0 0
    %2066 = vmatpush2.bf16.msra.mxu0 0
    %2067 = vmatprep.subr.bf16.mxu0 0
    %2068 = vmatpush2.bf16.msra.mxu0 0
    %2069 = vmatprep.subr.bf16.mxu0 0
    %2070 = vmatpush2.bf16.msra.mxu0 0
    %2071 = vmatprep.subr.bf16.mxu0 0
    %2072 = vmatpush2.bf16.msra.mxu0 0
    %2073 = vmatprep.subr.bf16.mxu0 0
    %2074 = vmatpush2.bf16.msra.mxu0 0
    %2075 = vmatprep.subr.bf16.mxu0 0
    %2076 = vmatpush2.bf16.msra.mxu0 0
    %2077 = vmatprep.mubr.bf16.mxu0 0
    %2078 = vmatmul.mubr.bf16.gmra.mxu0 %v1423
    %v2079 = vpop.f32.mrf.mxu0
    %v2080 = vadd.f32 %v2040, %v2079
    %v2081 = vpop.f32.mrf.mxu0
    %v2082 = vpop.f32.mrf.mxu0
    %v2083 = vpop.f32.mrf.mxu0
    %2084 = vdwg.mxu0
    %v2085 = vsub.f32 0.0, %v1999
    %v2086 = vsub.f32 0.0, %v2001
    %v2087 = vsub.f32 0.0, %v2080
    %v2088 = vmul.f32 %v2085, 1.442695
    %v2089 = vpow.pop %v2088
    %v2090 = vmul.f32 %v2086, 1.442695
    %v2091 = vpow.pop %v2090
    %v2092 = vmul.f32 %v2087, 1.442695
    %v2093 = vpow.pop %v2092
    %v2094 = vadd.f32 %v2089, 1.0
    %v2095 = vadd.f32 %v2091, 1.0
    %v2096 = vadd.f32 %v2093, 1.0
    %v2097 = vrcp.pop %v2094
    %v2098 = vrcp.pop %v2095
    %v2099 = vrcp.pop %v2096
    %v2100 = vpack.c.bf16 %v2097, %v2097
    %v2101 = vpack.c.bf16 %v2098, %v2098
    %v2102 = vpack.c.bf16 %v2099, %v2099
    %s2103 = scalar_lea.vmem [#allocation5], 1728
    %v2104 = vld [vmem:[%s2103] sm:$0xff]
    %v2105 = vld [vmem:[%s2103 + $0x8] sm:$0xf]
    %v2106 = vld [vmem:[%s2103 + $0xc] sm:$0xff]
    %v2107 = vld [vmem:[%s2103 + $0x14] sm:$0xf]
    %v2108 = vld [vmem:[%s2103 + $0x18] sm:$0xff]
    %v2109 = vld [vmem:[%s2103 + $0x20] sm:$0xf]
    %v2110 = vld [vmem:[%s2103 + $0x24] sm:$0xff]
    %v2111 = vld [vmem:[%s2103 + $0x2c] sm:$0xf]
    %v2112 = vld [vmem:[%s2103 + $0x30] sm:$0xff]
    %v2113 = vld [vmem:[%s2103 + $0x38] sm:$0xf]
    %v2114 = vld [vmem:[%s2103 + $0x3c] sm:$0xff]
    %v2115 = vld [vmem:[%s2103 + $0x44] sm:$0xf]
    %v2116 = vld [vmem:[%s2103 + $0x48] sm:$0xff]
    %v2117 = vld [vmem:[%s2103 + $0x50] sm:$0xf]
    %v2118 = vld [vmem:[%s2103 + $0x54] sm:$0xff]
    %v2119 = vld [vmem:[%s2103 + $0x5c] sm:$0xf]
    %v2120 = vld [vmem:[%s2103 + $0x60] sm:$0xff]
    %v2121 = vld [vmem:[%s2103 + $0x68] sm:$0xf]
    %v2122 = vld [vmem:[%s2103 + $0x6c] sm:$0xff]
    %v2123 = vld [vmem:[%s2103 + $0x74] sm:$0xf]
    %v2124 = vld [vmem:[%s2103 + $0x78] sm:$0xff]
    %v2125 = vld [vmem:[%s2103 + $0x80] sm:$0xf]
    %v2126 = vld [vmem:[%s2103 + $0x84] sm:$0xff]
    %v2127 = vld [vmem:[%s2103 + $0x8c] sm:$0xf]
    %v2128 = vld [vmem:[%s2103 + $0x90] sm:$0xff]
    %v2129 = vld [vmem:[%s2103 + $0x98] sm:$0xf]
    %v2130 = vld [vmem:[%s2103 + $0x9c] sm:$0xff]
    %v2131 = vld [vmem:[%s2103 + $0xa4] sm:$0xf]
    %v2132 = vld [vmem:[%s2103 + $0xa8] sm:$0xff]
    %v2133 = vld [vmem:[%s2103 + $0xb0] sm:$0xf]
    %v2134 = vld [vmem:[%s2103 + $0xb4] sm:$0xff]
    %v2135 = vld [vmem:[%s2103 + $0xbc] sm:$0xf]
    %v2136 = vld [vmem:[%s2103 + $0xc0] sm:$0xff]
    %v2137 = vld [vmem:[%s2103 + $0xc8] sm:$0xf]
    %v2138 = vld [vmem:[%s2103 + $0xcc] sm:$0xff]
    %v2139 = vld [vmem:[%s2103 + $0xd4] sm:$0xf]
    %v2140 = vld [vmem:[%s2103 + $0xd8] sm:$0xff]
    %v2141 = vld [vmem:[%s2103 + $0xe0] sm:$0xf]
    %v2142 = vld [vmem:[%s2103 + $0xe4] sm:$0xff]
    %v2143 = vld [vmem:[%s2103 + $0xec] sm:$0xf]
    %v2144 = vld [vmem:[%s2103 + $0xf0] sm:$0xff]
    %v2145 = vld [vmem:[%s2103 + $0xf8] sm:$0xf]
    %v2146 = vld [vmem:[%s2103 + $0xfc] sm:$0xff]
    %v2147 = vld [vmem:[%s2103 + $0x104] sm:$0xf]
    %v2148 = vld [vmem:[%s2103 + $0x108] sm:$0xff]
    %v2149 = vld [vmem:[%s2103 + $0x110] sm:$0xf]
    %v2150 = vld [vmem:[%s2103 + $0x114] sm:$0xff]
    %v2151 = vld [vmem:[%s2103 + $0x11c] sm:$0xf]
    %v2152 = vld [vmem:[%s2103 + $0x120] sm:$0xff]
    %v2153 = vld [vmem:[%s2103 + $0x128] sm:$0xf]
    %v2154 = vld [vmem:[%s2103 + $0x12c] sm:$0xff]
    %v2155 = vld [vmem:[%s2103 + $0x134] sm:$0xf]
    %v2156 = vld [vmem:[%s2103 + $0x138] sm:$0xff]
    %v2157 = vld [vmem:[%s2103 + $0x140] sm:$0xf]
    %v2158 = vld [vmem:[%s2103 + $0x144] sm:$0xff]
    %v2159 = vld [vmem:[%s2103 + $0x14c] sm:$0xf]
    %v2160 = vld [vmem:[%s2103 + $0x150] sm:$0xff]
    %v2161 = vld [vmem:[%s2103 + $0x158] sm:$0xf]
    %v2162 = vld [vmem:[%s2103 + $0x15c] sm:$0xff]
    %v2163 = vld [vmem:[%s2103 + $0x164] sm:$0xf]
    %v2164 = vld [vmem:[%s2103 + $0x168] sm:$0xff]
    %v2165 = vld [vmem:[%s2103 + $0x170] sm:$0xf]
    %v2166 = vld [vmem:[%s2103 + $0x174] sm:$0xff]
    %v2167 = vld [vmem:[%s2103 + $0x17c] sm:$0xf]
    %v2168 = vld [vmem:[%s2103 + $0x180] sm:$0xff]
    %v2169 = vld [vmem:[%s2103 + $0x188] sm:$0xf]
    %v2170 = vld [vmem:[%s2103 + $0x18c] sm:$0xff]
    %v2171 = vld [vmem:[%s2103 + $0x194] sm:$0xf]
    %v2172 = vld [vmem:[%s2103 + $0x198] sm:$0xff]
    %v2173 = vld [vmem:[%s2103 + $0x1a0] sm:$0xf]
    %v2174 = vld [vmem:[%s2103 + $0x1a4] sm:$0xff]
    %v2175 = vld [vmem:[%s2103 + $0x1ac] sm:$0xf]
    %v2176 = vld [vmem:[%s2103 + $0x1b0] sm:$0xff]
    %v2177 = vld [vmem:[%s2103 + $0x1b8] sm:$0xf]
    %v2178 = vld [vmem:[%s2103 + $0x1bc] sm:$0xff]
    %v2179 = vld [vmem:[%s2103 + $0x1c4] sm:$0xf]
    %v2180 = vld [vmem:[%s2103 + $0x1c8] sm:$0xff]
    %v2181 = vld [vmem:[%s2103 + $0x1d0] sm:$0xf]
    %v2182 = vld [vmem:[%s2103 + $0x1d4] sm:$0xff]
    %v2183 = vld [vmem:[%s2103 + $0x1dc] sm:$0xf]
    %v2184 = vld [vmem:[%s2103 + $0x1e0] sm:$0xff]
    %v2185 = vld [vmem:[%s2103 + $0x1e8] sm:$0xf]
    %v2186 = vld [vmem:[%s2103 + $0x1ec] sm:$0xff]
    %v2187 = vld [vmem:[%s2103 + $0x1f4] sm:$0xf]
    %v2188 = vld [vmem:[%s2103 + $0x1f8] sm:$0xff]
    %v2189 = vld [vmem:[%s2103 + $0x200] sm:$0xf]
    %v2190 = vld [vmem:[%s2103 + $0x204] sm:$0xff]
    %v2191 = vld [vmem:[%s2103 + $0x20c] sm:$0xf]
    %v2192 = vld [vmem:[%s2103 + $0x210] sm:$0xff]
    %v2193 = vld [vmem:[%s2103 + $0x218] sm:$0xf]
    %v2194 = vld [vmem:[%s2103 + $0x21c] sm:$0xff]
    %v2195 = vld [vmem:[%s2103 + $0x224] sm:$0xf]
    %v2196 = vld [vmem:[%s2103 + $0x228] sm:$0xff]
    %v2197 = vld [vmem:[%s2103 + $0x230] sm:$0xf]
    %v2198 = vld [vmem:[%s2103 + $0x234] sm:$0xff]
    %v2199 = vld [vmem:[%s2103 + $0x23c] sm:$0xf]
    %s2200 = scalar_lea.vmem [#allocation7], 9
    %v2201 = vld [vmem:[%s2200] sm:$0x7]
    %v2203 = vlaneseq
    %v2204 = vshrl.u32 %v2203, 7
    %v2205 = vsub.s32 0, %v2204
    %v2206 = vrot.slane %v2201, %v2205
    %v2207 = vlaneseq
    %v2208 = vshrl.u32 %v2207, 7
    %v2209 = vsub.s32 1, %v2208
    %v2210 = vrot.slane %v2201, %v2209
    %v2211 = vlaneseq
    %v2212 = vshrl.u32 %v2211, 7
    %v2213 = vsub.s32 2, %v2212
    %v2214 = vrot.slane %v2201, %v2213
    %v2314 = vunpack.c.l.b16 %v2104
    %v2315 = vunpack.c.h.b16 %v2104
    %v2316 = vunpack.c.l.b16 %v2105
    %v2317 = vunpack.c.l.b16 %v2106
    %v2318 = vunpack.c.h.b16 %v2106
    %v2319 = vunpack.c.l.b16 %v2107
    %v2320 = vunpack.c.l.b16 %v2108
    %v2321 = vunpack.c.h.b16 %v2108
    %v2322 = vunpack.c.l.b16 %v2109
    %v2323 = vunpack.c.l.b16 %v2110
    %v2324 = vunpack.c.h.b16 %v2110
    %v2325 = vunpack.c.l.b16 %v2111
    %v2326 = vunpack.c.l.b16 %v2112
    %v2327 = vunpack.c.h.b16 %v2112
    %v2328 = vunpack.c.l.b16 %v2113
    %v2329 = vunpack.c.l.b16 %v2114
    %v2330 = vunpack.c.h.b16 %v2114
    %v2331 = vunpack.c.l.b16 %v2115
    %v2332 = vunpack.c.l.b16 %v2116
    %v2333 = vunpack.c.h.b16 %v2116
    %v2334 = vunpack.c.l.b16 %v2117
    %v2335 = vunpack.c.l.b16 %v2118
    %v2336 = vunpack.c.h.b16 %v2118
    %v2337 = vunpack.c.l.b16 %v2119
    %v2338 = vunpack.c.l.b16 %v2120
    %v2339 = vunpack.c.h.b16 %v2120
    %v2340 = vunpack.c.l.b16 %v2121
    %v2341 = vunpack.c.l.b16 %v2122
    %v2342 = vunpack.c.h.b16 %v2122
    %v2343 = vunpack.c.l.b16 %v2123
    %v2344 = vunpack.c.l.b16 %v2124
    %v2345 = vunpack.c.h.b16 %v2124
    %v2346 = vunpack.c.l.b16 %v2125
    %v2347 = vunpack.c.l.b16 %v2126
    %v2348 = vunpack.c.h.b16 %v2126
    %v2349 = vunpack.c.l.b16 %v2127
    %v2350 = vunpack.c.l.b16 %v2128
    %v2351 = vunpack.c.h.b16 %v2128
    %v2352 = vunpack.c.l.b16 %v2129
    %v2353 = vunpack.c.l.b16 %v2130
    %v2354 = vunpack.c.h.b16 %v2130
    %v2355 = vunpack.c.l.b16 %v2131
    %v2356 = vunpack.c.l.b16 %v2132
    %v2357 = vunpack.c.h.b16 %v2132
    %v2358 = vunpack.c.l.b16 %v2133
    %v2359 = vunpack.c.l.b16 %v2134
    %v2360 = vunpack.c.h.b16 %v2134
    %v2361 = vunpack.c.l.b16 %v2135
    %v2362 = vunpack.c.l.b16 %v2136
    %v2363 = vunpack.c.h.b16 %v2136
    %v2364 = vunpack.c.l.b16 %v2137
    %v2365 = vunpack.c.l.b16 %v2138
    %v2366 = vunpack.c.h.b16 %v2138
    %v2367 = vunpack.c.l.b16 %v2139
    %v2368 = vunpack.c.l.b16 %v2140
    %v2369 = vunpack.c.h.b16 %v2140
    %v2370 = vunpack.c.l.b16 %v2141
    %v2371 = vunpack.c.l.b16 %v2142
    %v2372 = vunpack.c.h.b16 %v2142
    %v2373 = vunpack.c.l.b16 %v2143
    %v2374 = vunpack.c.l.b16 %v2144
    %v2375 = vunpack.c.h.b16 %v2144
    %v2376 = vunpack.c.l.b16 %v2145
    %v2377 = vunpack.c.l.b16 %v2146
    %v2378 = vunpack.c.h.b16 %v2146
    %v2379 = vunpack.c.l.b16 %v2147
    %v2380 = vunpack.c.l.b16 %v2148
    %v2381 = vunpack.c.h.b16 %v2148
    %v2382 = vunpack.c.l.b16 %v2149
    %v2383 = vunpack.c.l.b16 %v2150
    %v2384 = vunpack.c.h.b16 %v2150
    %v2385 = vunpack.c.l.b16 %v2151
    %v2386 = vunpack.c.l.b16 %v2152
    %v2387 = vunpack.c.h.b16 %v2152
    %v2388 = vunpack.c.l.b16 %v2153
    %v2389 = vunpack.c.l.b16 %v2154
    %v2390 = vunpack.c.h.b16 %v2154
    %v2391 = vunpack.c.l.b16 %v2155
    %v2392 = vunpack.c.l.b16 %v2156
    %v2393 = vunpack.c.h.b16 %v2156
    %v2394 = vunpack.c.l.b16 %v2157
    %v2395 = vunpack.c.l.b16 %v2158
    %v2396 = vunpack.c.h.b16 %v2158
    %v2397 = vunpack.c.l.b16 %v2159
    %v2398 = vunpack.c.l.b16 %v2160
    %v2399 = vunpack.c.h.b16 %v2160
    %v2400 = vunpack.c.l.b16 %v2161
    %v2401 = vunpack.c.l.b16 %v2162
    %v2402 = vunpack.c.h.b16 %v2162
    %v2403 = vunpack.c.l.b16 %v2163
    %v2404 = vunpack.c.l.b16 %v2164
    %v2405 = vunpack.c.h.b16 %v2164
    %v2406 = vunpack.c.l.b16 %v2165
    %v2407 = vunpack.c.l.b16 %v2166
    %v2408 = vunpack.c.h.b16 %v2166
    %v2409 = vunpack.c.l.b16 %v2167
    %v2410 = vunpack.c.l.b16 %v2168
    %v2411 = vunpack.c.h.b16 %v2168
    %v2412 = vunpack.c.l.b16 %v2169
    %v2413 = vunpack.c.l.b16 %v2170
    %v2414 = vunpack.c.h.b16 %v2170
    %v2415 = vunpack.c.l.b16 %v2171
    %v2416 = vunpack.c.l.b16 %v2172
    %v2417 = vunpack.c.h.b16 %v2172
    %v2418 = vunpack.c.l.b16 %v2173
    %v2419 = vunpack.c.l.b16 %v2174
    %v2420 = vunpack.c.h.b16 %v2174
    %v2421 = vunpack.c.l.b16 %v2175
    %v2422 = vunpack.c.l.b16 %v2176
    %v2423 = vunpack.c.h.b16 %v2176
    %v2424 = vunpack.c.l.b16 %v2177
    %v2425 = vunpack.c.l.b16 %v2178
    %v2426 = vunpack.c.h.b16 %v2178
    %v2427 = vunpack.c.l.b16 %v2179
    %v2428 = vunpack.c.l.b16 %v2180
    %v2429 = vunpack.c.h.b16 %v2180
    %v2430 = vunpack.c.l.b16 %v2181
    %v2431 = vunpack.c.l.b16 %v2182
    %v2432 = vunpack.c.h.b16 %v2182
    %v2433 = vunpack.c.l.b16 %v2183
    %v2434 = vunpack.c.l.b16 %v2184
    %v2435 = vunpack.c.h.b16 %v2184
    %v2436 = vunpack.c.l.b16 %v2185
    %v2437 = vunpack.c.l.b16 %v2186
    %v2438 = vunpack.c.h.b16 %v2186
    %v2439 = vunpack.c.l.b16 %v2187
    %v2440 = vunpack.c.l.b16 %v2188
    %v2441 = vunpack.c.h.b16 %v2188
    %v2442 = vunpack.c.l.b16 %v2189
    %v2443 = vunpack.c.l.b16 %v2190
    %v2444 = vunpack.c.h.b16 %v2190
    %v2445 = vunpack.c.l.b16 %v2191
    %v2446 = vunpack.c.l.b16 %v2192
    %v2447 = vunpack.c.h.b16 %v2192
    %v2448 = vunpack.c.l.b16 %v2193
    %v2449 = vunpack.c.l.b16 %v2194
    %v2450 = vunpack.c.h.b16 %v2194
    %v2451 = vunpack.c.l.b16 %v2195
    %v2452 = vunpack.c.l.b16 %v2196
    %v2453 = vunpack.c.h.b16 %v2196
    %v2454 = vunpack.c.l.b16 %v2197
    %v2455 = vunpack.c.l.b16 %v2198
    %v2456 = vunpack.c.h.b16 %v2198
    %v2457 = vunpack.c.l.b16 %v2199
    %v2458 = vpack.c.b16 %v2317, %v2314
    %v2459 = vpack.c.b16 %v2318, %v2315
    %v2460 = vpack.c.b16 %v2319, %v2316
    %v2461 = vpack.c.b16 %v2323, %v2320
    %v2462 = vpack.c.b16 %v2324, %v2321
    %v2463 = vpack.c.b16 %v2325, %v2322
    %v2464 = vpack.c.b16 %v2329, %v2326
    %v2465 = vpack.c.b16 %v2330, %v2327
    %v2466 = vpack.c.b16 %v2331, %v2328
    %v2467 = vpack.c.b16 %v2335, %v2332
    %v2468 = vpack.c.b16 %v2336, %v2333
    %v2469 = vpack.c.b16 %v2337, %v2334
    %v2470 = vpack.c.b16 %v2341, %v2338
    %v2471 = vpack.c.b16 %v2342, %v2339
    %v2472 = vpack.c.b16 %v2343, %v2340
    %v2473 = vpack.c.b16 %v2347, %v2344
    %v2474 = vpack.c.b16 %v2348, %v2345
    %v2475 = vpack.c.b16 %v2349, %v2346
    %v2476 = vpack.c.b16 %v2353, %v2350
    %v2477 = vpack.c.b16 %v2354, %v2351
    %v2478 = vpack.c.b16 %v2355, %v2352
    %v2479 = vpack.c.b16 %v2359, %v2356
    %v2480 = vpack.c.b16 %v2360, %v2357
    %v2481 = vpack.c.b16 %v2361, %v2358
    %v2482 = vpack.c.b16 %v2365, %v2362
    %v2483 = vpack.c.b16 %v2366, %v2363
    %v2484 = vpack.c.b16 %v2367, %v2364
    %v2485 = vpack.c.b16 %v2371, %v2368
    %v2486 = vpack.c.b16 %v2372, %v2369
    %v2487 = vpack.c.b16 %v2373, %v2370
    %v2488 = vpack.c.b16 %v2377, %v2374
    %v2489 = vpack.c.b16 %v2378, %v2375
    %v2490 = vpack.c.b16 %v2379, %v2376
    %v2491 = vpack.c.b16 %v2383, %v2380
    %v2492 = vpack.c.b16 %v2384, %v2381
    %v2493 = vpack.c.b16 %v2385, %v2382
    %v2494 = vpack.c.b16 %v2389, %v2386
    %v2495 = vpack.c.b16 %v2390, %v2387
    %v2496 = vpack.c.b16 %v2391, %v2388
    %v2497 = vpack.c.b16 %v2395, %v2392
    %v2498 = vpack.c.b16 %v2396, %v2393
    %v2499 = vpack.c.b16 %v2397, %v2394
    %v2500 = vpack.c.b16 %v2401, %v2398
    %v2501 = vpack.c.b16 %v2402, %v2399
    %v2502 = vpack.c.b16 %v2403, %v2400
    %v2503 = vpack.c.b16 %v2407, %v2404
    %v2504 = vpack.c.b16 %v2408, %v2405
    %v2505 = vpack.c.b16 %v2409, %v2406
    %v2506 = vpack.c.b16 %v2413, %v2410
    %v2507 = vpack.c.b16 %v2414, %v2411
    %v2508 = vpack.c.b16 %v2415, %v2412
    %v2509 = vpack.c.b16 %v2419, %v2416
    %v2510 = vpack.c.b16 %v2420, %v2417
    %v2511 = vpack.c.b16 %v2421, %v2418
    %v2512 = vpack.c.b16 %v2425, %v2422
    %v2513 = vpack.c.b16 %v2426, %v2423
    %v2514 = vpack.c.b16 %v2427, %v2424
    %v2515 = vpack.c.b16 %v2431, %v2428
    %v2516 = vpack.c.b16 %v2432, %v2429
    %v2517 = vpack.c.b16 %v2433, %v2430
    %v2518 = vpack.c.b16 %v2437, %v2434
    %v2519 = vpack.c.b16 %v2438, %v2435
    %v2520 = vpack.c.b16 %v2439, %v2436
    %v2521 = vpack.c.b16 %v2443, %v2440
    %v2522 = vpack.c.b16 %v2444, %v2441
    %v2523 = vpack.c.b16 %v2445, %v2442
    %v2524 = vpack.c.b16 %v2449, %v2446
    %v2525 = vpack.c.b16 %v2450, %v2447
    %v2526 = vpack.c.b16 %v2451, %v2448
    %v2527 = vpack.c.b16 %v2455, %v2452
    %v2528 = vpack.c.b16 %v2456, %v2453
    %v2529 = vpack.c.b16 %v2457, %v2454
    %2602 = vmatprep.subr.bf16.mxu0 %v2480
    %2603 = vmatpush1.bf16.msra.mxu0 %v2479
    %2604 = vmatprep.subr.bf16.mxu0 %v2477
    %2605 = vmatpush1.bf16.msra.mxu0 %v2476
    %2606 = vmatprep.subr.bf16.mxu0 %v2474
    %2607 = vmatpush1.bf16.msra.mxu0 %v2473
    %2608 = vmatprep.subr.bf16.mxu0 %v2471
    %2609 = vmatpush1.bf16.msra.mxu0 %v2470
    %2610 = vmatprep.subr.bf16.mxu0 %v2468
    %2611 = vmatpush1.bf16.msra.mxu0 %v2467
    %2612 = vmatprep.subr.bf16.mxu0 %v2465
    %2613 = vmatpush1.bf16.msra.mxu0 %v2464
    %2614 = vmatprep.subr.bf16.mxu0 %v2462
    %2615 = vmatpush1.bf16.msra.mxu0 %v2461
    %2616 = vmatprep.subr.bf16.mxu0 %v2459
    %2617 = vmatpush1.bf16.msra.mxu0 %v2458
    %2618 = vmatprep.subr.bf16.mxu0 %v2504
    %2619 = vmatpush2.bf16.msra.mxu0 %v2503
    %2620 = vmatprep.subr.bf16.mxu0 %v2501
    %2621 = vmatpush2.bf16.msra.mxu0 %v2500
    %2622 = vmatprep.subr.bf16.mxu0 %v2498
    %2623 = vmatpush2.bf16.msra.mxu0 %v2497
    %2624 = vmatprep.subr.bf16.mxu0 %v2495
    %2625 = vmatpush2.bf16.msra.mxu0 %v2494
    %2626 = vmatprep.subr.bf16.mxu0 %v2492
    %2627 = vmatpush2.bf16.msra.mxu0 %v2491
    %2628 = vmatprep.subr.bf16.mxu0 %v2489
    %2629 = vmatpush2.bf16.msra.mxu0 %v2488
    %2630 = vmatprep.subr.bf16.mxu0 %v2486
    %2631 = vmatpush2.bf16.msra.mxu0 %v2485
    %2632 = vmatprep.subr.bf16.mxu0 %v2483
    %2633 = vmatpush2.bf16.msra.mxu0 %v2482
    %2634 = vmatprep.mubr.bf16.mxu0 %v2101
    %2635 = vmatmul.mubr.bf16.gmra.mxu0 %v2100
    %v2636 = vpop.f32.mrf.mxu0
    %v2637 = vadd.f32 %v2206, %v2636
    %v2638 = vpop.f32.mrf.mxu0
    %v2639 = vadd.f32 %v2210, %v2638
    %v2640 = vpop.f32.mrf.mxu0
    %v2641 = vpop.f32.mrf.mxu0
    %2642 = vdwg.mxu0
    %2643 = vmatprep.subr.bf16.mxu0 %v2528
    %2644 = vmatpush1.bf16.msra.mxu0 %v2527
    %2645 = vmatprep.subr.bf16.mxu0 %v2525
    %2646 = vmatpush1.bf16.msra.mxu0 %v2524
    %2647 = vmatprep.subr.bf16.mxu0 %v2522
    %2648 = vmatpush1.bf16.msra.mxu0 %v2521
    %2649 = vmatprep.subr.bf16.mxu0 %v2519
    %2650 = vmatpush1.bf16.msra.mxu0 %v2518
    %2651 = vmatprep.subr.bf16.mxu0 %v2516
    %2652 = vmatpush1.bf16.msra.mxu0 %v2515
    %2653 = vmatprep.subr.bf16.mxu0 %v2513
    %2654 = vmatpush1.bf16.msra.mxu0 %v2512
    %2655 = vmatprep.subr.bf16.mxu0 %v2510
    %2656 = vmatpush1.bf16.msra.mxu0 %v2509
    %2657 = vmatprep.subr.bf16.mxu0 %v2507
    %2658 = vmatpush1.bf16.msra.mxu0 %v2506
    %2659 = vmatprep.subr.bf16.mxu0 0
    %2660 = vmatpush2.bf16.msra.mxu0 0
    %2661 = vmatprep.subr.bf16.mxu0 0
    %2662 = vmatpush2.bf16.msra.mxu0 0
    %2663 = vmatprep.subr.bf16.mxu0 0
    %2664 = vmatpush2.bf16.msra.mxu0 0
    %2665 = vmatprep.subr.bf16.mxu0 0
    %2666 = vmatpush2.bf16.msra.mxu0 0
    %2667 = vmatprep.subr.bf16.mxu0 0
    %2668 = vmatpush2.bf16.msra.mxu0 0
    %2669 = vmatprep.subr.bf16.mxu0 0
    %2670 = vmatpush2.bf16.msra.mxu0 0
    %2671 = vmatprep.subr.bf16.mxu0 0
    %2672 = vmatpush2.bf16.msra.mxu0 0
    %2673 = vmatprep.subr.bf16.mxu0 0
    %2674 = vmatpush2.bf16.msra.mxu0 0
    %2675 = vmatprep.mubr.bf16.mxu0 0
    %2676 = vmatmul.mubr.bf16.gmra.mxu0 %v2102
    %v2677 = vpop.f32.mrf.mxu0
    %v2678 = vadd.f32 %v2637, %v2677
    %v2679 = vpop.f32.mrf.mxu0
    %v2680 = vadd.f32 %v2639, %v2679
    %v2681 = vpop.f32.mrf.mxu0
    %v2682 = vpop.f32.mrf.mxu0
    %2683 = vdwg.mxu0
    %2684 = vmatprep.subr.bf16.mxu0 0
    %2685 = vmatpush1.bf16.msra.mxu0 %v2481
    %2686 = vmatprep.subr.bf16.mxu0 0
    %2687 = vmatpush1.bf16.msra.mxu0 %v2478
    %2688 = vmatprep.subr.bf16.mxu0 0
    %2689 = vmatpush1.bf16.msra.mxu0 %v2475
    %2690 = vmatprep.subr.bf16.mxu0 0
    %2691 = vmatpush1.bf16.msra.mxu0 %v2472
    %2692 = vmatprep.subr.bf16.mxu0 0
    %2693 = vmatpush1.bf16.msra.mxu0 %v2469
    %2694 = vmatprep.subr.bf16.mxu0 0
    %2695 = vmatpush1.bf16.msra.mxu0 %v2466
    %2696 = vmatprep.subr.bf16.mxu0 0
    %2697 = vmatpush1.bf16.msra.mxu0 %v2463
    %2698 = vmatprep.subr.bf16.mxu0 0
    %2699 = vmatpush1.bf16.msra.mxu0 %v2460
    %2700 = vmatprep.subr.bf16.mxu0 0
    %2701 = vmatpush2.bf16.msra.mxu0 %v2505
    %2702 = vmatprep.subr.bf16.mxu0 0
    %2703 = vmatpush2.bf16.msra.mxu0 %v2502
    %2704 = vmatprep.subr.bf16.mxu0 0
    %2705 = vmatpush2.bf16.msra.mxu0 %v2499
    %2706 = vmatprep.subr.bf16.mxu0 0
    %2707 = vmatpush2.bf16.msra.mxu0 %v2496
    %2708 = vmatprep.subr.bf16.mxu0 0
    %2709 = vmatpush2.bf16.msra.mxu0 %v2493
    %2710 = vmatprep.subr.bf16.mxu0 0
    %2711 = vmatpush2.bf16.msra.mxu0 %v2490
    %2712 = vmatprep.subr.bf16.mxu0 0
    %2713 = vmatpush2.bf16.msra.mxu0 %v2487
    %2714 = vmatprep.subr.bf16.mxu0 0
    %2715 = vmatpush2.bf16.msra.mxu0 %v2484
    %2716 = vmatprep.mubr.bf16.mxu0 %v2101
    %2717 = vmatmul.mubr.bf16.gmra.mxu0 %v2100
    %v2718 = vpop.f32.mrf.mxu0
    %v2719 = vadd.f32 %v2214, %v2718
    %v2720 = vpop.f32.mrf.mxu0
    %v2721 = vpop.f32.mrf.mxu0
    %v2722 = vpop.f32.mrf.mxu0
    %2723 = vdwg.mxu0
    %2724 = vmatprep.subr.bf16.mxu0 0
    %2725 = vmatpush1.bf16.msra.mxu0 %v2529
    %2726 = vmatprep.subr.bf16.mxu0 0
    %2727 = vmatpush1.bf16.msra.mxu0 %v2526
    %2728 = vmatprep.subr.bf16.mxu0 0
    %2729 = vmatpush1.bf16.msra.mxu0 %v2523
    %2730 = vmatprep.subr.bf16.mxu0 0
    %2731 = vmatpush1.bf16.msra.mxu0 %v2520
    %2732 = vmatprep.subr.bf16.mxu0 0
    %2733 = vmatpush1.bf16.msra.mxu0 %v2517
    %2734 = vmatprep.subr.bf16.mxu0 0
    %2735 = vmatpush1.bf16.msra.mxu0 %v2514
    %2736 = vmatprep.subr.bf16.mxu0 0
    %2737 = vmatpush1.bf16.msra.mxu0 %v2511
    %2738 = vmatprep.subr.bf16.mxu0 0
    %2739 = vmatpush1.bf16.msra.mxu0 %v2508
    %2740 = vmatprep.subr.bf16.mxu0 0
    %2741 = vmatpush2.bf16.msra.mxu0 0
    %2742 = vmatprep.subr.bf16.mxu0 0
    %2743 = vmatpush2.bf16.msra.mxu0 0
    %2744 = vmatprep.subr.bf16.mxu0 0
    %2745 = vmatpush2.bf16.msra.mxu0 0
    %2746 = vmatprep.subr.bf16.mxu0 0
    %2747 = vmatpush2.bf16.msra.mxu0 0
    %2748 = vmatprep.subr.bf16.mxu0 0
    %2749 = vmatpush2.bf16.msra.mxu0 0
    %2750 = vmatprep.subr.bf16.mxu0 0
    %2751 = vmatpush2.bf16.msra.mxu0 0
    %2752 = vmatprep.subr.bf16.mxu0 0
    %2753 = vmatpush2.bf16.msra.mxu0 0
    %2754 = vmatprep.subr.bf16.mxu0 0
    %2755 = vmatpush2.bf16.msra.mxu0 0
    %2756 = vmatprep.mubr.bf16.mxu0 0
    %2757 = vmatmul.mubr.bf16.gmra.mxu0 %v2102
    %v2758 = vpop.f32.mrf.mxu0
    %v2759 = vadd.f32 %v2719, %v2758
    %v2760 = vpop.f32.mrf.mxu0
    %v2761 = vpop.f32.mrf.mxu0
    %v2762 = vpop.f32.mrf.mxu0
    %2763 = vdwg.mxu0
    %v2764 = vsub.f32 0.0, %v2678
    %v2765 = vsub.f32 0.0, %v2680
    %v2766 = vsub.f32 0.0, %v2759
    %v2767 = vmul.f32 %v2764, 1.442695
    %v2768 = vpow.pop %v2767
    %v2769 = vmul.f32 %v2765, 1.442695
    %v2770 = vpow.pop %v2769
    %v2771 = vmul.f32 %v2766, 1.442695
    %v2772 = vpow.pop %v2771
    %v2773 = vadd.f32 %v2768, 1.0
    %v2774 = vadd.f32 %v2770, 1.0
    %v2775 = vadd.f32 %v2772, 1.0
    %v2776 = vrcp.pop %v2773
    %v2777 = vrcp.pop %v2774
    %v2778 = vrcp.pop %v2775
    %v2779 = vpack.c.bf16 %v2776, %v2776
    %v2780 = vpack.c.bf16 %v2777, %v2777
    %v2781 = vpack.c.bf16 %v2778, %v2778
    %s2782 = scalar_lea.vmem [#allocation5], 2304
    %v2783 = vld [vmem:[%s2782] sm:$0xff]
    %v2784 = vld [vmem:[%s2782 + $0x8] sm:$0xf]
    %v2785 = vld [vmem:[%s2782 + $0xc] sm:$0xff]
    %v2786 = vld [vmem:[%s2782 + $0x14] sm:$0xf]
    %v2787 = vld [vmem:[%s2782 + $0x18] sm:$0xff]
    %v2788 = vld [vmem:[%s2782 + $0x20] sm:$0xf]
    %v2789 = vld [vmem:[%s2782 + $0x24] sm:$0xff]
    %v2790 = vld [vmem:[%s2782 + $0x2c] sm:$0xf]
    %v2791 = vld [vmem:[%s2782 + $0x30] sm:$0xff]
    %v2792 = vld [vmem:[%s2782 + $0x38] sm:$0xf]
    %v2793 = vld [vmem:[%s2782 + $0x3c] sm:$0xff]
    %v2794 = vld [vmem:[%s2782 + $0x44] sm:$0xf]
    %v2795 = vld [vmem:[%s2782 + $0x48] sm:$0xff]
    %v2796 = vld [vmem:[%s2782 + $0x50] sm:$0xf]
    %v2797 = vld [vmem:[%s2782 + $0x54] sm:$0xff]
    %v2798 = vld [vmem:[%s2782 + $0x5c] sm:$0xf]
    %v2799 = vld [vmem:[%s2782 + $0x60] sm:$0xff]
    %v2800 = vld [vmem:[%s2782 + $0x68] sm:$0xf]
    %v2801 = vld [vmem:[%s2782 + $0x6c] sm:$0xff]
    %v2802 = vld [vmem:[%s2782 + $0x74] sm:$0xf]
    %v2803 = vld [vmem:[%s2782 + $0x78] sm:$0xff]
    %v2804 = vld [vmem:[%s2782 + $0x80] sm:$0xf]
    %v2805 = vld [vmem:[%s2782 + $0x84] sm:$0xff]
    %v2806 = vld [vmem:[%s2782 + $0x8c] sm:$0xf]
    %v2807 = vld [vmem:[%s2782 + $0x90] sm:$0xff]
    %v2808 = vld [vmem:[%s2782 + $0x98] sm:$0xf]
    %v2809 = vld [vmem:[%s2782 + $0x9c] sm:$0xff]
    %v2810 = vld [vmem:[%s2782 + $0xa4] sm:$0xf]
    %v2811 = vld [vmem:[%s2782 + $0xa8] sm:$0xff]
    %v2812 = vld [vmem:[%s2782 + $0xb0] sm:$0xf]
    %v2813 = vld [vmem:[%s2782 + $0xb4] sm:$0xff]
    %v2814 = vld [vmem:[%s2782 + $0xbc] sm:$0xf]
    %v2815 = vld [vmem:[%s2782 + $0xc0] sm:$0xff]
    %v2816 = vld [vmem:[%s2782 + $0xc8] sm:$0xf]
    %v2817 = vld [vmem:[%s2782 + $0xcc] sm:$0xff]
    %v2818 = vld [vmem:[%s2782 + $0xd4] sm:$0xf]
    %v2819 = vld [vmem:[%s2782 + $0xd8] sm:$0xff]
    %v2820 = vld [vmem:[%s2782 + $0xe0] sm:$0xf]
    %v2821 = vld [vmem:[%s2782 + $0xe4] sm:$0xff]
    %v2822 = vld [vmem:[%s2782 + $0xec] sm:$0xf]
    %v2823 = vld [vmem:[%s2782 + $0xf0] sm:$0xff]
    %v2824 = vld [vmem:[%s2782 + $0xf8] sm:$0xf]
    %v2825 = vld [vmem:[%s2782 + $0xfc] sm:$0xff]
    %v2826 = vld [vmem:[%s2782 + $0x104] sm:$0xf]
    %v2827 = vld [vmem:[%s2782 + $0x108] sm:$0xff]
    %v2828 = vld [vmem:[%s2782 + $0x110] sm:$0xf]
    %v2829 = vld [vmem:[%s2782 + $0x114] sm:$0xff]
    %v2830 = vld [vmem:[%s2782 + $0x11c] sm:$0xf]
    %v2831 = vld [vmem:[%s2782 + $0x120] sm:$0xff]
    %v2832 = vld [vmem:[%s2782 + $0x128] sm:$0xf]
    %v2833 = vld [vmem:[%s2782 + $0x12c] sm:$0xff]
    %v2834 = vld [vmem:[%s2782 + $0x134] sm:$0xf]
    %v2835 = vld [vmem:[%s2782 + $0x138] sm:$0xff]
    %v2836 = vld [vmem:[%s2782 + $0x140] sm:$0xf]
    %v2837 = vld [vmem:[%s2782 + $0x144] sm:$0xff]
    %v2838 = vld [vmem:[%s2782 + $0x14c] sm:$0xf]
    %v2839 = vld [vmem:[%s2782 + $0x150] sm:$0xff]
    %v2840 = vld [vmem:[%s2782 + $0x158] sm:$0xf]
    %v2841 = vld [vmem:[%s2782 + $0x15c] sm:$0xff]
    %v2842 = vld [vmem:[%s2782 + $0x164] sm:$0xf]
    %v2843 = vld [vmem:[%s2782 + $0x168] sm:$0xff]
    %v2844 = vld [vmem:[%s2782 + $0x170] sm:$0xf]
    %v2845 = vld [vmem:[%s2782 + $0x174] sm:$0xff]
    %v2846 = vld [vmem:[%s2782 + $0x17c] sm:$0xf]
    %v2847 = vld [vmem:[%s2782 + $0x180] sm:$0xff]
    %v2848 = vld [vmem:[%s2782 + $0x188] sm:$0xf]
    %v2849 = vld [vmem:[%s2782 + $0x18c] sm:$0xff]
    %v2850 = vld [vmem:[%s2782 + $0x194] sm:$0xf]
    %v2851 = vld [vmem:[%s2782 + $0x198] sm:$0xff]
    %v2852 = vld [vmem:[%s2782 + $0x1a0] sm:$0xf]
    %v2853 = vld [vmem:[%s2782 + $0x1a4] sm:$0xff]
    %v2854 = vld [vmem:[%s2782 + $0x1ac] sm:$0xf]
    %v2855 = vld [vmem:[%s2782 + $0x1b0] sm:$0xff]
    %v2856 = vld [vmem:[%s2782 + $0x1b8] sm:$0xf]
    %v2857 = vld [vmem:[%s2782 + $0x1bc] sm:$0xff]
    %v2858 = vld [vmem:[%s2782 + $0x1c4] sm:$0xf]
    %v2859 = vld [vmem:[%s2782 + $0x1c8] sm:$0xff]
    %v2860 = vld [vmem:[%s2782 + $0x1d0] sm:$0xf]
    %v2861 = vld [vmem:[%s2782 + $0x1d4] sm:$0xff]
    %v2862 = vld [vmem:[%s2782 + $0x1dc] sm:$0xf]
    %v2863 = vld [vmem:[%s2782 + $0x1e0] sm:$0xff]
    %v2864 = vld [vmem:[%s2782 + $0x1e8] sm:$0xf]
    %v2865 = vld [vmem:[%s2782 + $0x1ec] sm:$0xff]
    %v2866 = vld [vmem:[%s2782 + $0x1f4] sm:$0xf]
    %v2867 = vld [vmem:[%s2782 + $0x1f8] sm:$0xff]
    %v2868 = vld [vmem:[%s2782 + $0x200] sm:$0xf]
    %v2869 = vld [vmem:[%s2782 + $0x204] sm:$0xff]
    %v2870 = vld [vmem:[%s2782 + $0x20c] sm:$0xf]
    %v2871 = vld [vmem:[%s2782 + $0x210] sm:$0xff]
    %v2872 = vld [vmem:[%s2782 + $0x218] sm:$0xf]
    %v2873 = vld [vmem:[%s2782 + $0x21c] sm:$0xff]
    %v2874 = vld [vmem:[%s2782 + $0x224] sm:$0xf]
    %v2875 = vld [vmem:[%s2782 + $0x228] sm:$0xff]
    %v2876 = vld [vmem:[%s2782 + $0x230] sm:$0xf]
    %v2877 = vld [vmem:[%s2782 + $0x234] sm:$0xff]
    %v2878 = vld [vmem:[%s2782 + $0x23c] sm:$0xf]
    %s2879 = scalar_lea.vmem [#allocation7], 12
    %v2880 = vld [vmem:[%s2879] sm:$0x7]
    %v2882 = vlaneseq
    %v2883 = vshrl.u32 %v2882, 7
    %v2884 = vsub.s32 0, %v2883
    %v2885 = vrot.slane %v2880, %v2884
    %v2886 = vlaneseq
    %v2887 = vshrl.u32 %v2886, 7
    %v2888 = vsub.s32 1, %v2887
    %v2889 = vrot.slane %v2880, %v2888
    %v2890 = vlaneseq
    %v2891 = vshrl.u32 %v2890, 7
    %v2892 = vsub.s32 2, %v2891
    %v2893 = vrot.slane %v2880, %v2892
    %v2993 = vunpack.c.l.b16 %v2783
    %v2994 = vunpack.c.h.b16 %v2783
    %v2995 = vunpack.c.l.b16 %v2784
    %v2996 = vunpack.c.l.b16 %v2785
    %v2997 = vunpack.c.h.b16 %v2785
    %v2998 = vunpack.c.l.b16 %v2786
    %v2999 = vunpack.c.l.b16 %v2787
    %v3000 = vunpack.c.h.b16 %v2787
    %v3001 = vunpack.c.l.b16 %v2788
    %v3002 = vunpack.c.l.b16 %v2789
    %v3003 = vunpack.c.h.b16 %v2789
    %v3004 = vunpack.c.l.b16 %v2790
    %v3005 = vunpack.c.l.b16 %v2791
    %v3006 = vunpack.c.h.b16 %v2791
    %v3007 = vunpack.c.l.b16 %v2792
    %v3008 = vunpack.c.l.b16 %v2793
    %v3009 = vunpack.c.h.b16 %v2793
    %v3010 = vunpack.c.l.b16 %v2794
    %v3011 = vunpack.c.l.b16 %v2795
    %v3012 = vunpack.c.h.b16 %v2795
    %v3013 = vunpack.c.l.b16 %v2796
    %v3014 = vunpack.c.l.b16 %v2797
    %v3015 = vunpack.c.h.b16 %v2797
    %v3016 = vunpack.c.l.b16 %v2798
    %v3017 = vunpack.c.l.b16 %v2799
    %v3018 = vunpack.c.h.b16 %v2799
    %v3019 = vunpack.c.l.b16 %v2800
    %v3020 = vunpack.c.l.b16 %v2801
    %v3021 = vunpack.c.h.b16 %v2801
    %v3022 = vunpack.c.l.b16 %v2802
    %v3023 = vunpack.c.l.b16 %v2803
    %v3024 = vunpack.c.h.b16 %v2803
    %v3025 = vunpack.c.l.b16 %v2804
    %v3026 = vunpack.c.l.b16 %v2805
    %v3027 = vunpack.c.h.b16 %v2805
    %v3028 = vunpack.c.l.b16 %v2806
    %v3029 = vunpack.c.l.b16 %v2807
    %v3030 = vunpack.c.h.b16 %v2807
    %v3031 = vunpack.c.l.b16 %v2808
    %v3032 = vunpack.c.l.b16 %v2809
    %v3033 = vunpack.c.h.b16 %v2809
    %v3034 = vunpack.c.l.b16 %v2810
    %v3035 = vunpack.c.l.b16 %v2811
    %v3036 = vunpack.c.h.b16 %v2811
    %v3037 = vunpack.c.l.b16 %v2812
    %v3038 = vunpack.c.l.b16 %v2813
    %v3039 = vunpack.c.h.b16 %v2813
    %v3040 = vunpack.c.l.b16 %v2814
    %v3041 = vunpack.c.l.b16 %v2815
    %v3042 = vunpack.c.h.b16 %v2815
    %v3043 = vunpack.c.l.b16 %v2816
    %v3044 = vunpack.c.l.b16 %v2817
    %v3045 = vunpack.c.h.b16 %v2817
    %v3046 = vunpack.c.l.b16 %v2818
    %v3047 = vunpack.c.l.b16 %v2819
    %v3048 = vunpack.c.h.b16 %v2819
    %v3049 = vunpack.c.l.b16 %v2820
    %v3050 = vunpack.c.l.b16 %v2821
    %v3051 = vunpack.c.h.b16 %v2821
    %v3052 = vunpack.c.l.b16 %v2822
    %v3053 = vunpack.c.l.b16 %v2823
    %v3054 = vunpack.c.h.b16 %v2823
    %v3055 = vunpack.c.l.b16 %v2824
    %v3056 = vunpack.c.l.b16 %v2825
    %v3057 = vunpack.c.h.b16 %v2825
    %v3058 = vunpack.c.l.b16 %v2826
    %v3059 = vunpack.c.l.b16 %v2827
    %v3060 = vunpack.c.h.b16 %v2827
    %v3061 = vunpack.c.l.b16 %v2828
    %v3062 = vunpack.c.l.b16 %v2829
    %v3063 = vunpack.c.h.b16 %v2829
    %v3064 = vunpack.c.l.b16 %v2830
    %v3065 = vunpack.c.l.b16 %v2831
    %v3066 = vunpack.c.h.b16 %v2831
    %v3067 = vunpack.c.l.b16 %v2832
    %v3068 = vunpack.c.l.b16 %v2833
    %v3069 = vunpack.c.h.b16 %v2833
    %v3070 = vunpack.c.l.b16 %v2834
    %v3071 = vunpack.c.l.b16 %v2835
    %v3072 = vunpack.c.h.b16 %v2835
    %v3073 = vunpack.c.l.b16 %v2836
    %v3074 = vunpack.c.l.b16 %v2837
    %v3075 = vunpack.c.h.b16 %v2837
    %v3076 = vunpack.c.l.b16 %v2838
    %v3077 = vunpack.c.l.b16 %v2839
    %v3078 = vunpack.c.h.b16 %v2839
    %v3079 = vunpack.c.l.b16 %v2840
    %v3080 = vunpack.c.l.b16 %v2841
    %v3081 = vunpack.c.h.b16 %v2841
    %v3082 = vunpack.c.l.b16 %v2842
    %v3083 = vunpack.c.l.b16 %v2843
    %v3084 = vunpack.c.h.b16 %v2843
    %v3085 = vunpack.c.l.b16 %v2844
    %v3086 = vunpack.c.l.b16 %v2845
    %v3087 = vunpack.c.h.b16 %v2845
    %v3088 = vunpack.c.l.b16 %v2846
    %v3089 = vunpack.c.l.b16 %v2847
    %v3090 = vunpack.c.h.b16 %v2847
    %v3091 = vunpack.c.l.b16 %v2848
    %v3092 = vunpack.c.l.b16 %v2849
    %v3093 = vunpack.c.h.b16 %v2849
    %v3094 = vunpack.c.l.b16 %v2850
    %v3095 = vunpack.c.l.b16 %v2851
    %v3096 = vunpack.c.h.b16 %v2851
    %v3097 = vunpack.c.l.b16 %v2852
    %v3098 = vunpack.c.l.b16 %v2853
    %v3099 = vunpack.c.h.b16 %v2853
    %v3100 = vunpack.c.l.b16 %v2854
    %v3101 = vunpack.c.l.b16 %v2855
    %v3102 = vunpack.c.h.b16 %v2855
    %v3103 = vunpack.c.l.b16 %v2856
    %v3104 = vunpack.c.l.b16 %v2857
    %v3105 = vunpack.c.h.b16 %v2857
    %v3106 = vunpack.c.l.b16 %v2858
    %v3107 = vunpack.c.l.b16 %v2859
    %v3108 = vunpack.c.h.b16 %v2859
    %v3109 = vunpack.c.l.b16 %v2860
    %v3110 = vunpack.c.l.b16 %v2861
    %v3111 = vunpack.c.h.b16 %v2861
    %v3112 = vunpack.c.l.b16 %v2862
    %v3113 = vunpack.c.l.b16 %v2863
    %v3114 = vunpack.c.h.b16 %v2863
    %v3115 = vunpack.c.l.b16 %v2864
    %v3116 = vunpack.c.l.b16 %v2865
    %v3117 = vunpack.c.h.b16 %v2865
    %v3118 = vunpack.c.l.b16 %v2866
    %v3119 = vunpack.c.l.b16 %v2867
    %v3120 = vunpack.c.h.b16 %v2867
    %v3121 = vunpack.c.l.b16 %v2868
    %v3122 = vunpack.c.l.b16 %v2869
    %v3123 = vunpack.c.h.b16 %v2869
    %v3124 = vunpack.c.l.b16 %v2870
    %v3125 = vunpack.c.l.b16 %v2871
    %v3126 = vunpack.c.h.b16 %v2871
    %v3127 = vunpack.c.l.b16 %v2872
    %v3128 = vunpack.c.l.b16 %v2873
    %v3129 = vunpack.c.h.b16 %v2873
    %v3130 = vunpack.c.l.b16 %v2874
    %v3131 = vunpack.c.l.b16 %v2875
    %v3132 = vunpack.c.h.b16 %v2875
    %v3133 = vunpack.c.l.b16 %v2876
    %v3134 = vunpack.c.l.b16 %v2877
    %v3135 = vunpack.c.h.b16 %v2877
    %v3136 = vunpack.c.l.b16 %v2878
    %v3137 = vpack.c.b16 %v2996, %v2993
    %v3138 = vpack.c.b16 %v2997, %v2994
    %v3139 = vpack.c.b16 %v2998, %v2995
    %v3140 = vpack.c.b16 %v3002, %v2999
    %v3141 = vpack.c.b16 %v3003, %v3000
    %v3142 = vpack.c.b16 %v3004, %v3001
    %v3143 = vpack.c.b16 %v3008, %v3005
    %v3144 = vpack.c.b16 %v3009, %v3006
    %v3145 = vpack.c.b16 %v3010, %v3007
    %v3146 = vpack.c.b16 %v3014, %v3011
    %v3147 = vpack.c.b16 %v3015, %v3012
    %v3148 = vpack.c.b16 %v3016, %v3013
    %v3149 = vpack.c.b16 %v3020, %v3017
    %v3150 = vpack.c.b16 %v3021, %v3018
    %v3151 = vpack.c.b16 %v3022, %v3019
    %v3152 = vpack.c.b16 %v3026, %v3023
    %v3153 = vpack.c.b16 %v3027, %v3024
    %v3154 = vpack.c.b16 %v3028, %v3025
    %v3155 = vpack.c.b16 %v3032, %v3029
    %v3156 = vpack.c.b16 %v3033, %v3030
    %v3157 = vpack.c.b16 %v3034, %v3031
    %v3158 = vpack.c.b16 %v3038, %v3035
    %v3159 = vpack.c.b16 %v3039, %v3036
    %v3160 = vpack.c.b16 %v3040, %v3037
    %v3161 = vpack.c.b16 %v3044, %v3041
    %v3162 = vpack.c.b16 %v3045, %v3042
    %v3163 = vpack.c.b16 %v3046, %v3043
    %v3164 = vpack.c.b16 %v3050, %v3047
    %v3165 = vpack.c.b16 %v3051, %v3048
    %v3166 = vpack.c.b16 %v3052, %v3049
    %v3167 = vpack.c.b16 %v3056, %v3053
    %v3168 = vpack.c.b16 %v3057, %v3054
    %v3169 = vpack.c.b16 %v3058, %v3055
    %v3170 = vpack.c.b16 %v3062, %v3059
    %v3171 = vpack.c.b16 %v3063, %v3060
    %v3172 = vpack.c.b16 %v3064, %v3061
    %v3173 = vpack.c.b16 %v3068, %v3065
    %v3174 = vpack.c.b16 %v3069, %v3066
    %v3175 = vpack.c.b16 %v3070, %v3067
    %v3176 = vpack.c.b16 %v3074, %v3071
    %v3177 = vpack.c.b16 %v3075, %v3072
    %v3178 = vpack.c.b16 %v3076, %v3073
    %v3179 = vpack.c.b16 %v3080, %v3077
    %v3180 = vpack.c.b16 %v3081, %v3078
    %v3181 = vpack.c.b16 %v3082, %v3079
    %v3182 = vpack.c.b16 %v3086, %v3083
    %v3183 = vpack.c.b16 %v3087, %v3084
    %v3184 = vpack.c.b16 %v3088, %v3085
    %v3185 = vpack.c.b16 %v3092, %v3089
    %v3186 = vpack.c.b16 %v3093, %v3090
    %v3187 = vpack.c.b16 %v3094, %v3091
    %v3188 = vpack.c.b16 %v3098, %v3095
    %v3189 = vpack.c.b16 %v3099, %v3096
    %v3190 = vpack.c.b16 %v3100, %v3097
    %v3191 = vpack.c.b16 %v3104, %v3101
    %v3192 = vpack.c.b16 %v3105, %v3102
    %v3193 = vpack.c.b16 %v3106, %v3103
    %v3194 = vpack.c.b16 %v3110, %v3107
    %v3195 = vpack.c.b16 %v3111, %v3108
    %v3196 = vpack.c.b16 %v3112, %v3109
    %v3197 = vpack.c.b16 %v3116, %v3113
    %v3198 = vpack.c.b16 %v3117, %v3114
    %v3199 = vpack.c.b16 %v3118, %v3115
    %v3200 = vpack.c.b16 %v3122, %v3119
    %v3201 = vpack.c.b16 %v3123, %v3120
    %v3202 = vpack.c.b16 %v3124, %v3121
    %v3203 = vpack.c.b16 %v3128, %v3125
    %v3204 = vpack.c.b16 %v3129, %v3126
    %v3205 = vpack.c.b16 %v3130, %v3127
    %v3206 = vpack.c.b16 %v3134, %v3131
    %v3207 = vpack.c.b16 %v3135, %v3132
    %v3208 = vpack.c.b16 %v3136, %v3133
    %3281 = vmatprep.subr.bf16.mxu0 %v3159
    %3282 = vmatpush1.bf16.msra.mxu0 %v3158
    %3283 = vmatprep.subr.bf16.mxu0 %v3156
    %3284 = vmatpush1.bf16.msra.mxu0 %v3155
    %3285 = vmatprep.subr.bf16.mxu0 %v3153
    %3286 = vmatpush1.bf16.msra.mxu0 %v3152
    %3287 = vmatprep.subr.bf16.mxu0 %v3150
    %3288 = vmatpush1.bf16.msra.mxu0 %v3149
    %3289 = vmatprep.subr.bf16.mxu0 %v3147
    %3290 = vmatpush1.bf16.msra.mxu0 %v3146
    %3291 = vmatprep.subr.bf16.mxu0 %v3144
    %3292 = vmatpush1.bf16.msra.mxu0 %v3143
    %3293 = vmatprep.subr.bf16.mxu0 %v3141
    %3294 = vmatpush1.bf16.msra.mxu0 %v3140
    %3295 = vmatprep.subr.bf16.mxu0 %v3138
    %3296 = vmatpush1.bf16.msra.mxu0 %v3137
    %3297 = vmatprep.subr.bf16.mxu0 %v3183
    %3298 = vmatpush2.bf16.msra.mxu0 %v3182
    %3299 = vmatprep.subr.bf16.mxu0 %v3180
    %3300 = vmatpush2.bf16.msra.mxu0 %v3179
    %3301 = vmatprep.subr.bf16.mxu0 %v3177
    %3302 = vmatpush2.bf16.msra.mxu0 %v3176
    %3303 = vmatprep.subr.bf16.mxu0 %v3174
    %3304 = vmatpush2.bf16.msra.mxu0 %v3173
    %3305 = vmatprep.subr.bf16.mxu0 %v3171
    %3306 = vmatpush2.bf16.msra.mxu0 %v3170
    %3307 = vmatprep.subr.bf16.mxu0 %v3168
    %3308 = vmatpush2.bf16.msra.mxu0 %v3167
    %3309 = vmatprep.subr.bf16.mxu0 %v3165
    %3310 = vmatpush2.bf16.msra.mxu0 %v3164
    %3311 = vmatprep.subr.bf16.mxu0 %v3162
    %3312 = vmatpush2.bf16.msra.mxu0 %v3161
    %3313 = vmatprep.mubr.bf16.mxu0 %v2780
    %3314 = vmatmul.mubr.bf16.gmra.mxu0 %v2779
    %v3315 = vpop.f32.mrf.mxu0
    %v3316 = vadd.f32 %v2885, %v3315
    %v3317 = vpop.f32.mrf.mxu0
    %v3318 = vadd.f32 %v2889, %v3317
    %v3319 = vpop.f32.mrf.mxu0
    %v3320 = vpop.f32.mrf.mxu0
    %3321 = vdwg.mxu0
    %3322 = vmatprep.subr.bf16.mxu0 %v3207
    %3323 = vmatpush1.bf16.msra.mxu0 %v3206
    %3324 = vmatprep.subr.bf16.mxu0 %v3204
    %3325 = vmatpush1.bf16.msra.mxu0 %v3203
    %3326 = vmatprep.subr.bf16.mxu0 %v3201
    %3327 = vmatpush1.bf16.msra.mxu0 %v3200
    %3328 = vmatprep.subr.bf16.mxu0 %v3198
    %3329 = vmatpush1.bf16.msra.mxu0 %v3197
    %3330 = vmatprep.subr.bf16.mxu0 %v3195
    %3331 = vmatpush1.bf16.msra.mxu0 %v3194
    %3332 = vmatprep.subr.bf16.mxu0 %v3192
    %3333 = vmatpush1.bf16.msra.mxu0 %v3191
    %3334 = vmatprep.subr.bf16.mxu0 %v3189
    %3335 = vmatpush1.bf16.msra.mxu0 %v3188
    %3336 = vmatprep.subr.bf16.mxu0 %v3186
    %3337 = vmatpush1.bf16.msra.mxu0 %v3185
    %3338 = vmatprep.subr.bf16.mxu0 0
    %3339 = vmatpush2.bf16.msra.mxu0 0
    %3340 = vmatprep.subr.bf16.mxu0 0
    %3341 = vmatpush2.bf16.msra.mxu0 0
    %3342 = vmatprep.subr.bf16.mxu0 0
    %3343 = vmatpush2.bf16.msra.mxu0 0
    %3344 = vmatprep.subr.bf16.mxu0 0
    %3345 = vmatpush2.bf16.msra.mxu0 0
    %3346 = vmatprep.subr.bf16.mxu0 0
    %3347 = vmatpush2.bf16.msra.mxu0 0
    %3348 = vmatprep.subr.bf16.mxu0 0
    %3349 = vmatpush2.bf16.msra.mxu0 0
    %3350 = vmatprep.subr.bf16.mxu0 0
    %3351 = vmatpush2.bf16.msra.mxu0 0
    %3352 = vmatprep.subr.bf16.mxu0 0
    %3353 = vmatpush2.bf16.msra.mxu0 0
    %3354 = vmatprep.mubr.bf16.mxu0 0
    %3355 = vmatmul.mubr.bf16.gmra.mxu0 %v2781
    %v3356 = vpop.f32.mrf.mxu0
    %v3357 = vadd.f32 %v3316, %v3356
    %v3358 = vpop.f32.mrf.mxu0
    %v3359 = vadd.f32 %v3318, %v3358
    %v3360 = vpop.f32.mrf.mxu0
    %v3361 = vpop.f32.mrf.mxu0
    %3362 = vdwg.mxu0
    %3363 = vmatprep.subr.bf16.mxu0 0
    %3364 = vmatpush1.bf16.msra.mxu0 %v3160
    %3365 = vmatprep.subr.bf16.mxu0 0
    %3366 = vmatpush1.bf16.msra.mxu0 %v3157
    %3367 = vmatprep.subr.bf16.mxu0 0
    %3368 = vmatpush1.bf16.msra.mxu0 %v3154
    %3369 = vmatprep.subr.bf16.mxu0 0
    %3370 = vmatpush1.bf16.msra.mxu0 %v3151
    %3371 = vmatprep.subr.bf16.mxu0 0
    %3372 = vmatpush1.bf16.msra.mxu0 %v3148
    %3373 = vmatprep.subr.bf16.mxu0 0
    %3374 = vmatpush1.bf16.msra.mxu0 %v3145
    %3375 = vmatprep.subr.bf16.mxu0 0
    %3376 = vmatpush1.bf16.msra.mxu0 %v3142
    %3377 = vmatprep.subr.bf16.mxu0 0
    %3378 = vmatpush1.bf16.msra.mxu0 %v3139
    %3379 = vmatprep.subr.bf16.mxu0 0
    %3380 = vmatpush2.bf16.msra.mxu0 %v3184
    %3381 = vmatprep.subr.bf16.mxu0 0
    %3382 = vmatpush2.bf16.msra.mxu0 %v3181
    %3383 = vmatprep.subr.bf16.mxu0 0
    %3384 = vmatpush2.bf16.msra.mxu0 %v3178
    %3385 = vmatprep.subr.bf16.mxu0 0
    %3386 = vmatpush2.bf16.msra.mxu0 %v3175
    %3387 = vmatprep.subr.bf16.mxu0 0
    %3388 = vmatpush2.bf16.msra.mxu0 %v3172
    %3389 = vmatprep.subr.bf16.mxu0 0
    %3390 = vmatpush2.bf16.msra.mxu0 %v3169
    %3391 = vmatprep.subr.bf16.mxu0 0
    %3392 = vmatpush2.bf16.msra.mxu0 %v3166
    %3393 = vmatprep.subr.bf16.mxu0 0
    %3394 = vmatpush2.bf16.msra.mxu0 %v3163
    %3395 = vmatprep.mubr.bf16.mxu0 %v2780
    %3396 = vmatmul.mubr.bf16.gmra.mxu0 %v2779
    %v3397 = vpop.f32.mrf.mxu0
    %v3398 = vadd.f32 %v2893, %v3397
    %v3399 = vpop.f32.mrf.mxu0
    %v3400 = vpop.f32.mrf.mxu0
    %v3401 = vpop.f32.mrf.mxu0
    %3402 = vdwg.mxu0
    %3403 = vmatprep.subr.bf16.mxu0 0
    %3404 = vmatpush1.bf16.msra.mxu0 %v3208
    %3405 = vmatprep.subr.bf16.mxu0 0
    %3406 = vmatpush1.bf16.msra.mxu0 %v3205
    %3407 = vmatprep.subr.bf16.mxu0 0
    %3408 = vmatpush1.bf16.msra.mxu0 %v3202
    %3409 = vmatprep.subr.bf16.mxu0 0
    %3410 = vmatpush1.bf16.msra.mxu0 %v3199
    %3411 = vmatprep.subr.bf16.mxu0 0
    %3412 = vmatpush1.bf16.msra.mxu0 %v3196
    %3413 = vmatprep.subr.bf16.mxu0 0
    %3414 = vmatpush1.bf16.msra.mxu0 %v3193
    %3415 = vmatprep.subr.bf16.mxu0 0
    %3416 = vmatpush1.bf16.msra.mxu0 %v3190
    %3417 = vmatprep.subr.bf16.mxu0 0
    %3418 = vmatpush1.bf16.msra.mxu0 %v3187
    %3419 = vmatprep.subr.bf16.mxu0 0
    %3420 = vmatpush2.bf16.msra.mxu0 0
    %3421 = vmatprep.subr.bf16.mxu0 0
    %3422 = vmatpush2.bf16.msra.mxu0 0
    %3423 = vmatprep.subr.bf16.mxu0 0
    %3424 = vmatpush2.bf16.msra.mxu0 0
    %3425 = vmatprep.subr.bf16.mxu0 0
    %3426 = vmatpush2.bf16.msra.mxu0 0
    %3427 = vmatprep.subr.bf16.mxu0 0
    %3428 = vmatpush2.bf16.msra.mxu0 0
    %3429 = vmatprep.subr.bf16.mxu0 0
    %3430 = vmatpush2.bf16.msra.mxu0 0
    %3431 = vmatprep.subr.bf16.mxu0 0
    %3432 = vmatpush2.bf16.msra.mxu0 0
    %3433 = vmatprep.subr.bf16.mxu0 0
    %3434 = vmatpush2.bf16.msra.mxu0 0
    %3435 = vmatprep.mubr.bf16.mxu0 0
    %3436 = vmatmul.mubr.bf16.gmra.mxu0 %v2781
    %v3437 = vpop.f32.mrf.mxu0
    %v3438 = vadd.f32 %v3398, %v3437
    %v3439 = vpop.f32.mrf.mxu0
    %v3440 = vpop.f32.mrf.mxu0
    %v3441 = vpop.f32.mrf.mxu0
    %3442 = vdwg.mxu0
    %v3443 = vsub.f32 0.0, %v3357
    %v3444 = vsub.f32 0.0, %v3359
    %v3445 = vsub.f32 0.0, %v3438
    %v3446 = vmul.f32 %v3443, 1.442695
    %v3447 = vpow.pop %v3446
    %v3448 = vmul.f32 %v3444, 1.442695
    %v3449 = vpow.pop %v3448
    %v3450 = vmul.f32 %v3445, 1.442695
    %v3451 = vpow.pop %v3450
    %v3452 = vadd.f32 %v3447, 1.0
    %v3453 = vadd.f32 %v3449, 1.0
    %v3454 = vadd.f32 %v3451, 1.0
    %v3455 = vrcp.pop %v3452
    %v3456 = vrcp.pop %v3453
    %v3457 = vrcp.pop %v3454
    %v3458 = vpack.c.bf16 %v3455, %v3455
    %v3459 = vpack.c.bf16 %v3456, %v3456
    %v3460 = vpack.c.bf16 %v3457, %v3457
    %s3461 = scalar_lea.vmem [#allocation5], 2880
    %v3462 = vld [vmem:[%s3461] sm:$0xff]
    %v3463 = vld [vmem:[%s3461 + $0x8] sm:$0xf]
    %v3464 = vld [vmem:[%s3461 + $0xc] sm:$0xff]
    %v3465 = vld [vmem:[%s3461 + $0x14] sm:$0xf]
    %v3466 = vld [vmem:[%s3461 + $0x18] sm:$0xff]
    %v3467 = vld [vmem:[%s3461 + $0x20] sm:$0xf]
    %v3468 = vld [vmem:[%s3461 + $0x24] sm:$0xff]
    %v3469 = vld [vmem:[%s3461 + $0x2c] sm:$0xf]
    %v3470 = vld [vmem:[%s3461 + $0x30] sm:$0xff]
    %v3471 = vld [vmem:[%s3461 + $0x38] sm:$0xf]
    %v3472 = vld [vmem:[%s3461 + $0x3c] sm:$0xff]
    %v3473 = vld [vmem:[%s3461 + $0x44] sm:$0xf]
    %v3474 = vld [vmem:[%s3461 + $0x48] sm:$0xff]
    %v3475 = vld [vmem:[%s3461 + $0x50] sm:$0xf]
    %v3476 = vld [vmem:[%s3461 + $0x54] sm:$0xff]
    %v3477 = vld [vmem:[%s3461 + $0x5c] sm:$0xf]
    %v3478 = vld [vmem:[%s3461 + $0x60] sm:$0xff]
    %v3479 = vld [vmem:[%s3461 + $0x68] sm:$0xf]
    %v3480 = vld [vmem:[%s3461 + $0x6c] sm:$0xff]
    %v3481 = vld [vmem:[%s3461 + $0x74] sm:$0xf]
    %v3482 = vld [vmem:[%s3461 + $0x78] sm:$0xff]
    %v3483 = vld [vmem:[%s3461 + $0x80] sm:$0xf]
    %v3484 = vld [vmem:[%s3461 + $0x84] sm:$0xff]
    %v3485 = vld [vmem:[%s3461 + $0x8c] sm:$0xf]
    %v3486 = vld [vmem:[%s3461 + $0x90] sm:$0xff]
    %v3487 = vld [vmem:[%s3461 + $0x98] sm:$0xf]
    %v3488 = vld [vmem:[%s3461 + $0x9c] sm:$0xff]
    %v3489 = vld [vmem:[%s3461 + $0xa4] sm:$0xf]
    %v3490 = vld [vmem:[%s3461 + $0xa8] sm:$0xff]
    %v3491 = vld [vmem:[%s3461 + $0xb0] sm:$0xf]
    %v3492 = vld [vmem:[%s3461 + $0xb4] sm:$0xff]
    %v3493 = vld [vmem:[%s3461 + $0xbc] sm:$0xf]
    %v3494 = vld [vmem:[%s3461 + $0xc0] sm:$0xff]
    %v3495 = vld [vmem:[%s3461 + $0xc8] sm:$0xf]
    %v3496 = vld [vmem:[%s3461 + $0xcc] sm:$0xff]
    %v3497 = vld [vmem:[%s3461 + $0xd4] sm:$0xf]
    %v3498 = vld [vmem:[%s3461 + $0xd8] sm:$0xff]
    %v3499 = vld [vmem:[%s3461 + $0xe0] sm:$0xf]
    %v3500 = vld [vmem:[%s3461 + $0xe4] sm:$0xff]
    %v3501 = vld [vmem:[%s3461 + $0xec] sm:$0xf]
    %v3502 = vld [vmem:[%s3461 + $0xf0] sm:$0xff]
    %v3503 = vld [vmem:[%s3461 + $0xf8] sm:$0xf]
    %v3504 = vld [vmem:[%s3461 + $0xfc] sm:$0xff]
    %v3505 = vld [vmem:[%s3461 + $0x104] sm:$0xf]
    %v3506 = vld [vmem:[%s3461 + $0x108] sm:$0xff]
    %v3507 = vld [vmem:[%s3461 + $0x110] sm:$0xf]
    %v3508 = vld [vmem:[%s3461 + $0x114] sm:$0xff]
    %v3509 = vld [vmem:[%s3461 + $0x11c] sm:$0xf]
    %v3510 = vld [vmem:[%s3461 + $0x120] sm:$0xff]
    %v3511 = vld [vmem:[%s3461 + $0x128] sm:$0xf]
    %v3512 = vld [vmem:[%s3461 + $0x12c] sm:$0xff]
    %v3513 = vld [vmem:[%s3461 + $0x134] sm:$0xf]
    %v3514 = vld [vmem:[%s3461 + $0x138] sm:$0xff]
    %v3515 = vld [vmem:[%s3461 + $0x140] sm:$0xf]
    %v3516 = vld [vmem:[%s3461 + $0x144] sm:$0xff]
    %v3517 = vld [vmem:[%s3461 + $0x14c] sm:$0xf]
    %v3518 = vld [vmem:[%s3461 + $0x150] sm:$0xff]
    %v3519 = vld [vmem:[%s3461 + $0x158] sm:$0xf]
    %v3520 = vld [vmem:[%s3461 + $0x15c] sm:$0xff]
    %v3521 = vld [vmem:[%s3461 + $0x164] sm:$0xf]
    %v3522 = vld [vmem:[%s3461 + $0x168] sm:$0xff]
    %v3523 = vld [vmem:[%s3461 + $0x170] sm:$0xf]
    %v3524 = vld [vmem:[%s3461 + $0x174] sm:$0xff]
    %v3525 = vld [vmem:[%s3461 + $0x17c] sm:$0xf]
    %v3526 = vld [vmem:[%s3461 + $0x180] sm:$0xff]
    %v3527 = vld [vmem:[%s3461 + $0x188] sm:$0xf]
    %v3528 = vld [vmem:[%s3461 + $0x18c] sm:$0xff]
    %v3529 = vld [vmem:[%s3461 + $0x194] sm:$0xf]
    %v3530 = vld [vmem:[%s3461 + $0x198] sm:$0xff]
    %v3531 = vld [vmem:[%s3461 + $0x1a0] sm:$0xf]
    %v3532 = vld [vmem:[%s3461 + $0x1a4] sm:$0xff]
    %v3533 = vld [vmem:[%s3461 + $0x1ac] sm:$0xf]
    %v3534 = vld [vmem:[%s3461 + $0x1b0] sm:$0xff]
    %v3535 = vld [vmem:[%s3461 + $0x1b8] sm:$0xf]
    %v3536 = vld [vmem:[%s3461 + $0x1bc] sm:$0xff]
    %v3537 = vld [vmem:[%s3461 + $0x1c4] sm:$0xf]
    %v3538 = vld [vmem:[%s3461 + $0x1c8] sm:$0xff]
    %v3539 = vld [vmem:[%s3461 + $0x1d0] sm:$0xf]
    %v3540 = vld [vmem:[%s3461 + $0x1d4] sm:$0xff]
    %v3541 = vld [vmem:[%s3461 + $0x1dc] sm:$0xf]
    %v3542 = vld [vmem:[%s3461 + $0x1e0] sm:$0xff]
    %v3543 = vld [vmem:[%s3461 + $0x1e8] sm:$0xf]
    %v3544 = vld [vmem:[%s3461 + $0x1ec] sm:$0xff]
    %v3545 = vld [vmem:[%s3461 + $0x1f4] sm:$0xf]
    %v3546 = vld [vmem:[%s3461 + $0x1f8] sm:$0xff]
    %v3547 = vld [vmem:[%s3461 + $0x200] sm:$0xf]
    %v3548 = vld [vmem:[%s3461 + $0x204] sm:$0xff]
    %v3549 = vld [vmem:[%s3461 + $0x20c] sm:$0xf]
    %v3550 = vld [vmem:[%s3461 + $0x210] sm:$0xff]
    %v3551 = vld [vmem:[%s3461 + $0x218] sm:$0xf]
    %v3552 = vld [vmem:[%s3461 + $0x21c] sm:$0xff]
    %v3553 = vld [vmem:[%s3461 + $0x224] sm:$0xf]
    %v3554 = vld [vmem:[%s3461 + $0x228] sm:$0xff]
    %v3555 = vld [vmem:[%s3461 + $0x230] sm:$0xf]
    %v3556 = vld [vmem:[%s3461 + $0x234] sm:$0xff]
    %v3557 = vld [vmem:[%s3461 + $0x23c] sm:$0xf]
    %s3558 = scalar_lea.vmem [#allocation7], 15
    %v3559 = vld [vmem:[%s3558] sm:$0x7]
    %v3561 = vlaneseq
    %v3562 = vshrl.u32 %v3561, 7
    %v3563 = vsub.s32 0, %v3562
    %v3564 = vrot.slane %v3559, %v3563
    %v3565 = vlaneseq
    %v3566 = vshrl.u32 %v3565, 7
    %v3567 = vsub.s32 1, %v3566
    %v3568 = vrot.slane %v3559, %v3567
    %v3569 = vlaneseq
    %v3570 = vshrl.u32 %v3569, 7
    %v3571 = vsub.s32 2, %v3570
    %v3572 = vrot.slane %v3559, %v3571
    %v3672 = vunpack.c.l.b16 %v3462
    %v3673 = vunpack.c.h.b16 %v3462
    %v3674 = vunpack.c.l.b16 %v3463
    %v3675 = vunpack.c.l.b16 %v3464
    %v3676 = vunpack.c.h.b16 %v3464
    %v3677 = vunpack.c.l.b16 %v3465
    %v3678 = vunpack.c.l.b16 %v3466
    %v3679 = vunpack.c.h.b16 %v3466
    %v3680 = vunpack.c.l.b16 %v3467
    %v3681 = vunpack.c.l.b16 %v3468
    %v3682 = vunpack.c.h.b16 %v3468
    %v3683 = vunpack.c.l.b16 %v3469
    %v3684 = vunpack.c.l.b16 %v3470
    %v3685 = vunpack.c.h.b16 %v3470
    %v3686 = vunpack.c.l.b16 %v3471
    %v3687 = vunpack.c.l.b16 %v3472
    %v3688 = vunpack.c.h.b16 %v3472
    %v3689 = vunpack.c.l.b16 %v3473
    %v3690 = vunpack.c.l.b16 %v3474
    %v3691 = vunpack.c.h.b16 %v3474
    %v3692 = vunpack.c.l.b16 %v3475
    %v3693 = vunpack.c.l.b16 %v3476
    %v3694 = vunpack.c.h.b16 %v3476
    %v3695 = vunpack.c.l.b16 %v3477
    %v3696 = vunpack.c.l.b16 %v3478
    %v3697 = vunpack.c.h.b16 %v3478
    %v3698 = vunpack.c.l.b16 %v3479
    %v3699 = vunpack.c.l.b16 %v3480
    %v3700 = vunpack.c.h.b16 %v3480
    %v3701 = vunpack.c.l.b16 %v3481
    %v3702 = vunpack.c.l.b16 %v3482
    %v3703 = vunpack.c.h.b16 %v3482
    %v3704 = vunpack.c.l.b16 %v3483
    %v3705 = vunpack.c.l.b16 %v3484
    %v3706 = vunpack.c.h.b16 %v3484
    %v3707 = vunpack.c.l.b16 %v3485
    %v3708 = vunpack.c.l.b16 %v3486
    %v3709 = vunpack.c.h.b16 %v3486
    %v3710 = vunpack.c.l.b16 %v3487
    %v3711 = vunpack.c.l.b16 %v3488
    %v3712 = vunpack.c.h.b16 %v3488
    %v3713 = vunpack.c.l.b16 %v3489
    %v3714 = vunpack.c.l.b16 %v3490
    %v3715 = vunpack.c.h.b16 %v3490
    %v3716 = vunpack.c.l.b16 %v3491
    %v3717 = vunpack.c.l.b16 %v3492
    %v3718 = vunpack.c.h.b16 %v3492
    %v3719 = vunpack.c.l.b16 %v3493
    %v3720 = vunpack.c.l.b16 %v3494
    %v3721 = vunpack.c.h.b16 %v3494
    %v3722 = vunpack.c.l.b16 %v3495
    %v3723 = vunpack.c.l.b16 %v3496
    %v3724 = vunpack.c.h.b16 %v3496
    %v3725 = vunpack.c.l.b16 %v3497
    %v3726 = vunpack.c.l.b16 %v3498
    %v3727 = vunpack.c.h.b16 %v3498
    %v3728 = vunpack.c.l.b16 %v3499
    %v3729 = vunpack.c.l.b16 %v3500
    %v3730 = vunpack.c.h.b16 %v3500
    %v3731 = vunpack.c.l.b16 %v3501
    %v3732 = vunpack.c.l.b16 %v3502
    %v3733 = vunpack.c.h.b16 %v3502
    %v3734 = vunpack.c.l.b16 %v3503
    %v3735 = vunpack.c.l.b16 %v3504
    %v3736 = vunpack.c.h.b16 %v3504
    %v3737 = vunpack.c.l.b16 %v3505
    %v3738 = vunpack.c.l.b16 %v3506
    %v3739 = vunpack.c.h.b16 %v3506
    %v3740 = vunpack.c.l.b16 %v3507
    %v3741 = vunpack.c.l.b16 %v3508
    %v3742 = vunpack.c.h.b16 %v3508
    %v3743 = vunpack.c.l.b16 %v3509
    %v3744 = vunpack.c.l.b16 %v3510
    %v3745 = vunpack.c.h.b16 %v3510
    %v3746 = vunpack.c.l.b16 %v3511
    %v3747 = vunpack.c.l.b16 %v3512
    %v3748 = vunpack.c.h.b16 %v3512
    %v3749 = vunpack.c.l.b16 %v3513
    %v3750 = vunpack.c.l.b16 %v3514
    %v3751 = vunpack.c.h.b16 %v3514
    %v3752 = vunpack.c.l.b16 %v3515
    %v3753 = vunpack.c.l.b16 %v3516
    %v3754 = vunpack.c.h.b16 %v3516
    %v3755 = vunpack.c.l.b16 %v3517
    %v3756 = vunpack.c.l.b16 %v3518
    %v3757 = vunpack.c.h.b16 %v3518
    %v3758 = vunpack.c.l.b16 %v3519
    %v3759 = vunpack.c.l.b16 %v3520
    %v3760 = vunpack.c.h.b16 %v3520
    %v3761 = vunpack.c.l.b16 %v3521
    %v3762 = vunpack.c.l.b16 %v3522
    %v3763 = vunpack.c.h.b16 %v3522
    %v3764 = vunpack.c.l.b16 %v3523
    %v3765 = vunpack.c.l.b16 %v3524
    %v3766 = vunpack.c.h.b16 %v3524
    %v3767 = vunpack.c.l.b16 %v3525
    %v3768 = vunpack.c.l.b16 %v3526
    %v3769 = vunpack.c.h.b16 %v3526
    %v3770 = vunpack.c.l.b16 %v3527
    %v3771 = vunpack.c.l.b16 %v3528
    %v3772 = vunpack.c.h.b16 %v3528
    %v3773 = vunpack.c.l.b16 %v3529
    %v3774 = vunpack.c.l.b16 %v3530
    %v3775 = vunpack.c.h.b16 %v3530
    %v3776 = vunpack.c.l.b16 %v3531
    %v3777 = vunpack.c.l.b16 %v3532
    %v3778 = vunpack.c.h.b16 %v3532
    %v3779 = vunpack.c.l.b16 %v3533
    %v3780 = vunpack.c.l.b16 %v3534
    %v3781 = vunpack.c.h.b16 %v3534
    %v3782 = vunpack.c.l.b16 %v3535
    %v3783 = vunpack.c.l.b16 %v3536
    %v3784 = vunpack.c.h.b16 %v3536
    %v3785 = vunpack.c.l.b16 %v3537
    %v3786 = vunpack.c.l.b16 %v3538
    %v3787 = vunpack.c.h.b16 %v3538
    %v3788 = vunpack.c.l.b16 %v3539
    %v3789 = vunpack.c.l.b16 %v3540
    %v3790 = vunpack.c.h.b16 %v3540
    %v3791 = vunpack.c.l.b16 %v3541
    %v3792 = vunpack.c.l.b16 %v3542
    %v3793 = vunpack.c.h.b16 %v3542
    %v3794 = vunpack.c.l.b16 %v3543
    %v3795 = vunpack.c.l.b16 %v3544
    %v3796 = vunpack.c.h.b16 %v3544
    %v3797 = vunpack.c.l.b16 %v3545
    %v3798 = vunpack.c.l.b16 %v3546
    %v3799 = vunpack.c.h.b16 %v3546
    %v3800 = vunpack.c.l.b16 %v3547
    %v3801 = vunpack.c.l.b16 %v3548
    %v3802 = vunpack.c.h.b16 %v3548
    %v3803 = vunpack.c.l.b16 %v3549
    %v3804 = vunpack.c.l.b16 %v3550
    %v3805 = vunpack.c.h.b16 %v3550
    %v3806 = vunpack.c.l.b16 %v3551
    %v3807 = vunpack.c.l.b16 %v3552
    %v3808 = vunpack.c.h.b16 %v3552
    %v3809 = vunpack.c.l.b16 %v3553
    %v3810 = vunpack.c.l.b16 %v3554
    %v3811 = vunpack.c.h.b16 %v3554
    %v3812 = vunpack.c.l.b16 %v3555
    %v3813 = vunpack.c.l.b16 %v3556
    %v3814 = vunpack.c.h.b16 %v3556
    %v3815 = vunpack.c.l.b16 %v3557
    %v3816 = vpack.c.b16 %v3675, %v3672
    %v3817 = vpack.c.b16 %v3676, %v3673
    %v3818 = vpack.c.b16 %v3677, %v3674
    %v3819 = vpack.c.b16 %v3681, %v3678
    %v3820 = vpack.c.b16 %v3682, %v3679
    %v3821 = vpack.c.b16 %v3683, %v3680
    %v3822 = vpack.c.b16 %v3687, %v3684
    %v3823 = vpack.c.b16 %v3688, %v3685
    %v3824 = vpack.c.b16 %v3689, %v3686
    %v3825 = vpack.c.b16 %v3693, %v3690
    %v3826 = vpack.c.b16 %v3694, %v3691
    %v3827 = vpack.c.b16 %v3695, %v3692
    %v3828 = vpack.c.b16 %v3699, %v3696
    %v3829 = vpack.c.b16 %v3700, %v3697
    %v3830 = vpack.c.b16 %v3701, %v3698
    %v3831 = vpack.c.b16 %v3705, %v3702
    %v3832 = vpack.c.b16 %v3706, %v3703
    %v3833 = vpack.c.b16 %v3707, %v3704
    %v3834 = vpack.c.b16 %v3711, %v3708
    %v3835 = vpack.c.b16 %v3712, %v3709
    %v3836 = vpack.c.b16 %v3713, %v3710
    %v3837 = vpack.c.b16 %v3717, %v3714
    %v3838 = vpack.c.b16 %v3718, %v3715
    %v3839 = vpack.c.b16 %v3719, %v3716
    %v3840 = vpack.c.b16 %v3723, %v3720
    %v3841 = vpack.c.b16 %v3724, %v3721
    %v3842 = vpack.c.b16 %v3725, %v3722
    %v3843 = vpack.c.b16 %v3729, %v3726
    %v3844 = vpack.c.b16 %v3730, %v3727
    %v3845 = vpack.c.b16 %v3731, %v3728
    %v3846 = vpack.c.b16 %v3735, %v3732
    %v3847 = vpack.c.b16 %v3736, %v3733
    %v3848 = vpack.c.b16 %v3737, %v3734
    %v3849 = vpack.c.b16 %v3741, %v3738
    %v3850 = vpack.c.b16 %v3742, %v3739
    %v3851 = vpack.c.b16 %v3743, %v3740
    %v3852 = vpack.c.b16 %v3747, %v3744
    %v3853 = vpack.c.b16 %v3748, %v3745
    %v3854 = vpack.c.b16 %v3749, %v3746
    %v3855 = vpack.c.b16 %v3753, %v3750
    %v3856 = vpack.c.b16 %v3754, %v3751
    %v3857 = vpack.c.b16 %v3755, %v3752
    %v3858 = vpack.c.b16 %v3759, %v3756
    %v3859 = vpack.c.b16 %v3760, %v3757
    %v3860 = vpack.c.b16 %v3761, %v3758
    %v3861 = vpack.c.b16 %v3765, %v3762
    %v3862 = vpack.c.b16 %v3766, %v3763
    %v3863 = vpack.c.b16 %v3767, %v3764
    %v3864 = vpack.c.b16 %v3771, %v3768
    %v3865 = vpack.c.b16 %v3772, %v3769
    %v3866 = vpack.c.b16 %v3773, %v3770
    %v3867 = vpack.c.b16 %v3777, %v3774
    %v3868 = vpack.c.b16 %v3778, %v3775
    %v3869 = vpack.c.b16 %v3779, %v3776
    %v3870 = vpack.c.b16 %v3783, %v3780
    %v3871 = vpack.c.b16 %v3784, %v3781
    %v3872 = vpack.c.b16 %v3785, %v3782
    %v3873 = vpack.c.b16 %v3789, %v3786
    %v3874 = vpack.c.b16 %v3790, %v3787
    %v3875 = vpack.c.b16 %v3791, %v3788
    %v3876 = vpack.c.b16 %v3795, %v3792
    %v3877 = vpack.c.b16 %v3796, %v3793
    %v3878 = vpack.c.b16 %v3797, %v3794
    %v3879 = vpack.c.b16 %v3801, %v3798
    %v3880 = vpack.c.b16 %v3802, %v3799
    %v3881 = vpack.c.b16 %v3803, %v3800
    %v3882 = vpack.c.b16 %v3807, %v3804
    %v3883 = vpack.c.b16 %v3808, %v3805
    %v3884 = vpack.c.b16 %v3809, %v3806
    %v3885 = vpack.c.b16 %v3813, %v3810
    %v3886 = vpack.c.b16 %v3814, %v3811
    %v3887 = vpack.c.b16 %v3815, %v3812
    %3960 = vmatprep.subr.bf16.mxu0 %v3838
    %3961 = vmatpush1.bf16.msra.mxu0 %v3837
    %3962 = vmatprep.subr.bf16.mxu0 %v3835
    %3963 = vmatpush1.bf16.msra.mxu0 %v3834
    %3964 = vmatprep.subr.bf16.mxu0 %v3832
    %3965 = vmatpush1.bf16.msra.mxu0 %v3831
    %3966 = vmatprep.subr.bf16.mxu0 %v3829
    %3967 = vmatpush1.bf16.msra.mxu0 %v3828
    %3968 = vmatprep.subr.bf16.mxu0 %v3826
    %3969 = vmatpush1.bf16.msra.mxu0 %v3825
    %3970 = vmatprep.subr.bf16.mxu0 %v3823
    %3971 = vmatpush1.bf16.msra.mxu0 %v3822
    %3972 = vmatprep.subr.bf16.mxu0 %v3820
    %3973 = vmatpush1.bf16.msra.mxu0 %v3819
    %3974 = vmatprep.subr.bf16.mxu0 %v3817
    %3975 = vmatpush1.bf16.msra.mxu0 %v3816
    %3976 = vmatprep.subr.bf16.mxu0 %v3862
    %3977 = vmatpush2.bf16.msra.mxu0 %v3861
    %3978 = vmatprep.subr.bf16.mxu0 %v3859
    %3979 = vmatpush2.bf16.msra.mxu0 %v3858
    %3980 = vmatprep.subr.bf16.mxu0 %v3856
    %3981 = vmatpush2.bf16.msra.mxu0 %v3855
    %3982 = vmatprep.subr.bf16.mxu0 %v3853
    %3983 = vmatpush2.bf16.msra.mxu0 %v3852
    %3984 = vmatprep.subr.bf16.mxu0 %v3850
    %3985 = vmatpush2.bf16.msra.mxu0 %v3849
    %3986 = vmatprep.subr.bf16.mxu0 %v3847
    %3987 = vmatpush2.bf16.msra.mxu0 %v3846
    %3988 = vmatprep.subr.bf16.mxu0 %v3844
    %3989 = vmatpush2.bf16.msra.mxu0 %v3843
    %3990 = vmatprep.subr.bf16.mxu0 %v3841
    %3991 = vmatpush2.bf16.msra.mxu0 %v3840
    %3992 = vmatprep.mubr.bf16.mxu0 %v3459
    %3993 = vmatmul.mubr.bf16.gmra.mxu0 %v3458
    %v3994 = vpop.f32.mrf.mxu0
    %v3995 = vadd.f32 %v3564, %v3994
    %v3996 = vpop.f32.mrf.mxu0
    %v3997 = vadd.f32 %v3568, %v3996
    %v3998 = vpop.f32.mrf.mxu0
    %v3999 = vpop.f32.mrf.mxu0
    %4000 = vdwg.mxu0
    %4001 = vmatprep.subr.bf16.mxu0 %v3886
    %4002 = vmatpush1.bf16.msra.mxu0 %v3885
    %4003 = vmatprep.subr.bf16.mxu0 %v3883
    %4004 = vmatpush1.bf16.msra.mxu0 %v3882
    %4005 = vmatprep.subr.bf16.mxu0 %v3880
    %4006 = vmatpush1.bf16.msra.mxu0 %v3879
    %4007 = vmatprep.subr.bf16.mxu0 %v3877
    %4008 = vmatpush1.bf16.msra.mxu0 %v3876
    %4009 = vmatprep.subr.bf16.mxu0 %v3874
    %4010 = vmatpush1.bf16.msra.mxu0 %v3873
    %4011 = vmatprep.subr.bf16.mxu0 %v3871
    %4012 = vmatpush1.bf16.msra.mxu0 %v3870
    %4013 = vmatprep.subr.bf16.mxu0 %v3868
    %4014 = vmatpush1.bf16.msra.mxu0 %v3867
    %4015 = vmatprep.subr.bf16.mxu0 %v3865
    %4016 = vmatpush1.bf16.msra.mxu0 %v3864
    %4017 = vmatprep.subr.bf16.mxu0 0
    %4018 = vmatpush2.bf16.msra.mxu0 0
    %4019 = vmatprep.subr.bf16.mxu0 0
    %4020 = vmatpush2.bf16.msra.mxu0 0
    %4021 = vmatprep.subr.bf16.mxu0 0
    %4022 = vmatpush2.bf16.msra.mxu0 0
    %4023 = vmatprep.subr.bf16.mxu0 0
    %4024 = vmatpush2.bf16.msra.mxu0 0
    %4025 = vmatprep.subr.bf16.mxu0 0
    %4026 = vmatpush2.bf16.msra.mxu0 0
    %4027 = vmatprep.subr.bf16.mxu0 0
    %4028 = vmatpush2.bf16.msra.mxu0 0
    %4029 = vmatprep.subr.bf16.mxu0 0
    %4030 = vmatpush2.bf16.msra.mxu0 0
    %4031 = vmatprep.subr.bf16.mxu0 0
    %4032 = vmatpush2.bf16.msra.mxu0 0
    %4033 = vmatprep.mubr.bf16.mxu0 0
    %4034 = vmatmul.mubr.bf16.gmra.mxu0 %v3460
    %v4035 = vpop.f32.mrf.mxu0
    %v4036 = vadd.f32 %v3995, %v4035
    %v4037 = vpop.f32.mrf.mxu0
    %v4038 = vadd.f32 %v3997, %v4037
    %v4039 = vpop.f32.mrf.mxu0
    %v4040 = vpop.f32.mrf.mxu0
    %4041 = vdwg.mxu0
    %4042 = vmatprep.subr.bf16.mxu0 0
    %4043 = vmatpush1.bf16.msra.mxu0 %v3839
    %4044 = vmatprep.subr.bf16.mxu0 0
    %4045 = vmatpush1.bf16.msra.mxu0 %v3836
    %4046 = vmatprep.subr.bf16.mxu0 0
    %4047 = vmatpush1.bf16.msra.mxu0 %v3833
    %4048 = vmatprep.subr.bf16.mxu0 0
    %4049 = vmatpush1.bf16.msra.mxu0 %v3830
    %4050 = vmatprep.subr.bf16.mxu0 0
    %4051 = vmatpush1.bf16.msra.mxu0 %v3827
    %4052 = vmatprep.subr.bf16.mxu0 0
    %4053 = vmatpush1.bf16.msra.mxu0 %v3824
    %4054 = vmatprep.subr.bf16.mxu0 0
    %4055 = vmatpush1.bf16.msra.mxu0 %v3821
    %4056 = vmatprep.subr.bf16.mxu0 0
    %4057 = vmatpush1.bf16.msra.mxu0 %v3818
    %4058 = vmatprep.subr.bf16.mxu0 0
    %4059 = vmatpush2.bf16.msra.mxu0 %v3863
    %4060 = vmatprep.subr.bf16.mxu0 0
    %4061 = vmatpush2.bf16.msra.mxu0 %v3860
    %4062 = vmatprep.subr.bf16.mxu0 0
    %4063 = vmatpush2.bf16.msra.mxu0 %v3857
    %4064 = vmatprep.subr.bf16.mxu0 0
    %4065 = vmatpush2.bf16.msra.mxu0 %v3854
    %4066 = vmatprep.subr.bf16.mxu0 0
    %4067 = vmatpush2.bf16.msra.mxu0 %v3851
    %4068 = vmatprep.subr.bf16.mxu0 0
    %4069 = vmatpush2.bf16.msra.mxu0 %v3848
    %4070 = vmatprep.subr.bf16.mxu0 0
    %4071 = vmatpush2.bf16.msra.mxu0 %v3845
    %4072 = vmatprep.subr.bf16.mxu0 0
    %4073 = vmatpush2.bf16.msra.mxu0 %v3842
    %4074 = vmatprep.mubr.bf16.mxu0 %v3459
    %4075 = vmatmul.mubr.bf16.gmra.mxu0 %v3458
    %v4076 = vpop.f32.mrf.mxu0
    %v4077 = vadd.f32 %v3572, %v4076
    %v4078 = vpop.f32.mrf.mxu0
    %v4079 = vpop.f32.mrf.mxu0
    %v4080 = vpop.f32.mrf.mxu0
    %4081 = vdwg.mxu0
    %4082 = vmatprep.subr.bf16.mxu0 0
    %4083 = vmatpush1.bf16.msra.mxu0 %v3887
    %4084 = vmatprep.subr.bf16.mxu0 0
    %4085 = vmatpush1.bf16.msra.mxu0 %v3884
    %4086 = vmatprep.subr.bf16.mxu0 0
    %4087 = vmatpush1.bf16.msra.mxu0 %v3881
    %4088 = vmatprep.subr.bf16.mxu0 0
    %4089 = vmatpush1.bf16.msra.mxu0 %v3878
    %4090 = vmatprep.subr.bf16.mxu0 0
    %4091 = vmatpush1.bf16.msra.mxu0 %v3875
    %4092 = vmatprep.subr.bf16.mxu0 0
    %4093 = vmatpush1.bf16.msra.mxu0 %v3872
    %4094 = vmatprep.subr.bf16.mxu0 0
    %4095 = vmatpush1.bf16.msra.mxu0 %v3869
    %4096 = vmatprep.subr.bf16.mxu0 0
    %4097 = vmatpush1.bf16.msra.mxu0 %v3866
    %4098 = vmatprep.subr.bf16.mxu0 0
    %4099 = vmatpush2.bf16.msra.mxu0 0
    %4100 = vmatprep.subr.bf16.mxu0 0
    %4101 = vmatpush2.bf16.msra.mxu0 0
    %4102 = vmatprep.subr.bf16.mxu0 0
    %4103 = vmatpush2.bf16.msra.mxu0 0
    %4104 = vmatprep.subr.bf16.mxu0 0
    %4105 = vmatpush2.bf16.msra.mxu0 0
    %4106 = vmatprep.subr.bf16.mxu0 0
    %4107 = vmatpush2.bf16.msra.mxu0 0
    %4108 = vmatprep.subr.bf16.mxu0 0
    %4109 = vmatpush2.bf16.msra.mxu0 0
    %4110 = vmatprep.subr.bf16.mxu0 0
    %4111 = vmatpush2.bf16.msra.mxu0 0
    %4112 = vmatprep.subr.bf16.mxu0 0
    %4113 = vmatpush2.bf16.msra.mxu0 0
    %4114 = vmatprep.mubr.bf16.mxu0 0
    %4115 = vmatmul.mubr.bf16.gmra.mxu0 %v3460
    %v4116 = vpop.f32.mrf.mxu0
    %v4117 = vadd.f32 %v4077, %v4116
    %v4118 = vpop.f32.mrf.mxu0
    %v4119 = vpop.f32.mrf.mxu0
    %v4120 = vpop.f32.mrf.mxu0
    %4121 = vdwg.mxu0
    %v4122 = vsub.f32 0.0, %v4036
    %v4123 = vsub.f32 0.0, %v4038
    %v4124 = vsub.f32 0.0, %v4117
    %v4125 = vmul.f32 %v4122, 1.442695
    %v4126 = vpow.pop %v4125
    %v4127 = vmul.f32 %v4123, 1.442695
    %v4128 = vpow.pop %v4127
    %v4129 = vmul.f32 %v4124, 1.442695
    %v4130 = vpow.pop %v4129
    %v4131 = vadd.f32 %v4126, 1.0
    %v4132 = vadd.f32 %v4128, 1.0
    %v4133 = vadd.f32 %v4130, 1.0
    %v4134 = vrcp.pop %v4131
    %v4135 = vrcp.pop %v4132
    %v4136 = vrcp.pop %v4133
    %4137 = vst [vmem:[#allocation8] sm:$0xff] %v4134
    %4138 = vst [vmem:[#allocation8 + $0x8] sm:$0xff] %v4135
    %4139 = vst [vmem:[#allocation8 + $0x10] sm:$0xff] %v4136
    // Predicated region
    $region26: #{tpu_custom_call.1} parent=1 // pred_check
      _
    $region27: #{tpu_custom_call.1} parent=1 // pred_check_branch
      %4141 = sbr.rel (0) target = $region29
    $region28: #{tpu_custom_call.1} parent=1 // pred_region
      %s4143 = ssub.s32 384, 384
      %4144 = vsyncadd [#allocation4], %s4143
      %s4146 = sshll.u32 [#allocation8], 4
      %s4147 = int_to_ptr.vmem [resolvable:$true] %s4146
      %4149 = dma.vmem_to_hbm [thread:$0]  %s4147, 384, %s3, [#allocation4]
    $region29: #{tpu_custom_call.1} parent=1 // pred_fallthru
      _
    // Predicated region
    $region30: #{tpu_custom_call.1} parent=1 // pred_check
      _
    $region31: #{tpu_custom_call.1} parent=1 // pred_check_branch
      %4151 = sbr.rel (0) target = $region33
    $region32: #{tpu_custom_call.1} parent=1 // pred_region
      %4152 = dma.done [#allocation4], 384
    $region33: #{tpu_custom_call.1} parent=1 // pred_fallthru
      _
    %4153 = vsyncpa [#allocation3], 1
    %4154 = vsyncpa [#allocation6], 1
    %4155 = vsyncpa [#allocation4], 1

</llo_original>
